<compile_context>
chip_gen: v7x
topology: tpu7x:2x2x1
jax: 0.10.0
libtpu: 0.0.40
codegen_flags: <defaults>
</compile_context>

<pallas_src>
import functools

import jax
import jax.numpy as jnp
from jax import lax
from jax.experimental import pallas as pl
from jax.experimental.pallas import tpu as pltpu


def _round_up(x, m):
    return ((x + m - 1) // m) * m


def _pad2d(x, rows, cols):
    r, c = x.shape
    return jnp.pad(x, ((0, rows - r), (0, cols - c)))


def _pick_tile(n, desired):
    """Largest multiple-of-128 tile <= desired that covers n once n is padded
    to a multiple of 128 (small problems clamp to a single tile)."""
    assert desired % 128 == 0, desired
    return min(desired, _round_up(n, 128))


# ---------------------------------------------------------------------------
# Pallas kernel: one bipartite half-propagation with the layer epilogue fused.
#
#   y        = adj   @ x     (transpose_adj=False, adj tile is [tr, tc])
#   y        = adj^T @ x     (transpose_adj=True,  adj tile is [tc, tr])
#   acc_out  = acc_in + y    (f32 running layer-mean accumulator, aliased)
#   y_bf16   = bf16(y)       (next layer's activation, cast in-kernel)
#
# grid = (M // tr, K // tc); K is the last (sequential) reduction axis.
# ---------------------------------------------------------------------------
def _propagate_kernel(a_ref, x_ref, acc_in_ref, acc_out_ref, y_bf16_ref, y_acc,
                      *, transpose_adj):
    k = pl.program_id(1)

    @pl.when(k == 0)
    def _init():
        y_acc[...] = jnp.zeros_like(y_acc)

    if transpose_adj:
        # a_ref is a [tc, tr] tile of the *un-transposed* adjacency; contract
        # its leading (user) dim against x directly on the MXU — no R^T copy
        # in HBM and no in-kernel transpose materialization.
        contrib = lax.dot_general(
            a_ref[...], x_ref[...],
            dimension_numbers=(((0,), (0,)), ((), ())),
            preferred_element_type=jnp.float32)
    else:
        contrib = jnp.dot(a_ref[...], x_ref[...],
                          preferred_element_type=jnp.float32)
    y_acc[...] += contrib

    @pl.when(k == pl.num_programs(1) - 1)
    def _finalize():
        y = y_acc[...]
        acc_out_ref[...] = acc_in_ref[...] + y           # fused mean-accumulate
        y_bf16_ref[...] = y.astype(y_bf16_ref.dtype)     # fused next-layer cast


def propagate_half(adj_bf16, x_bf16, acc_f32, *, transpose_adj, tr, tc):
    """Returns (acc_f32 + y, bf16(y)) where y = adj @ x or adj^T @ x.

    tr: tile along the output-row axis; tc: tile along the contraction axis.
    All shapes must be tile-aligned (the caller pads with exact zeros).
    """
    if transpose_adj:
        K, M = adj_bf16.shape
        adj_spec = pl.BlockSpec((tc, tr), lambda i, k: (k, i))
    else:
        M, K = adj_bf16.shape
        adj_spec = pl.BlockSpec((tr, tc), lambda i, k: (i, k))
    K2, D = x_bf16.shape
    assert K2 == K and acc_f32.shape == (M, D), (adj_bf16.shape, x_bf16.shape)
    assert M % tr == 0 and K % tc == 0 and D % 128 == 0, (M, K, D, tr, tc)
    assert tr % 128 == 0 and tc % 128 == 0, (tr, tc)

    # Scoped-VMEM budget (double-buffered adjacency / activation / acc-in and
    # both outputs, plus the f32 accumulator scratch) with headroom; capped at
    # 64 MiB so the same config stays legal on v7x.
    est = (2 * tr * tc * 2        # adjacency tiles (bf16)
           + 2 * tc * D * 2       # activation tiles (bf16)
           + 2 * tr * D * 4       # acc_in tiles (f32)
           + 2 * tr * D * 4       # acc_out tiles (f32)
           + 2 * tr * D * 2       # y_bf16 tiles
           + tr * D * 4)          # f32 accumulator scratch
    vmem_limit = min(max(int(est * 1.5) + (2 << 20), 32 << 20), 64 << 20)

    flops = 2 * M * K * D
    bytes_accessed = M * K * 2 + (M // tr) * K * D * 2 + M * D * (4 + 4 + 2)

    acc_out, y_bf16 = pl.pallas_call(
        functools.partial(_propagate_kernel, transpose_adj=transpose_adj),
        out_shape=(jax.ShapeDtypeStruct((M, D), jnp.float32),
                   jax.ShapeDtypeStruct((M, D), jnp.bfloat16)),
        grid_spec=pltpu.PrefetchScalarGridSpec(
            num_scalar_prefetch=0,
            grid=(M // tr, K // tc),
            in_specs=[
                adj_spec,                                    # adjacency stream
                pl.BlockSpec((tc, D), lambda i, k: (k, 0)),  # activation block
                pl.BlockSpec((tr, D), lambda i, k: (i, 0)),  # running mean acc
            ],
            out_specs=[
                pl.BlockSpec((tr, D), lambda i, k: (i, 0)),  # acc (aliased)
                pl.BlockSpec((tr, D), lambda i, k: (i, 0)),  # bf16 activation
            ],
            scratch_shapes=[pltpu.VMEM((tr, D), jnp.float32)]),
        compiler_params=pltpu.CompilerParams(
            # Row axis is independent -> shard across TensorCores; K revisits
            # the same output block -> arbitrary (must stay last/sequential).
            dimension_semantics=("parallel", "arbitrary"),
            vmem_limit_bytes=vmem_limit),
        cost_estimate=pl.CostEstimate(flops=flops, transcendentals=0,
                                      bytes_accessed=bytes_accessed),
        # Accumulate the layer-mean in place: acc input (index 2) -> output 0.
        input_output_aliases={2: 0},
    )(adj_bf16, x_bf16, acc_f32)
    return acc_out, y_bf16


# ---------------------------------------------------------------------------
# Forward pass (mirrors LightGCN.forward; adj given as its normalized
# user-item block R, since the user-user / item-item quadrants are zero).
# ---------------------------------------------------------------------------
def lightgcn_forward(R_norm, user_table, item_table, user, pos_item, neg_item,
                     *, n_layers, tile_users=1024, tile_items=1024):
    n_users, emb = user_table.shape
    n_items = item_table.shape[0]

    t_u = _pick_tile(n_users, tile_users)
    t_i = _pick_tile(n_items, tile_items)
    U = _round_up(n_users, t_u)          # per-half padding, no lcm inflation
    I = _round_up(n_items, t_i)
    D = _round_up(emb, 128)              # lane-dense embedding dim

    # Zero padding is exact: padded rows/cols of R and padded embedding
    # rows/columns contribute nothing to the valid region.
    R_bf = _pad2d(R_norm, U, I).astype(jnp.bfloat16)   # single bf16 adjacency
    xu = _pad2d(user_table, U, D)                      # f32
    xi = _pad2d(item_table, I, D)

    acc_u, acc_i = xu, xi                # layer-0 term of the mean (f32)
    cur_u = xu.astype(jnp.bfloat16)
    cur_i = xi.astype(jnp.bfloat16)
    for _ in range(n_layers):
        # user rows:  y_u = R @ x_i ; item rows:  y_i = R^T @ x_u
        acc_u, nxt_u = propagate_half(R_bf, cur_i, acc_u,
                                      transpose_adj=False, tr=t_u, tc=t_i)
        acc_i, nxt_i = propagate_half(R_bf, cur_u, acc_i,
                                      transpose_adj=True, tr=t_i, tc=t_u)
        cur_u, cur_i = nxt_u, nxt_i

    scale = 1.0 / float(n_layers + 1)
    gcn_user = (acc_u * scale)[:n_users, :emb]
    gcn_item = (acc_i * scale)[:n_items, :emb]
    # Final index gathers are cheap glue — kept in plain JAX.
    return gcn_user[user], gcn_item[pos_item], gcn_item[neg_item]


# ---------------------------------------------------------------------------
# References
# ---------------------------------------------------------------------------
def ref_forward_f32(R_norm, user_table, item_table, user, pos_item, neg_item,
                    n_layers):
    """Pure-f32 dense-adjacency reference (mirrors the torch.sparse.mm path)."""
    n_users = user_table.shape[0]
    x = jnp.concatenate([user_table, item_table], axis=0)
    n = x.shape[0]
    adj = jnp.zeros((n, n), jnp.float32)
    adj = adj.at[:n_users, n_users:].set(R_norm)
    adj = adj.at[n_users:, :n_users].set(R_norm.T)
    embs = [x]
    for _ in range(n_layers):
        x = adj @ x
        embs.append(x)
    light_out = jnp.mean(jnp.stack(embs, axis=1), axis=1)
    gu, gi = light_out[:n_users], light_out[n_users:]
    return gu[user], gi[pos_item], gi[neg_item]


def ref_forward_bf16(R_norm, user_table, item_table, user, pos_item, neg_item,
                     n_layers):
    """Reference with the kernel's precision policy (bf16 in, f32 accumulate)."""
    R_bf = R_norm.astype(jnp.bfloat16)
    acc_u, acc_i = user_table, item_table
    cu = user_table.astype(jnp.bfloat16)
    ci = item_table.astype(jnp.bfloat16)
    for _ in range(n_layers):
        yu = jnp.dot(R_bf, ci, preferred_element_type=jnp.float32)
        yi = jnp.dot(R_bf.T, cu, preferred_element_type=jnp.float32)
        acc_u = acc_u + yu
        acc_i = acc_i + yi
        cu, ci = yu.astype(jnp.bfloat16), yi.astype(jnp.bfloat16)
    scale = 1.0 / float(n_layers + 1)
    gu, gi = acc_u * scale, acc_i * scale
    return gu[user], gi[pos_item], gi[neg_item]


def build_normalized_bipartite(key, n_users, n_items):
    """D^{-1/2} A D^{-1/2} restricted to the user-item block R."""
    R = jax.random.bernoulli(key, p=0.1, shape=(n_users, n_items)).astype(jnp.float32)
    deg_u = jnp.sum(R, axis=1)
    deg_i = jnp.sum(R, axis=0)
    du = jnp.where(deg_u > 0, 1.0 / jnp.sqrt(deg_u), 0.0)
    di = jnp.where(deg_i > 0, 1.0 / jnp.sqrt(deg_i), 0.0)
    return R * du[:, None] * di[None, :]


if __name__ == "__main__":
    # Small, deterministic problem.
    n_users, n_items = 192, 256
    emb_size = 32                 # args.emb_size (padded to 128 lanes inside)
    n_layers = 3                  # args.layers
    batch = 8

    key = jax.random.PRNGKey(0)
    k_adj, k_u, k_i, k_b1, k_b2, k_b3 = jax.random.split(key, 6)

    R_norm = build_normalized_bipartite(k_adj, n_users, n_items)
    # nn.init.normal_(std=0.1) on both embedding tables.
    user_table = 0.1 * jax.random.normal(k_u, (n_users, emb_size), jnp.float32)
    item_table = 0.1 * jax.random.normal(k_i, (n_items, emb_size), jnp.float32)

    user = jax.random.randint(k_b1, (batch,), 0, n_users)
    pos_item = jax.random.randint(k_b2, (batch,), 0, n_items)
    neg_item = jax.random.randint(k_b3, (batch,), 0, n_items)

    # 128x128 tiles -> a (2, 2) grid per half-propagation: exercises the
    # K-reduction, the final-k fused epilogue and the aliased accumulator.
    fwd_small = jax.jit(functools.partial(
        lightgcn_forward, n_layers=n_layers, tile_users=128, tile_items=128))
    # Default (large) tiles, clamped to the padded problem -> single-tile grid.
    fwd_big = jax.jit(functools.partial(lightgcn_forward, n_layers=n_layers))

    u_emb, p_emb, n_emb = fwd_small(R_norm, user_table, item_table,
                                    user, pos_item, neg_item)
    jax.block_until_ready((u_emb, p_emb, n_emb))
    assert u_emb.shape == (batch, emb_size)
    assert p_emb.shape == (batch, emb_size)
    assert n_emb.shape == (batch, emb_size)

    u2, p2, n2 = fwd_big(R_norm, user_table, item_table,
                         user, pos_item, neg_item)
    jax.block_until_ready((u2, p2, n2))

    # The two tilings must agree (accumulation-order noise only).
    for a, b, name in ((u_emb, u2, "user"), (p_emb, p2, "pos"), (n_emb, n2, "neg")):
        assert jnp.allclose(a, b, atol=1e-3, rtol=1e-3), (name, float(jnp.max(jnp.abs(a - b))))

    # Check against a reference with the same bf16-in / f32-accumulate policy.
    tu, tp, tn = ref_forward_bf16(R_norm, user_table, item_table,
                                  user, pos_item, neg_item, n_layers)
    for got, want, name in ((u_emb, tu, "user"), (p_emb, tp, "pos"), (n_emb, tn, "neg")):
        diff = float(jnp.max(jnp.abs(got - want)))
        assert jnp.allclose(got, want, atol=1e-3, rtol=1e-3), (name, diff)

    # Loose check against the pure-f32 dense-adjacency reference
    # (difference is only the bf16 input-cast precision tradeoff).
    ru, rp, rn = ref_forward_f32(R_norm, user_table, item_table,
                                 user, pos_item, neg_item, n_layers)
    for got, want, name in ((u_emb, ru, "user"), (p_emb, rp, "pos"), (n_emb, rn, "neg")):
        diff = float(jnp.max(jnp.abs(got - want)))
        assert jnp.allclose(got, want, atol=1e-2, rtol=1e-2), (name, diff)

    print("KERNEL_OK")
</pallas_src>

<mosaic_0001>
module attributes {stable_mosaic.version = 11 : i64} {
  func.func @_propagate_kernel(%arg0: i32, %arg1: i32, %arg2: memref<128x128xbf16, #tpu.memory_space<vmem>>, %arg3: memref<128x128xbf16, #tpu.memory_space<vmem>>, %arg4: memref<128x128xf32, #tpu.memory_space<vmem>>, %arg5: memref<128x128xf32, #tpu.memory_space<vmem>>, %arg6: memref<128x128xbf16, #tpu.memory_space<vmem>>, %arg7: memref<128x128xf32, #tpu.memory_space<vmem>>) attributes {dimension_semantics = [#tpu.dimension_semantics<parallel>, #tpu.dimension_semantics<arbitrary>], iteration_bounds = array<i64: 2, 2>, scalar_prefetch = 0 : i64, scratch_operands = 1 : i64, tpu.core_type = #tpu.core_type<tc>, window_params = [{transform_indices = @transform_0, window_bounds = array<i64: 128, 128>}, {transform_indices = @transform_1, window_bounds = array<i64: 128, 128>}, {transform_indices = @transform_2, window_bounds = array<i64: 128, 128>}, {transform_indices = @transform_3, window_bounds = array<i64: 128, 128>}, {transform_indices = @transform_4, window_bounds = array<i64: 128, 128>}]} {
    %c0_i32 = arith.constant 0 : i32
    %0 = arith.cmpi eq, %arg1, %c0_i32 : i32
    %1 = arith.extui %0 : i1 to i32
    %c0_i32_0 = arith.constant 0 : i32
    %2 = arith.cmpi ne, %1, %c0_i32_0 : i32
    scf.if %2 {
      %cst_9 = arith.constant 0.000000e+00 : f32
      %12 = vector.broadcast %cst_9 : f32 to vector<128x128xf32>
      %c0_10 = arith.constant 0 : index
      %c0_11 = arith.constant 0 : index
      %13 = vector.load %arg7[%c0_10, %c0_11] : memref<128x128xf32, #tpu.memory_space<vmem>>, vector<128x128xf32>
      tpu.vector_store %arg7[%c0_10, %c0_11], %12 {strides = array<i32>} : memref<128x128xf32, #tpu.memory_space<vmem>>, vector<128x128xf32>,
    } else {
    }
    %c0 = arith.constant 0 : index
    %c0_1 = arith.constant 0 : index
    %3 = vector.load %arg2[%c0, %c0_1] : memref<128x128xbf16, #tpu.memory_space<vmem>>, vector<128x128xbf16>
    %c0_2 = arith.constant 0 : index
    %c0_3 = arith.constant 0 : index
    %4 = vector.load %arg3[%c0_2, %c0_3] : memref<128x128xbf16, #tpu.memory_space<vmem>>, vector<128x128xbf16>
    %cst = arith.constant dense<0.000000e+00> : vector<128x128xf32>
    %5 = tpu.matmul %3, %4, %cst {dimension_numbers = #tpu.dot_dimension_numbers<[0], [0], [1], [1], [0, 1, 1, 1], [], []>} : vector<128x128xbf16>, vector<128x128xbf16>, vector<128x128xf32> -> vector<128x128xf32>
    %c0_4 = arith.constant 0 : index
    %c0_5 = arith.constant 0 : index
    %6 = vector.load %arg7[%c0_4, %c0_5] : memref<128x128xf32, #tpu.memory_space<vmem>>, vector<128x128xf32>
    %7 = arith.addf %6, %5 : vector<128x128xf32>
    %c0_6 = arith.constant 0 : index
    %c0_7 = arith.constant 0 : index
    %8 = vector.load %arg7[%c0_6, %c0_7] : memref<128x128xf32, #tpu.memory_space<vmem>>, vector<128x128xf32>
    tpu.vector_store %arg7[%c0_6, %c0_7], %7 {strides = array<i32>} : memref<128x128xf32, #tpu.memory_space<vmem>>, vector<128x128xf32>,
    %c1_i32 = arith.constant 1 : i32
    %9 = arith.cmpi eq, %arg1, %c1_i32 : i32
    %10 = arith.extui %9 : i1 to i32
    %c0_i32_8 = arith.constant 0 : i32
    %11 = arith.cmpi ne, %10, %c0_i32_8 : i32
    scf.if %11 {
      %c0_9 = arith.constant 0 : index
      %c0_10 = arith.constant 0 : index
      %12 = vector.load %arg7[%c0_9, %c0_10] : memref<128x128xf32, #tpu.memory_space<vmem>>, vector<128x128xf32>
      %c0_11 = arith.constant 0 : index
      %c0_12 = arith.constant 0 : index
      %13 = vector.load %arg4[%c0_11, %c0_12] : memref<128x128xf32, #tpu.memory_space<vmem>>, vector<128x128xf32>
      %14 = arith.addf %13, %12 : vector<128x128xf32>
      %c0_13 = arith.constant 0 : index
      %c0_14 = arith.constant 0 : index
      %15 = vector.load %arg5[%c0_13, %c0_14] : memref<128x128xf32, #tpu.memory_space<vmem>>, vector<128x128xf32>
      tpu.vector_store %arg5[%c0_13, %c0_14], %14 {strides = array<i32>} : memref<128x128xf32, #tpu.memory_space<vmem>>, vector<128x128xf32>,
      %16 = arith.truncf %12 : vector<128x128xf32> to vector<128x128xbf16>
      %c0_15 = arith.constant 0 : index
      %c0_16 = arith.constant 0 : index
      %17 = vector.load %arg6[%c0_15, %c0_16] : memref<128x128xbf16, #tpu.memory_space<vmem>>, vector<128x128xbf16>
      tpu.vector_store %arg6[%c0_15, %c0_16], %16 {strides = array<i32>} : memref<128x128xbf16, #tpu.memory_space<vmem>>, vector<128x128xbf16>,
    } else {
    }
    return
  }
  func.func @transform_0(%arg0: i32, %arg1: i32) -> (i32, i32) {
    %c0_i32 = arith.constant 0 : i32
    return %arg1, %arg0 : i32, i32
  }
  func.func @transform_1(%arg0: i32, %arg1: i32) -> (i32, i32) {
    %c0_i32 = arith.constant 0 : i32
    %c0_i32_0 = arith.constant 0 : i32
    return %arg1, %c0_i32 : i32, i32
  }
  func.func @transform_2(%arg0: i32, %arg1: i32) -> (i32, i32) {
    %c0_i32 = arith.constant 0 : i32
    %c0_i32_0 = arith.constant 0 : i32
    return %arg0, %c0_i32 : i32, i32
  }
  func.func @transform_3(%arg0: i32, %arg1: i32) -> (i32, i32) {
    %c0_i32 = arith.constant 0 : i32
    %c0_i32_0 = arith.constant 0 : i32
    return %arg0, %c0_i32 : i32, i32
  }
  func.func @transform_4(%arg0: i32, %arg1: i32) -> (i32, i32) {
    %c0_i32 = arith.constant 0 : i32
    %c0_i32_0 = arith.constant 0 : i32
    return %arg0, %c0_i32 : i32, i32
  }
}

module attributes {stable_mosaic.version = 11 : i64} {
  func.func @_propagate_kernel(%arg0: i32, %arg1: i32, %arg2: memref<128x128xbf16, #tpu.memory_space<vmem>>, %arg3: memref<128x128xbf16, #tpu.memory_space<vmem>>, %arg4: memref<128x128xf32, #tpu.memory_space<vmem>>, %arg5: memref<128x128xf32, #tpu.memory_space<vmem>>, %arg6: memref<128x128xbf16, #tpu.memory_space<vmem>>, %arg7: memref<128x128xf32, #tpu.memory_space<vmem>>) attributes {dimension_semantics = [#tpu.dimension_semantics<parallel>, #tpu.dimension_semantics<arbitrary>], iteration_bounds = array<i64: 2, 2>, scalar_prefetch = 0 : i64, scratch_operands = 1 : i64, tpu.core_type = #tpu.core_type<tc>, window_params = [{transform_indices = @transform_0, window_bounds = array<i64: 128, 128>}, {transform_indices = @transform_1, window_bounds = array<i64: 128, 128>}, {transform_indices = @transform_2, window_bounds = array<i64: 128, 128>}, {transform_indices = @transform_3, window_bounds = array<i64: 128, 128>}, {transform_indices = @transform_4, window_bounds = array<i64: 128, 128>}]} {
    %c0_i32 = arith.constant 0 : i32
    %0 = arith.cmpi eq, %arg1, %c0_i32 : i32
    %1 = arith.extui %0 : i1 to i32
    %c0_i32_0 = arith.constant 0 : i32
    %2 = arith.cmpi ne, %1, %c0_i32_0 : i32
    scf.if %2 {
      %cst_9 = arith.constant 0.000000e+00 : f32
      %12 = vector.broadcast %cst_9 : f32 to vector<128x128xf32>
      %c0_10 = arith.constant 0 : index
      %c0_11 = arith.constant 0 : index
      %13 = vector.load %arg7[%c0_10, %c0_11] : memref<128x128xf32, #tpu.memory_space<vmem>>, vector<128x128xf32>
      tpu.vector_store %arg7[%c0_10, %c0_11], %12 {strides = array<i32>} : memref<128x128xf32, #tpu.memory_space<vmem>>, vector<128x128xf32>,
    } else {
    }
    %c0 = arith.constant 0 : index
    %c0_1 = arith.constant 0 : index
    %3 = vector.load %arg2[%c0, %c0_1] : memref<128x128xbf16, #tpu.memory_space<vmem>>, vector<128x128xbf16>
    %c0_2 = arith.constant 0 : index
    %c0_3 = arith.constant 0 : index
    %4 = vector.load %arg3[%c0_2, %c0_3] : memref<128x128xbf16, #tpu.memory_space<vmem>>, vector<128x128xbf16>
    %cst = arith.constant dense<0.000000e+00> : vector<128x128xf32>
    %5 = tpu.matmul %3, %4, %cst {dimension_numbers = #tpu.dot_dimension_numbers<[1], [0], [0], [1], [0, 0, 1, 1], [], []>} : vector<128x128xbf16>, vector<128x128xbf16>, vector<128x128xf32> -> vector<128x128xf32>
    %c0_4 = arith.constant 0 : index
    %c0_5 = arith.constant 0 : index
    %6 = vector.load %arg7[%c0_4, %c0_5] : memref<128x128xf32, #tpu.memory_space<vmem>>, vector<128x128xf32>
    %7 = arith.addf %6, %5 : vector<128x128xf32>
    %c0_6 = arith.constant 0 : index
    %c0_7 = arith.constant 0 : index
    %8 = vector.load %arg7[%c0_6, %c0_7] : memref<128x128xf32, #tpu.memory_space<vmem>>, vector<128x128xf32>
    tpu.vector_store %arg7[%c0_6, %c0_7], %7 {strides = array<i32>} : memref<128x128xf32, #tpu.memory_space<vmem>>, vector<128x128xf32>,
    %c1_i32 = arith.constant 1 : i32
    %9 = arith.cmpi eq, %arg1, %c1_i32 : i32
    %10 = arith.extui %9 : i1 to i32
    %c0_i32_8 = arith.constant 0 : i32
    %11 = arith.cmpi ne, %10, %c0_i32_8 : i32
    scf.if %11 {
      %c0_9 = arith.constant 0 : index
      %c0_10 = arith.constant 0 : index
      %12 = vector.load %arg7[%c0_9, %c0_10] : memref<128x128xf32, #tpu.memory_space<vmem>>, vector<128x128xf32>
      %c0_11 = arith.constant 0 : index
      %c0_12 = arith.constant 0 : index
      %13 = vector.load %arg4[%c0_11, %c0_12] : memref<128x128xf32, #tpu.memory_space<vmem>>, vector<128x128xf32>
      %14 = arith.addf %13, %12 : vector<128x128xf32>
      %c0_13 = arith.constant 0 : index
      %c0_14 = arith.constant 0 : index
      %15 = vector.load %arg5[%c0_13, %c0_14] : memref<128x128xf32, #tpu.memory_space<vmem>>, vector<128x128xf32>
      tpu.vector_store %arg5[%c0_13, %c0_14], %14 {strides = array<i32>} : memref<128x128xf32, #tpu.memory_space<vmem>>, vector<128x128xf32>,
      %16 = arith.truncf %12 : vector<128x128xf32> to vector<128x128xbf16>
      %c0_15 = arith.constant 0 : index
      %c0_16 = arith.constant 0 : index
      %17 = vector.load %arg6[%c0_15, %c0_16] : memref<128x128xbf16, #tpu.memory_space<vmem>>, vector<128x128xbf16>
      tpu.vector_store %arg6[%c0_15, %c0_16], %16 {strides = array<i32>} : memref<128x128xbf16, #tpu.memory_space<vmem>>, vector<128x128xbf16>,
    } else {
    }
    return
  }
  func.func @transform_0(%arg0: i32, %arg1: i32) -> (i32, i32) {
    %c0_i32 = arith.constant 0 : i32
    return %arg0, %arg1 : i32, i32
  }
  func.func @transform_1(%arg0: i32, %arg1: i32) -> (i32, i32) {
    %c0_i32 = arith.constant 0 : i32
    %c0_i32_0 = arith.constant 0 : i32
    return %arg1, %c0_i32 : i32, i32
  }
  func.func @transform_2(%arg0: i32, %arg1: i32) -> (i32, i32) {
    %c0_i32 = arith.constant 0 : i32
    %c0_i32_0 = arith.constant 0 : i32
    return %arg0, %c0_i32 : i32, i32
  }
  func.func @transform_3(%arg0: i32, %arg1: i32) -> (i32, i32) {
    %c0_i32 = arith.constant 0 : i32
    %c0_i32_0 = arith.constant 0 : i32
    return %arg0, %c0_i32 : i32, i32
  }
  func.func @transform_4(%arg0: i32, %arg1: i32) -> (i32, i32) {
    %c0_i32 = arith.constant 0 : i32
    %c0_i32_0 = arith.constant 0 : i32
    return %arg0, %c0_i32 : i32, i32
  }
}

module attributes {stable_mosaic.version = 11 : i64} {
  func.func @_propagate_kernel(%arg0: i32, %arg1: i32, %arg2: memref<128x128xbf16, #tpu.memory_space<vmem>>, %arg3: memref<128x128xbf16, #tpu.memory_space<vmem>>, %arg4: memref<128x128xf32, #tpu.memory_space<vmem>>, %arg5: memref<128x128xf32, #tpu.memory_space<vmem>>, %arg6: memref<128x128xbf16, #tpu.memory_space<vmem>>, %arg7: memref<128x128xf32, #tpu.memory_space<vmem>>) attributes {dimension_semantics = [#tpu.dimension_semantics<parallel>, #tpu.dimension_semantics<arbitrary>], iteration_bounds = array<i64: 2, 2>, scalar_prefetch = 0 : i64, scratch_operands = 1 : i64, tpu.core_type = #tpu.core_type<tc>, window_params = [{transform_indices = @transform_0, window_bounds = array<i64: 128, 128>}, {transform_indices = @transform_1, window_bounds = array<i64: 128, 128>}, {transform_indices = @transform_2, window_bounds = array<i64: 128, 128>}, {transform_indices = @transform_3, window_bounds = array<i64: 128, 128>}, {transform_indices = @transform_4, window_bounds = array<i64: 128, 128>}]} {
    %c0_i32 = arith.constant 0 : i32
    %0 = arith.cmpi eq, %arg1, %c0_i32 : i32
    %1 = arith.extui %0 : i1 to i32
    %c0_i32_0 = arith.constant 0 : i32
    %2 = arith.cmpi ne, %1, %c0_i32_0 : i32
    scf.if %2 {
      %cst_9 = arith.constant 0.000000e+00 : f32
      %12 = vector.broadcast %cst_9 : f32 to vector<128x128xf32>
      %c0_10 = arith.constant 0 : index
      %c0_11 = arith.constant 0 : index
      %13 = vector.load %arg7[%c0_10, %c0_11] : memref<128x128xf32, #tpu.memory_space<vmem>>, vector<128x128xf32>
      tpu.vector_store %arg7[%c0_10, %c0_11], %12 {strides = array<i32>} : memref<128x128xf32, #tpu.memory_space<vmem>>, vector<128x128xf32>,
    } else {
    }
    %c0 = arith.constant 0 : index
    %c0_1 = arith.constant 0 : index
    %3 = vector.load %arg2[%c0, %c0_1] : memref<128x128xbf16, #tpu.memory_space<vmem>>, vector<128x128xbf16>
    %c0_2 = arith.constant 0 : index
    %c0_3 = arith.constant 0 : index
    %4 = vector.load %arg3[%c0_2, %c0_3] : memref<128x128xbf16, #tpu.memory_space<vmem>>, vector<128x128xbf16>
    %cst = arith.constant dense<0.000000e+00> : vector<128x128xf32>
    %5 = tpu.matmul %3, %4, %cst {dimension_numbers = #tpu.dot_dimension_numbers<[0], [0], [1], [1], [0, 1, 1, 1], [], []>} : vector<128x128xbf16>, vector<128x128xbf16>, vector<128x128xf32> -> vector<128x128xf32>
    %c0_4 = arith.constant 0 : index
    %c0_5 = arith.constant 0 : index
    %6 = vector.load %arg7[%c0_4, %c0_5] : memref<128x128xf32, #tpu.memory_space<vmem>>, vector<128x128xf32>
    %7 = arith.addf %6, %5 : vector<128x128xf32>
    %c0_6 = arith.constant 0 : index
    %c0_7 = arith.constant 0 : index
    %8 = vector.load %arg7[%c0_6, %c0_7] : memref<128x128xf32, #tpu.memory_space<vmem>>, vector<128x128xf32>
    tpu.vector_store %arg7[%c0_6, %c0_7], %7 {strides = array<i32>} : memref<128x128xf32, #tpu.memory_space<vmem>>, vector<128x128xf32>,
    %c1_i32 = arith.constant 1 : i32
    %9 = arith.cmpi eq, %arg1, %c1_i32 : i32
    %10 = arith.extui %9 : i1 to i32
    %c0_i32_8 = arith.constant 0 : i32
    %11 = arith.cmpi ne, %10, %c0_i32_8 : i32
    scf.if %11 {
      %c0_9 = arith.constant 0 : index
      %c0_10 = arith.constant 0 : index
      %12 = vector.load %arg7[%c0_9, %c0_10] : memref<128x128xf32, #tpu.memory_space<vmem>>, vector<128x128xf32>
      %c0_11 = arith.constant 0 : index
      %c0_12 = arith.constant 0 : index
      %13 = vector.load %arg4[%c0_11, %c0_12] : memref<128x128xf32, #tpu.memory_space<vmem>>, vector<128x128xf32>
      %14 = arith.addf %13, %12 : vector<128x128xf32>
      %c0_13 = arith.constant 0 : index
      %c0_14 = arith.constant 0 : index
      %15 = vector.load %arg5[%c0_13, %c0_14] : memref<128x128xf32, #tpu.memory_space<vmem>>, vector<128x128xf32>
      tpu.vector_store %arg5[%c0_13, %c0_14], %14 {strides = array<i32>} : memref<128x128xf32, #tpu.memory_space<vmem>>, vector<128x128xf32>,
      %16 = arith.truncf %12 : vector<128x128xf32> to vector<128x128xbf16>
      %c0_15 = arith.constant 0 : index
      %c0_16 = arith.constant 0 : index
      %17 = vector.load %arg6[%c0_15, %c0_16] : memref<128x128xbf16, #tpu.memory_space<vmem>>, vector<128x128xbf16>
      tpu.vector_store %arg6[%c0_15, %c0_16], %16 {strides = array<i32>} : memref<128x128xbf16, #tpu.memory_space<vmem>>, vector<128x128xbf16>,
    } else {
    }
    return
  }
  func.func @transform_0(%arg0: i32, %arg1: i32) -> (i32, i32) {
    %c0_i32 = arith.constant 0 : i32
    return %arg1, %arg0 : i32, i32
  }
  func.func @transform_1(%arg0: i32, %arg1: i32) -> (i32, i32) {
    %c0_i32 = arith.constant 0 : i32
    %c0_i32_0 = arith.constant 0 : i32
    return %arg1, %c0_i32 : i32, i32
  }
  func.func @transform_2(%arg0: i32, %arg1: i32) -> (i32, i32) {
    %c0_i32 = arith.constant 0 : i32
    %c0_i32_0 = arith.constant 0 : i32
    return %arg0, %c0_i32 : i32, i32
  }
  func.func @transform_3(%arg0: i32, %arg1: i32) -> (i32, i32) {
    %c0_i32 = arith.constant 0 : i32
    %c0_i32_0 = arith.constant 0 : i32
    return %arg0, %c0_i32 : i32, i32
  }
  func.func @transform_4(%arg0: i32, %arg1: i32) -> (i32, i32) {
    %c0_i32 = arith.constant 0 : i32
    %c0_i32_0 = arith.constant 0 : i32
    return %arg0, %c0_i32 : i32, i32
  }
}

module attributes {stable_mosaic.version = 11 : i64} {
  func.func @_propagate_kernel(%arg0: i32, %arg1: i32, %arg2: memref<128x128xbf16, #tpu.memory_space<vmem>>, %arg3: memref<128x128xbf16, #tpu.memory_space<vmem>>, %arg4: memref<128x128xf32, #tpu.memory_space<vmem>>, %arg5: memref<128x128xf32, #tpu.memory_space<vmem>>, %arg6: memref<128x128xbf16, #tpu.memory_space<vmem>>, %arg7: memref<128x128xf32, #tpu.memory_space<vmem>>) attributes {dimension_semantics = [#tpu.dimension_semantics<parallel>, #tpu.dimension_semantics<arbitrary>], iteration_bounds = array<i64: 2, 2>, scalar_prefetch = 0 : i64, scratch_operands = 1 : i64, tpu.core_type = #tpu.core_type<tc>, window_params = [{transform_indices = @transform_0, window_bounds = array<i64: 128, 128>}, {transform_indices = @transform_1, window_bounds = array<i64: 128, 128>}, {transform_indices = @transform_2, window_bounds = array<i64: 128, 128>}, {transform_indices = @transform_3, window_bounds = array<i64: 128, 128>}, {transform_indices = @transform_4, window_bounds = array<i64: 128, 128>}]} {
    %c0_i32 = arith.constant 0 : i32
    %0 = arith.cmpi eq, %arg1, %c0_i32 : i32
    %1 = arith.extui %0 : i1 to i32
    %c0_i32_0 = arith.constant 0 : i32
    %2 = arith.cmpi ne, %1, %c0_i32_0 : i32
    scf.if %2 {
      %cst_9 = arith.constant 0.000000e+00 : f32
      %12 = vector.broadcast %cst_9 : f32 to vector<128x128xf32>
      %c0_10 = arith.constant 0 : index
      %c0_11 = arith.constant 0 : index
      %13 = vector.load %arg7[%c0_10, %c0_11] : memref<128x128xf32, #tpu.memory_space<vmem>>, vector<128x128xf32>
      tpu.vector_store %arg7[%c0_10, %c0_11], %12 {strides = array<i32>} : memref<128x128xf32, #tpu.memory_space<vmem>>, vector<128x128xf32>,
    } else {
    }
    %c0 = arith.constant 0 : index
    %c0_1 = arith.constant 0 : index
    %3 = vector.load %arg2[%c0, %c0_1] : memref<128x128xbf16, #tpu.memory_space<vmem>>, vector<128x128xbf16>
    %c0_2 = arith.constant 0 : index
    %c0_3 = arith.constant 0 : index
    %4 = vector.load %arg3[%c0_2, %c0_3] : memref<128x128xbf16, #tpu.memory_space<vmem>>, vector<128x128xbf16>
    %cst = arith.constant dense<0.000000e+00> : vector<128x128xf32>
    %5 = tpu.matmul %3, %4, %cst {dimension_numbers = #tpu.dot_dimension_numbers<[1], [0], [0], [1], [0, 0, 1, 1], [], []>} : vector<128x128xbf16>, vector<128x128xbf16>, vector<128x128xf32> -> vector<128x128xf32>
    %c0_4 = arith.constant 0 : index
    %c0_5 = arith.constant 0 : index
    %6 = vector.load %arg7[%c0_4, %c0_5] : memref<128x128xf32, #tpu.memory_space<vmem>>, vector<128x128xf32>
    %7 = arith.addf %6, %5 : vector<128x128xf32>
    %c0_6 = arith.constant 0 : index
    %c0_7 = arith.constant 0 : index
    %8 = vector.load %arg7[%c0_6, %c0_7] : memref<128x128xf32, #tpu.memory_space<vmem>>, vector<128x128xf32>
    tpu.vector_store %arg7[%c0_6, %c0_7], %7 {strides = array<i32>} : memref<128x128xf32, #tpu.memory_space<vmem>>, vector<128x128xf32>,
    %c1_i32 = arith.constant 1 : i32
    %9 = arith.cmpi eq, %arg1, %c1_i32 : i32
    %10 = arith.extui %9 : i1 to i32
    %c0_i32_8 = arith.constant 0 : i32
    %11 = arith.cmpi ne, %10, %c0_i32_8 : i32
    scf.if %11 {
      %c0_9 = arith.constant 0 : index
      %c0_10 = arith.constant 0 : index
      %12 = vector.load %arg7[%c0_9, %c0_10] : memref<128x128xf32, #tpu.memory_space<vmem>>, vector<128x128xf32>
      %c0_11 = arith.constant 0 : index
      %c0_12 = arith.constant 0 : index
      %13 = vector.load %arg4[%c0_11, %c0_12] : memref<128x128xf32, #tpu.memory_space<vmem>>, vector<128x128xf32>
      %14 = arith.addf %13, %12 : vector<128x128xf32>
      %c0_13 = arith.constant 0 : index
      %c0_14 = arith.constant 0 : index
      %15 = vector.load %arg5[%c0_13, %c0_14] : memref<128x128xf32, #tpu.memory_space<vmem>>, vector<128x128xf32>
      tpu.vector_store %arg5[%c0_13, %c0_14], %14 {strides = array<i32>} : memref<128x128xf32, #tpu.memory_space<vmem>>, vector<128x128xf32>,
      %16 = arith.truncf %12 : vector<128x128xf32> to vector<128x128xbf16>
      %c0_15 = arith.constant 0 : index
      %c0_16 = arith.constant 0 : index
      %17 = vector.load %arg6[%c0_15, %c0_16] : memref<128x128xbf16, #tpu.memory_space<vmem>>, vector<128x128xbf16>
      tpu.vector_store %arg6[%c0_15, %c0_16], %16 {strides = array<i32>} : memref<128x128xbf16, #tpu.memory_space<vmem>>, vector<128x128xbf16>,
    } else {
    }
    return
  }
  func.func @transform_0(%arg0: i32, %arg1: i32) -> (i32, i32) {
    %c0_i32 = arith.constant 0 : i32
    return %arg0, %arg1 : i32, i32
  }
  func.func @transform_1(%arg0: i32, %arg1: i32) -> (i32, i32) {
    %c0_i32 = arith.constant 0 : i32
    %c0_i32_0 = arith.constant 0 : i32
    return %arg1, %c0_i32 : i32, i32
  }
  func.func @transform_2(%arg0: i32, %arg1: i32) -> (i32, i32) {
    %c0_i32 = arith.constant 0 : i32
    %c0_i32_0 = arith.constant 0 : i32
    return %arg0, %c0_i32 : i32, i32
  }
  func.func @transform_3(%arg0: i32, %arg1: i32) -> (i32, i32) {
    %c0_i32 = arith.constant 0 : i32
    %c0_i32_0 = arith.constant 0 : i32
    return %arg0, %c0_i32 : i32, i32
  }
  func.func @transform_4(%arg0: i32, %arg1: i32) -> (i32, i32) {
    %c0_i32 = arith.constant 0 : i32
    %c0_i32_0 = arith.constant 0 : i32
    return %arg0, %c0_i32 : i32, i32
  }
}

</mosaic_0001>

<llo_original>
// kernel: lightgcn_forward.6
$region0: #{lightgcn_forward.6}
  #allocation0 [shape = 'u32[]', space=smem, size = 0x4, offset = 0x4, fixed_abs, tag = 'smem constant byte address 0x4 - core index']
  #allocation1 [shape = 'u32[144,128]{1,0:T(1,128)}', space=vmem, size = 0x12000, scoped, tag = 'internal scratch']
  #allocation2 [shape = 'f32[128,128]{1,0:T(8,128)}', space=vmem, size = 0x10000, scoped, tag = 'scratch operand']
  %s0 = inlined_call_operand.vmem [shape: bf16[256,256], index: 0, kind: input, shape index: {}]
  %s1 = inlined_call_operand.vmem [shape: bf16[256,128], index: 1, kind: input, shape index: {}]
  %s2 = inlined_call_operand.vmem [shape: f32[256,128], index: 2, kind: input, shape index: {}, may-alias: {2,3}]
  %s3 = inlined_call_operand.vmem [shape: f32[256,128], index: 3, kind: output, shape index: {0}, may-alias: {2,3}]
  %s4 = inlined_call_operand.vmem [shape: bf16[256,128], index: 4, kind: output, shape index: {1}]
  %5 = xla_tuple %s3, %s4
  %s6 = sld [smem:[#allocation0]]
  $region102: #{lightgcn_forward.6} parent=0
    _
  %s8 = ssub.s32 1, %s6
  %s9 = scalar_select 0, %s8, %s6
  $region1: #{lightgcn_forward.6} parent=0
    #allocation3 [shape = 'u8[65536]{0}', space=vmem, size = 0x10000, scoped, tag = 'input window, operand 0']
    loop: start=0, step=1, limit=6
    $region2: #{lightgcn_forward.6} parent=1 // loop_pre_header
      _
    $region3: #{lightgcn_forward.6} parent=1 // loop_header
      %s11 = sphi 0, %s15
      %p12 = scmp.ge.s32.totalorder %s11, 6
      %s18 = sphi 0, %s30
      %s19 = sphi 0, %s26
      %s20 = sphi 0, %s18
      %s21 = sphi 0, %s19
      %s22 = sphi 0, %s20
      %s23 = sphi 0, %s21
      %s35 = sphi 0, %s37
      %s38 = sphi 0, %s35
      %s39 = sphi 0, %s38
      %s55 = sphi 0, %s39
      %s61 = sphi 0, %s63
      %s64 = sphi 0, %s61
      %s65 = sphi 0, %s64
      %s81 = sphi 0, %s65
      %s87 = sphi 0, %s89
      %s90 = sphi 0, %s87
      %s91 = sphi 0, %s90
      %s107 = sphi 0, %s91
      %s113 = sphi 0, %s115
      %s116 = sphi 0, %s113
      %s117 = sphi 0, %s116
      %s133 = sphi 0, %s117
      %s139 = sphi 0, %s141
      %s142 = sphi 0, %s139
      %s143 = sphi 0, %s142
      %s159 = sphi 0, %s143
    $region4: #{lightgcn_forward.6} parent=1 // loop_header_branch
      %14 = sbr.rel (%p12) target = $region8
    $region5: #{lightgcn_forward.6} parent=1 // loop_body
      %s16 = ssub.s32 %s11, 1
      %s17 = ssub.s32 %s11, 2
      %s24 = sadd.s32 1, %s19
      %p25 = scmp.ge.s32.totalorder %s24, 2
      %s26 = scalar_select %p25, 0, %s24
      %s27 = sadd.s32 1, %s18
      %s28 = scalar_select %p25, %s27, %s18
      %p29 = scmp.ge.s32.totalorder %s28, 2
      %s30 = scalar_select %p29, 0, %s28
      %s31 = ssub.s32 %s18, %s30
      %s32 = ssub.s32 %s19, %s26
      %s33 = sor.u32 %s31, %s32
      %p34 = scmp.eq.s32.totalorder %s33, 0
      %s36 = sadd.s32 %s35, 1
      %s37 = scalar_select %p34, %s35, %s36
      %p40 = pneg %p34
      %p41 = scmp.eq.s32.totalorder %s11, 3
      %p42 = por %p40, %p41
      %p43 = scmp.ne.s32.totalorder %s35, %s38
      %p44 = scmp.eq.s32.totalorder %s11, 0
      %p45 = por %p43, %p44
      %p46 = scmp.ne.s32.totalorder %s35, %s38
      %p47 = scmp.eq.s32.totalorder %s16, 3
      %p48 = por %p46, %p47
      %p49 = scmp.ne.s32.totalorder %s38, %s39
      %p50 = scmp.eq.s32.totalorder %s16, 0
      %p51 = por %p49, %p50
      %p52 = scmp.ne.s32.totalorder %s38, %s39
      %p53 = scmp.eq.s32.totalorder %s17, 3
      %p54 = por %p52, %p53
      %p56 = scmp.ne.s32.totalorder %s39, %s55
      %p57 = scmp.eq.s32.totalorder %s17, 0
      %p58 = por %p56, %p57
      %s59 = ssub.s32 %s19, %s26
      %p60 = scmp.eq.s32.totalorder %s59, 0
      %s62 = sadd.s32 %s61, 1
      %s63 = scalar_select %p60, %s61, %s62
      %p66 = pneg %p60
      %p67 = scmp.eq.s32.totalorder %s11, 3
      %p68 = por %p66, %p67
      %p69 = scmp.ne.s32.totalorder %s61, %s64
      %p70 = scmp.eq.s32.totalorder %s11, 0
      %p71 = por %p69, %p70
      %p72 = scmp.ne.s32.totalorder %s61, %s64
      %p73 = scmp.eq.s32.totalorder %s16, 3
      %p74 = por %p72, %p73
      %p75 = scmp.ne.s32.totalorder %s64, %s65
      %p76 = scmp.eq.s32.totalorder %s16, 0
      %p77 = por %p75, %p76
      %p78 = scmp.ne.s32.totalorder %s64, %s65
      %p79 = scmp.eq.s32.totalorder %s17, 3
      %p80 = por %p78, %p79
      %p82 = scmp.ne.s32.totalorder %s65, %s81
      %p83 = scmp.eq.s32.totalorder %s17, 0
      %p84 = por %p82, %p83
      %s85 = ssub.s32 %s18, %s30
      %p86 = scmp.eq.s32.totalorder %s85, 0
      %s88 = sadd.s32 %s87, 1
      %s89 = scalar_select %p86, %s87, %s88
      %p92 = pneg %p86
      %p93 = scmp.eq.s32.totalorder %s11, 3
      %p94 = por %p92, %p93
      %p95 = scmp.ne.s32.totalorder %s87, %s90
      %p96 = scmp.eq.s32.totalorder %s11, 0
      %p97 = por %p95, %p96
      %p98 = scmp.ne.s32.totalorder %s87, %s90
      %p99 = scmp.eq.s32.totalorder %s16, 3
      %p100 = por %p98, %p99
      %p101 = scmp.ne.s32.totalorder %s90, %s91
      %p102 = scmp.eq.s32.totalorder %s16, 0
      %p103 = por %p101, %p102
      %p104 = scmp.ne.s32.totalorder %s90, %s91
      %p105 = scmp.eq.s32.totalorder %s17, 3
      %p106 = por %p104, %p105
      %p108 = scmp.ne.s32.totalorder %s91, %s107
      %p109 = scmp.eq.s32.totalorder %s17, 0
      %p110 = por %p108, %p109
      %s111 = ssub.s32 %s18, %s30
      %p112 = scmp.eq.s32.totalorder %s111, 0
      %s114 = sadd.s32 %s113, 1
      %s115 = scalar_select %p112, %s113, %s114
      %p118 = pneg %p112
      %p119 = scmp.eq.s32.totalorder %s11, 3
      %p120 = por %p118, %p119
      %p121 = scmp.ne.s32.totalorder %s113, %s116
      %p122 = scmp.eq.s32.totalorder %s11, 0
      %p123 = por %p121, %p122
      %p124 = scmp.ne.s32.totalorder %s113, %s116
      %p125 = scmp.eq.s32.totalorder %s16, 3
      %p126 = por %p124, %p125
      %p127 = scmp.ne.s32.totalorder %s116, %s117
      %p128 = scmp.eq.s32.totalorder %s16, 0
      %p129 = por %p127, %p128
      %p130 = scmp.ne.s32.totalorder %s116, %s117
      %p131 = scmp.eq.s32.totalorder %s17, 3
      %p132 = por %p130, %p131
      %p134 = scmp.ne.s32.totalorder %s117, %s133
      %p135 = scmp.eq.s32.totalorder %s17, 0
      %p136 = por %p134, %p135
      %s137 = ssub.s32 %s18, %s30
      %p138 = scmp.eq.s32.totalorder %s137, 0
      %s140 = sadd.s32 %s139, 1
      %s141 = scalar_select %p138, %s139, %s140
      %p144 = pneg %p138
      %p145 = scmp.eq.s32.totalorder %s11, 3
      %p146 = por %p144, %p145
      %p147 = scmp.ne.s32.totalorder %s139, %s142
      %p148 = scmp.eq.s32.totalorder %s11, 0
      %p149 = por %p147, %p148
      %p150 = scmp.ne.s32.totalorder %s139, %s142
      %p151 = scmp.eq.s32.totalorder %s16, 3
      %p152 = por %p150, %p151
      %p153 = scmp.ne.s32.totalorder %s142, %s143
      %p154 = scmp.eq.s32.totalorder %s16, 0
      %p155 = por %p153, %p154
      %p156 = scmp.ne.s32.totalorder %s142, %s143
      %p157 = scmp.eq.s32.totalorder %s17, 3
      %p158 = por %p156, %p157
      %p160 = scmp.ne.s32.totalorder %s143, %s159
      %p161 = scmp.eq.s32.totalorder %s17, 0
      %p162 = por %p160, %p161
      %p163 = scmp.le.s32.totalorder 1, %s11
      %p164 = scmp.lt.s32.totalorder %s11, 5
      %p165 = pnand %p163, %p164
      %p166 = pneg %p165
      // Predicated region
      $region9: #{lightgcn_forward.6} parent=5 // pred_check
        _
      $region10: #{lightgcn_forward.6} parent=5 // pred_check_branch
        %168 = sbr.rel (%p165) target = $region12
      $region11: #{lightgcn_forward.6} parent=5 // pred_region
        %s169 = ssub.s32 %s11, 1
      $region12: #{lightgcn_forward.6} parent=5 // pred_fallthru
        _
      %p170 = scmp.lt.s32.totalorder %s11, 4
      // Predicated region
      $region13: #{lightgcn_forward.6} parent=5 // pred_check
        %p171 = pneg %p170
      $region14: #{lightgcn_forward.6} parent=5 // pred_check_branch
        %173 = sbr.rel (%p171) target = $region16
      $region15: #{lightgcn_forward.6} parent=5 // pred_region
        // Predicated region
        $region17: #{lightgcn_forward.6} parent=15 // pred_check
          %p174 = pneg %p45
        $region18: #{lightgcn_forward.6} parent=15 // pred_check_branch
          %176 = sbr.rel (%p174) target = $region20
        $region19: #{lightgcn_forward.6} parent=15 // pred_region
          %s177 = sand.u32 %s35, 1
          %s178 = sand.u32 %s35, 1
          %s179 = smul.addr %s178, 64
          %s180 = scalar_lea.vmem [#allocation3], %s179
          %s181 = smul.u32 16, %s18
          %s182 = smul.addr %s181, 2
          %s183 = sadd.s32 %s19, %s182
          %s184 = smul.addr %s183, 4
          %s185 = scalar_lea.vmem %s0, %s184
          // Predicated region
          $region21: #{lightgcn_forward.6} parent=19 // pred_check
            _
          $region22: #{lightgcn_forward.6} parent=19 // pred_check_branch
            %187 = sbr.rel (0) target = $region24
          $region23: #{lightgcn_forward.6} parent=19 // pred_region
            // Predicated region
            $region25: #{lightgcn_forward.6} parent=23 // pred_check
              _
            $region26: #{lightgcn_forward.6} parent=23 // pred_check_branch
              %189 = sbr.rel target = $region28
            $region27: #{lightgcn_forward.6} parent=23 // pred_region
              // Predicated region
              $region40: #{lightgcn_forward.6} parent=27 // pred_check
                _
              $region41: #{lightgcn_forward.6} parent=27 // pred_check_branch
                %234 = sbr.rel (0) target = $region43
              $region42: #{lightgcn_forward.6} parent=27 // pred_region
                loop: start=0, step=1, limit=1
                $region44: #{lightgcn_forward.6} parent=42 // loop_pre_header
                  _
                $region45: #{lightgcn_forward.6} parent=42 // loop_header
                  %s236 = sphi 0, %s240
                  %p237 = scmp.ge.s32.totalorder %s236, 1
                  %s241 = sphi %s185, %s185
                  %s242 = sphi %s180, %s180
                $region46: #{lightgcn_forward.6} parent=42 // loop_header_branch
                  %239 = sbr.rel (%p237) target = $region50
                $region47: #{lightgcn_forward.6} parent=42 // loop_body
                  _
                $region48: #{lightgcn_forward.6} parent=42 // loop_footer
                  %s240 = sadd.s32 1, %s236
                $region49: #{lightgcn_forward.6} parent=42 // loop_footer_branch
                  %235 = sbr.rel target = $region45
                $region50: #{lightgcn_forward.6} parent=42 // loop_exit
                  _
                loop: start=0, step=1, limit=1
                $region51: #{lightgcn_forward.6} parent=42 // loop_pre_header
                  _
                $region52: #{lightgcn_forward.6} parent=42 // loop_header
                  %s245 = sphi 0, %s249
                  %p246 = scmp.ge.s32.totalorder %s245, 1
                  %s250 = sphi %s185, %s185
                  %s251 = sphi %s180, %s180
                $region53: #{lightgcn_forward.6} parent=42 // loop_header_branch
                  %248 = sbr.rel (%p246) target = $region57
                $region54: #{lightgcn_forward.6} parent=42 // loop_body
                  %v252 = vld [vmem:[%s250] sm:$0xf]
                  %253 = vst [vmem:[%s251] sm:$0xf] %v252
                  %v254 = vld [vmem:[%s250 + $0x8] sm:$0xf]
                  %255 = vst [vmem:[%s251 + $0x4] sm:$0xf] %v254
                  %v256 = vld [vmem:[%s250 + $0x10] sm:$0xf]
                  %257 = vst [vmem:[%s251 + $0x8] sm:$0xf] %v256
                  %v258 = vld [vmem:[%s250 + $0x18] sm:$0xf]
                  %259 = vst [vmem:[%s251 + $0xc] sm:$0xf] %v258
                  %v260 = vld [vmem:[%s250 + $0x20] sm:$0xf]
                  %261 = vst [vmem:[%s251 + $0x10] sm:$0xf] %v260
                  %v262 = vld [vmem:[%s250 + $0x28] sm:$0xf]
                  %263 = vst [vmem:[%s251 + $0x14] sm:$0xf] %v262
                  %v264 = vld [vmem:[%s250 + $0x30] sm:$0xf]
                  %265 = vst [vmem:[%s251 + $0x18] sm:$0xf] %v264
                  %v266 = vld [vmem:[%s250 + $0x38] sm:$0xf]
                  %267 = vst [vmem:[%s251 + $0x1c] sm:$0xf] %v266
                  %v268 = vld [vmem:[%s250 + $0x40] sm:$0xf]
                  %269 = vst [vmem:[%s251 + $0x20] sm:$0xf] %v268
                  %v270 = vld [vmem:[%s250 + $0x48] sm:$0xf]
                  %271 = vst [vmem:[%s251 + $0x24] sm:$0xf] %v270
                  %v272 = vld [vmem:[%s250 + $0x50] sm:$0xf]
                  %273 = vst [vmem:[%s251 + $0x28] sm:$0xf] %v272
                  %v274 = vld [vmem:[%s250 + $0x58] sm:$0xf]
                  %275 = vst [vmem:[%s251 + $0x2c] sm:$0xf] %v274
                  %v276 = vld [vmem:[%s250 + $0x60] sm:$0xf]
                  %277 = vst [vmem:[%s251 + $0x30] sm:$0xf] %v276
                  %v278 = vld [vmem:[%s250 + $0x68] sm:$0xf]
                  %279 = vst [vmem:[%s251 + $0x34] sm:$0xf] %v278
                  %v280 = vld [vmem:[%s250 + $0x70] sm:$0xf]
                  %281 = vst [vmem:[%s251 + $0x38] sm:$0xf] %v280
                  %v282 = vld [vmem:[%s250 + $0x78] sm:$0xf]
                  %283 = vst [vmem:[%s251 + $0x3c] sm:$0xf] %v282
                $region55: #{lightgcn_forward.6} parent=42 // loop_footer
                  %s249 = sadd.s32 1, %s245
                $region56: #{lightgcn_forward.6} parent=42 // loop_footer_branch
                  %244 = sbr.rel target = $region52
                $region57: #{lightgcn_forward.6} parent=42 // loop_exit
                  _
              $region43: #{lightgcn_forward.6} parent=27 // pred_fallthru
                _
            $region28: #{lightgcn_forward.6} parent=23 // pred_fallthru
              _
            // Predicated region
            $region29: #{lightgcn_forward.6} parent=23 // pred_check
              _
            $region30: #{lightgcn_forward.6} parent=23 // pred_check_branch
              %191 = sbr.rel (0) target = $region32
            $region31: #{lightgcn_forward.6} parent=23 // pred_region
              loop: start=0, step=1, limit=1
              $region33: #{lightgcn_forward.6} parent=31 // loop_pre_header
                _
              $region34: #{lightgcn_forward.6} parent=31 // loop_header
                %s194 = sphi 0, %s198
                %p195 = scmp.ge.s32.totalorder %s194, 1
                %s199 = sphi %s185, %s185
                %s200 = sphi %s180, %s180
              $region35: #{lightgcn_forward.6} parent=31 // loop_header_branch
                %197 = sbr.rel (%p195) target = $region39
              $region36: #{lightgcn_forward.6} parent=31 // loop_body
                %v201 = vld [vmem:[%s199] sm:$0xf]
                %202 = vst [vmem:[%s200] sm:$0xf] %v201
                %v203 = vld [vmem:[%s199 + $0x8] sm:$0xf]
                %204 = vst [vmem:[%s200 + $0x4] sm:$0xf] %v203
                %v205 = vld [vmem:[%s199 + $0x10] sm:$0xf]
                %206 = vst [vmem:[%s200 + $0x8] sm:$0xf] %v205
                %v207 = vld [vmem:[%s199 + $0x18] sm:$0xf]
                %208 = vst [vmem:[%s200 + $0xc] sm:$0xf] %v207
                %v209 = vld [vmem:[%s199 + $0x20] sm:$0xf]
                %210 = vst [vmem:[%s200 + $0x10] sm:$0xf] %v209
                %v211 = vld [vmem:[%s199 + $0x28] sm:$0xf]
                %212 = vst [vmem:[%s200 + $0x14] sm:$0xf] %v211
                %v213 = vld [vmem:[%s199 + $0x30] sm:$0xf]
                %214 = vst [vmem:[%s200 + $0x18] sm:$0xf] %v213
                %v215 = vld [vmem:[%s199 + $0x38] sm:$0xf]
                %216 = vst [vmem:[%s200 + $0x1c] sm:$0xf] %v215
                %v217 = vld [vmem:[%s199 + $0x40] sm:$0xf]
                %218 = vst [vmem:[%s200 + $0x20] sm:$0xf] %v217
                %v219 = vld [vmem:[%s199 + $0x48] sm:$0xf]
                %220 = vst [vmem:[%s200 + $0x24] sm:$0xf] %v219
                %v221 = vld [vmem:[%s199 + $0x50] sm:$0xf]
                %222 = vst [vmem:[%s200 + $0x28] sm:$0xf] %v221
                %v223 = vld [vmem:[%s199 + $0x58] sm:$0xf]
                %224 = vst [vmem:[%s200 + $0x2c] sm:$0xf] %v223
                %v225 = vld [vmem:[%s199 + $0x60] sm:$0xf]
                %226 = vst [vmem:[%s200 + $0x30] sm:$0xf] %v225
                %v227 = vld [vmem:[%s199 + $0x68] sm:$0xf]
                %228 = vst [vmem:[%s200 + $0x34] sm:$0xf] %v227
                %v229 = vld [vmem:[%s199 + $0x70] sm:$0xf]
                %230 = vst [vmem:[%s200 + $0x38] sm:$0xf] %v229
                %v231 = vld [vmem:[%s199 + $0x78] sm:$0xf]
                %232 = vst [vmem:[%s200 + $0x3c] sm:$0xf] %v231
              $region37: #{lightgcn_forward.6} parent=31 // loop_footer
                %s198 = sadd.s32 1, %s194
              $region38: #{lightgcn_forward.6} parent=31 // loop_footer_branch
                %193 = sbr.rel target = $region34
              $region39: #{lightgcn_forward.6} parent=31 // loop_exit
                _
            $region32: #{lightgcn_forward.6} parent=23 // pred_fallthru
              _
          $region24: #{lightgcn_forward.6} parent=19 // pred_fallthru
            _
          %284 = vnop
        $region20: #{lightgcn_forward.6} parent=15 // pred_fallthru
          _
        // Predicated region
        $region58: #{lightgcn_forward.6} parent=15 // pred_check
          %p285 = pneg %p71
        $region59: #{lightgcn_forward.6} parent=15 // pred_check_branch
          %287 = sbr.rel (%p285) target = $region61
        $region60: #{lightgcn_forward.6} parent=15 // pred_region
          %s288 = smul.u32 16, %s19
          %p289 = scmp.lt.s32.totalorder %s288, 31
          %s290 = scalar_select %p289, %s288, 31
          %s291 = smul.addr %s290, 4
          %s292 = scalar_lea.vmem %s1, %s291
          %s293 = smul.u32 16, %s19
        $region61: #{lightgcn_forward.6} parent=15 // pred_fallthru
          _
        // Predicated region
        $region62: #{lightgcn_forward.6} parent=15 // pred_check
          %p294 = pneg %p97
        $region63: #{lightgcn_forward.6} parent=15 // pred_check_branch
          %296 = sbr.rel (%p294) target = $region65
        $region64: #{lightgcn_forward.6} parent=15 // pred_region
          %s297 = smul.u32 16, %s18
          %p298 = scmp.lt.s32.totalorder %s297, 31
          %s299 = scalar_select %p298, %s297, 31
          %s300 = smul.addr %s299, 8
          %s301 = scalar_lea.vmem %s2, %s300
          %s302 = smul.u32 16, %s18
        $region65: #{lightgcn_forward.6} parent=15 // pred_fallthru
          _
      $region16: #{lightgcn_forward.6} parent=5 // pred_fallthru
        _
      %p303 = scmp.le.s32.totalorder 1, %s11
      %p304 = scmp.lt.s32.totalorder %s11, 5
      %p305 = pnand %p303, %p304
      %p306 = pneg %p305
      // Predicated region
      $region66: #{lightgcn_forward.6} parent=5 // pred_check
        _
      $region67: #{lightgcn_forward.6} parent=5 // pred_check_branch
        %308 = sbr.rel (%p305) target = $region69
      $region68: #{lightgcn_forward.6} parent=5 // pred_region
        %s309 = ssub.s32 %s11, 1
        %s310 = sand.u32 %s38, 1
        %s311 = sand.u32 %s38, 1
        %s312 = smul.addr %s311, 64
        %s313 = scalar_lea.vmem [#allocation3], %s312
        // Predicated region
        $region70: #{lightgcn_forward.6} parent=68 // pred_check
          %p314 = pneg %p51
        $region71: #{lightgcn_forward.6} parent=68 // pred_check_branch
          %316 = sbr.rel (%p314) target = $region73
        $region72: #{lightgcn_forward.6} parent=68 // pred_region
          _
        $region73: #{lightgcn_forward.6} parent=68 // pred_fallthru
          _
        %s317 = sand.u32 %s38, 1
        %s318 = sand.u32 %s38, 1
        %s319 = smul.addr %s318, 64
        %s320 = scalar_lea.vmem [#allocation3], %s319
        %p321 = pneg %p51
        %p322 = pneg %p48
        %s323 = smul.u32 16, %s21
        %p324 = scmp.lt.s32.totalorder %s323, 31
        %s325 = scalar_select %p324, %s323, 31
        %s326 = smul.addr %s325, 4
        %s327 = scalar_lea.vmem %s1, %s326
        %p328 = pneg %p77
        %p329 = pneg %p74
        %s330 = smul.u32 16, %s20
        %p331 = scmp.lt.s32.totalorder %s330, 31
        %s332 = scalar_select %p331, %s330, 31
        %s333 = smul.addr %s332, 8
        %s334 = scalar_lea.vmem %s2, %s333
        %p335 = pneg %p103
        %p336 = pneg %p100
        %p337 = pneg %p129
        %p338 = pneg %p126
        %s339 = smul.u32 16, %s20
        %p340 = scmp.lt.s32.totalorder %s339, 31
        %s341 = scalar_select %p340, %s339, 31
        %s342 = smul.addr %s341, 8
        %s343 = scalar_lea.vmem %s3, %s342
        %p344 = pneg %p155
        %p345 = pneg %p152
        %s346 = smul.u32 16, %s20
        %p347 = scmp.lt.s32.totalorder %s346, 31
        %s348 = scalar_select %p347, %s346, 31
        %s349 = smul.addr %s348, 4
        %s350 = scalar_lea.vmem %s4, %s349
        %s351 = smul.u32 16, %s20
        %s352 = smul.u32 16, %s21
        %p353 = scmp.lt.s32.totalorder %s352, 31
        %s354 = scalar_select %p353, %s352, 31
        %s355 = smul.addr %s354, 4
        %s356 = scalar_lea.vmem %s1, %s355
        %s357 = smul.u32 16, %s21
        %s358 = smul.u32 16, %s20
        %p359 = scmp.lt.s32.totalorder %s358, 31
        %s360 = scalar_select %p359, %s358, 31
        %s361 = smul.addr %s360, 8
        %s362 = scalar_lea.vmem %s2, %s361
        %s363 = smul.u32 16, %s20
        %s364 = smul.u32 16, %s20
        %p365 = scmp.lt.s32.totalorder %s364, 31
        %s366 = scalar_select %p365, %s364, 31
        %s367 = smul.addr %s366, 8
        %s368 = scalar_lea.vmem %s3, %s367
        %s369 = smul.u32 16, %s20
        %s370 = smul.u32 16, %s20
        %p371 = scmp.lt.s32.totalorder %s370, 31
        %s372 = scalar_select %p371, %s370, 31
        %s373 = smul.addr %s372, 4
        %s374 = scalar_lea.vmem %s4, %s373
        %s375 = smul.u32 16, %s20
        %p377 = scmp.eq.s32.totalorder %s21, 0
        // Predicated region
        $region74: #{lightgcn_forward.6} parent=68 // pred_check
          %p378 = pneg %p377
        $region75: #{lightgcn_forward.6} parent=68 // pred_check_branch
          %380 = sbr.rel (%p378) target = $region77
        $region76: #{lightgcn_forward.6} parent=68 // pred_region
          %381 = vst [vmem:[#allocation2] sm:$0xff] 0.0
          %382 = vst [vmem:[#allocation2 + $0x8] sm:$0xff] 0.0
          %383 = vst [vmem:[#allocation2 + $0x10] sm:$0xff] 0.0
          %384 = vst [vmem:[#allocation2 + $0x18] sm:$0xff] 0.0
          %385 = vst [vmem:[#allocation2 + $0x20] sm:$0xff] 0.0
          %386 = vst [vmem:[#allocation2 + $0x28] sm:$0xff] 0.0
          %387 = vst [vmem:[#allocation2 + $0x30] sm:$0xff] 0.0
          %388 = vst [vmem:[#allocation2 + $0x38] sm:$0xff] 0.0
          %389 = vst [vmem:[#allocation2 + $0x40] sm:$0xff] 0.0
          %390 = vst [vmem:[#allocation2 + $0x48] sm:$0xff] 0.0
          %391 = vst [vmem:[#allocation2 + $0x50] sm:$0xff] 0.0
          %392 = vst [vmem:[#allocation2 + $0x58] sm:$0xff] 0.0
          %393 = vst [vmem:[#allocation2 + $0x60] sm:$0xff] 0.0
          %394 = vst [vmem:[#allocation2 + $0x68] sm:$0xff] 0.0
          %395 = vst [vmem:[#allocation2 + $0x70] sm:$0xff] 0.0
          %396 = vst [vmem:[#allocation2 + $0x78] sm:$0xff] 0.0
        $region77: #{lightgcn_forward.6} parent=68 // pred_fallthru
          _
        %v397 = vld [vmem:[%s313] sm:$0xf]
        %v398 = vld [vmem:[%s313 + $0x4] sm:$0xf]
        %v399 = vld [vmem:[%s313 + $0x8] sm:$0xf]
        %v400 = vld [vmem:[%s313 + $0xc] sm:$0xf]
        %v401 = vld [vmem:[%s313 + $0x10] sm:$0xf]
        %v402 = vld [vmem:[%s313 + $0x14] sm:$0xf]
        %v403 = vld [vmem:[%s313 + $0x18] sm:$0xf]
        %v404 = vld [vmem:[%s313 + $0x1c] sm:$0xf]
        %v405 = vld [vmem:[%s313 + $0x20] sm:$0xf]
        %v406 = vld [vmem:[%s313 + $0x24] sm:$0xf]
        %v407 = vld [vmem:[%s313 + $0x28] sm:$0xf]
        %v408 = vld [vmem:[%s313 + $0x2c] sm:$0xf]
        %v409 = vld [vmem:[%s313 + $0x30] sm:$0xf]
        %v410 = vld [vmem:[%s313 + $0x34] sm:$0xf]
        %v411 = vld [vmem:[%s313 + $0x38] sm:$0xf]
        %v412 = vld [vmem:[%s313 + $0x3c] sm:$0xf]
        %v413 = vld [vmem:[%s356] sm:$0xf]
        %v414 = vld [vmem:[%s356 + $0x4] sm:$0xf]
        %v415 = vld [vmem:[%s356 + $0x8] sm:$0xf]
        %v416 = vld [vmem:[%s356 + $0xc] sm:$0xf]
        %v417 = vld [vmem:[%s356 + $0x10] sm:$0xf]
        %v418 = vld [vmem:[%s356 + $0x14] sm:$0xf]
        %v419 = vld [vmem:[%s356 + $0x18] sm:$0xf]
        %v420 = vld [vmem:[%s356 + $0x1c] sm:$0xf]
        %v421 = vld [vmem:[%s356 + $0x20] sm:$0xf]
        %v422 = vld [vmem:[%s356 + $0x24] sm:$0xf]
        %v423 = vld [vmem:[%s356 + $0x28] sm:$0xf]
        %v424 = vld [vmem:[%s356 + $0x2c] sm:$0xf]
        %v425 = vld [vmem:[%s356 + $0x30] sm:$0xf]
        %v426 = vld [vmem:[%s356 + $0x34] sm:$0xf]
        %v427 = vld [vmem:[%s356 + $0x38] sm:$0xf]
        %v428 = vld [vmem:[%s356 + $0x3c] sm:$0xf]
        %v445 = vunpack.c.l.b16 %v397
        %v446 = vunpack.c.l.b16 %v398
        %v447 = vunpack.c.l.b16 %v399
        %v448 = vunpack.c.l.b16 %v400
        %v449 = vunpack.c.l.b16 %v401
        %v450 = vunpack.c.l.b16 %v402
        %v451 = vunpack.c.l.b16 %v403
        %v452 = vunpack.c.l.b16 %v404
        %v453 = vunpack.c.l.b16 %v405
        %v454 = vunpack.c.l.b16 %v406
        %v455 = vunpack.c.l.b16 %v407
        %v456 = vunpack.c.l.b16 %v408
        %v457 = vunpack.c.l.b16 %v409
        %v458 = vunpack.c.l.b16 %v410
        %v459 = vunpack.c.l.b16 %v411
        %v460 = vunpack.c.l.b16 %v412
        %v461 = vpack.c.b16 %v446, %v445
        %v462 = vpack.c.b16 %v448, %v447
        %v463 = vpack.c.b16 %v450, %v449
        %v464 = vpack.c.b16 %v452, %v451
        %v465 = vpack.c.b16 %v454, %v453
        %v466 = vpack.c.b16 %v456, %v455
        %v467 = vpack.c.b16 %v458, %v457
        %v468 = vpack.c.b16 %v460, %v459
        %v493 = vunpack.c.l.b16 %v413
        %v494 = vunpack.c.l.b16 %v414
        %v495 = vunpack.c.l.b16 %v415
        %v496 = vunpack.c.l.b16 %v416
        %v497 = vunpack.c.l.b16 %v417
        %v498 = vunpack.c.l.b16 %v418
        %v499 = vunpack.c.l.b16 %v419
        %v500 = vunpack.c.l.b16 %v420
        %v501 = vunpack.c.l.b16 %v421
        %v502 = vunpack.c.l.b16 %v422
        %v503 = vunpack.c.l.b16 %v423
        %v504 = vunpack.c.l.b16 %v424
        %v505 = vunpack.c.l.b16 %v425
        %v506 = vunpack.c.l.b16 %v426
        %v507 = vunpack.c.l.b16 %v427
        %v508 = vunpack.c.l.b16 %v428
        %v509 = vpack.c.b16 %v494, %v493
        %v510 = vpack.c.b16 %v496, %v495
        %v511 = vpack.c.b16 %v498, %v497
        %v512 = vpack.c.b16 %v500, %v499
        %v513 = vpack.c.b16 %v502, %v501
        %v514 = vpack.c.b16 %v504, %v503
        %v515 = vpack.c.b16 %v506, %v505
        %v516 = vpack.c.b16 %v508, %v507
        %525 = vmatprep.subr.bf16.mxu0 0
        %526 = vmatpush1.bf16.msra.mxu0 %v509
        %527 = vmatprep.subr.bf16.mxu0 0
        %528 = vmatpush1.bf16.msra.mxu0 %v510
        %529 = vmatprep.subr.bf16.mxu0 0
        %530 = vmatpush1.bf16.msra.mxu0 %v511
        %531 = vmatprep.subr.bf16.mxu0 0
        %532 = vmatpush1.bf16.msra.mxu0 %v512
        %533 = vmatprep.subr.bf16.mxu0 0
        %534 = vmatpush1.bf16.msra.mxu0 %v513
        %535 = vmatprep.subr.bf16.mxu0 0
        %536 = vmatpush1.bf16.msra.mxu0 %v514
        %537 = vmatprep.subr.bf16.mxu0 0
        %538 = vmatpush1.bf16.msra.mxu0 %v515
        %539 = vmatprep.subr.bf16.mxu0 0
        %540 = vmatpush1.bf16.msra.mxu0 %v516
        %541 = vmatprep.subr.bf16.mxu0 0
        %542 = vmatpush1.bf16.msra.mxu0 0
        %543 = vmatprep.subr.bf16.mxu0 0
        %544 = vmatpush1.bf16.msra.mxu0 0
        %545 = vmatprep.subr.bf16.mxu0 0
        %546 = vmatpush1.bf16.msra.mxu0 0
        %547 = vmatprep.subr.bf16.mxu0 0
        %548 = vmatpush1.bf16.msra.mxu0 0
        %549 = vmatprep.subr.bf16.mxu0 0
        %550 = vmatpush1.bf16.msra.mxu0 0
        %551 = vmatprep.subr.bf16.mxu0 0
        %552 = vmatpush1.bf16.msra.mxu0 0
        %553 = vmatprep.subr.bf16.mxu0 0
        %554 = vmatpush1.bf16.msra.mxu0 0
        %555 = vmatprep.subr.bf16.mxu0 0
        %556 = vmatpush1.bf16.msra.mxu0 0
        %557 = vmatprep.mubr.bf16.mxu0 0
        %558 = vmatmul.mubr.bf16.gmra.mrb[0].mxu0 %v461
        %v559 = vpop.f32.mrb[0].mxu0
        %v560 = vadd.f32 0.0, %v559
        %v561 = vpop.f32.mrb[0].mxu0
        %v562 = vpop.f32.mrb[0].mxu0
        %v563 = vadd.f32 0.0, %v562
        %v564 = vpop.f32.mrb[0].mxu0
        %565 = vmatprep.mubr.bf16.mxu0 0
        %566 = vmatmul.mubr.bf16.gmra.mrb[0].mxu0 %v462
        %v567 = vpop.f32.mrb[0].mxu0
        %v568 = vadd.f32 0.0, %v567
        %v569 = vpop.f32.mrb[0].mxu0
        %v570 = vpop.f32.mrb[0].mxu0
        %v571 = vadd.f32 0.0, %v570
        %v572 = vpop.f32.mrb[0].mxu0
        %573 = vmatprep.mubr.bf16.mxu0 0
        %574 = vmatmul.mubr.bf16.gmra.mrb[0].mxu0 %v463
        %v575 = vpop.f32.mrb[0].mxu0
        %v576 = vadd.f32 0.0, %v575
        %v577 = vpop.f32.mrb[0].mxu0
        %v578 = vpop.f32.mrb[0].mxu0
        %v579 = vadd.f32 0.0, %v578
        %v580 = vpop.f32.mrb[0].mxu0
        %581 = vmatprep.mubr.bf16.mxu0 0
        %582 = vmatmul.mubr.bf16.gmra.mrb[0].mxu0 %v464
        %v583 = vpop.f32.mrb[0].mxu0
        %v584 = vadd.f32 0.0, %v583
        %v585 = vpop.f32.mrb[0].mxu0
        %v586 = vpop.f32.mrb[0].mxu0
        %v587 = vadd.f32 0.0, %v586
        %v588 = vpop.f32.mrb[0].mxu0
        %589 = vmatprep.mubr.bf16.mxu0 0
        %590 = vmatmul.mubr.bf16.gmra.mrb[0].mxu0 %v465
        %v591 = vpop.f32.mrb[0].mxu0
        %v592 = vadd.f32 0.0, %v591
        %v593 = vpop.f32.mrb[0].mxu0
        %v594 = vpop.f32.mrb[0].mxu0
        %v595 = vadd.f32 0.0, %v594
        %v596 = vpop.f32.mrb[0].mxu0
        %597 = vmatprep.mubr.bf16.mxu0 0
        %598 = vmatmul.mubr.bf16.gmra.mrb[0].mxu0 %v466
        %v599 = vpop.f32.mrb[0].mxu0
        %v600 = vadd.f32 0.0, %v599
        %v601 = vpop.f32.mrb[0].mxu0
        %v602 = vpop.f32.mrb[0].mxu0
        %v603 = vadd.f32 0.0, %v602
        %v604 = vpop.f32.mrb[0].mxu0
        %605 = vmatprep.mubr.bf16.mxu0 0
        %606 = vmatmul.mubr.bf16.gmra.mrb[0].mxu0 %v467
        %v607 = vpop.f32.mrb[0].mxu0
        %v608 = vadd.f32 0.0, %v607
        %v609 = vpop.f32.mrb[0].mxu0
        %v610 = vpop.f32.mrb[0].mxu0
        %v611 = vadd.f32 0.0, %v610
        %v612 = vpop.f32.mrb[0].mxu0
        %613 = vmatprep.mubr.bf16.mxu0 0
        %614 = vmatmul.mubr.bf16.gmra.mrb[0].mxu0 %v468
        %v615 = vpop.f32.mrb[0].mxu0
        %v616 = vadd.f32 0.0, %v615
        %v617 = vpop.f32.mrb[0].mxu0
        %v618 = vpop.f32.mrb[0].mxu0
        %v619 = vadd.f32 0.0, %v618
        %v620 = vpop.f32.mrb[0].mxu0
        %621 = vdwg.mxu0
        %v622 = vld [vmem:[#allocation2] sm:$0xff]
        %v623 = vld [vmem:[#allocation2 + $0x8] sm:$0xff]
        %v624 = vld [vmem:[#allocation2 + $0x10] sm:$0xff]
        %v625 = vld [vmem:[#allocation2 + $0x18] sm:$0xff]
        %v626 = vld [vmem:[#allocation2 + $0x20] sm:$0xff]
        %v627 = vld [vmem:[#allocation2 + $0x28] sm:$0xff]
        %v628 = vld [vmem:[#allocation2 + $0x30] sm:$0xff]
        %v629 = vld [vmem:[#allocation2 + $0x38] sm:$0xff]
        %v630 = vld [vmem:[#allocation2 + $0x40] sm:$0xff]
        %v631 = vld [vmem:[#allocation2 + $0x48] sm:$0xff]
        %v632 = vld [vmem:[#allocation2 + $0x50] sm:$0xff]
        %v633 = vld [vmem:[#allocation2 + $0x58] sm:$0xff]
        %v634 = vld [vmem:[#allocation2 + $0x60] sm:$0xff]
        %v635 = vld [vmem:[#allocation2 + $0x68] sm:$0xff]
        %v636 = vld [vmem:[#allocation2 + $0x70] sm:$0xff]
        %v637 = vld [vmem:[#allocation2 + $0x78] sm:$0xff]
        %v638 = vadd.f32 %v622, %v560
        %v639 = vadd.f32 %v623, %v563
        %v640 = vadd.f32 %v624, %v568
        %v641 = vadd.f32 %v625, %v571
        %v642 = vadd.f32 %v626, %v576
        %v643 = vadd.f32 %v627, %v579
        %v644 = vadd.f32 %v628, %v584
        %v645 = vadd.f32 %v629, %v587
        %v646 = vadd.f32 %v630, %v592
        %v647 = vadd.f32 %v631, %v595
        %v648 = vadd.f32 %v632, %v600
        %v649 = vadd.f32 %v633, %v603
        %v650 = vadd.f32 %v634, %v608
        %v651 = vadd.f32 %v635, %v611
        %v652 = vadd.f32 %v636, %v616
        %v653 = vadd.f32 %v637, %v619
        %654 = vst [vmem:[#allocation2] sm:$0xff] %v638
        %655 = vst [vmem:[#allocation2 + $0x8] sm:$0xff] %v639
        %656 = vst [vmem:[#allocation2 + $0x10] sm:$0xff] %v640
        %657 = vst [vmem:[#allocation2 + $0x18] sm:$0xff] %v641
        %658 = vst [vmem:[#allocation2 + $0x20] sm:$0xff] %v642
        %659 = vst [vmem:[#allocation2 + $0x28] sm:$0xff] %v643
        %660 = vst [vmem:[#allocation2 + $0x30] sm:$0xff] %v644
        %661 = vst [vmem:[#allocation2 + $0x38] sm:$0xff] %v645
        %662 = vst [vmem:[#allocation2 + $0x40] sm:$0xff] %v646
        %663 = vst [vmem:[#allocation2 + $0x48] sm:$0xff] %v647
        %664 = vst [vmem:[#allocation2 + $0x50] sm:$0xff] %v648
        %665 = vst [vmem:[#allocation2 + $0x58] sm:$0xff] %v649
        %666 = vst [vmem:[#allocation2 + $0x60] sm:$0xff] %v650
        %667 = vst [vmem:[#allocation2 + $0x68] sm:$0xff] %v651
        %668 = vst [vmem:[#allocation2 + $0x70] sm:$0xff] %v652
        %669 = vst [vmem:[#allocation2 + $0x78] sm:$0xff] %v653
        %p670 = scmp.eq.s32.totalorder %s21, 1
        // Predicated region
        $region78: #{lightgcn_forward.6} parent=68 // pred_check
          %p671 = pneg %p670
        $region79: #{lightgcn_forward.6} parent=68 // pred_check_branch
          %673 = sbr.rel (%p671) target = $region81
        $region80: #{lightgcn_forward.6} parent=68 // pred_region
          %v674 = vld [vmem:[#allocation2] sm:$0xff]
          %v675 = vld [vmem:[#allocation2 + $0x8] sm:$0xff]
          %v676 = vld [vmem:[#allocation2 + $0x10] sm:$0xff]
          %v677 = vld [vmem:[#allocation2 + $0x18] sm:$0xff]
          %v678 = vld [vmem:[#allocation2 + $0x20] sm:$0xff]
          %v679 = vld [vmem:[#allocation2 + $0x28] sm:$0xff]
          %v680 = vld [vmem:[#allocation2 + $0x30] sm:$0xff]
          %v681 = vld [vmem:[#allocation2 + $0x38] sm:$0xff]
          %v682 = vld [vmem:[#allocation2 + $0x40] sm:$0xff]
          %v683 = vld [vmem:[#allocation2 + $0x48] sm:$0xff]
          %v684 = vld [vmem:[#allocation2 + $0x50] sm:$0xff]
          %v685 = vld [vmem:[#allocation2 + $0x58] sm:$0xff]
          %v686 = vld [vmem:[#allocation2 + $0x60] sm:$0xff]
          %v687 = vld [vmem:[#allocation2 + $0x68] sm:$0xff]
          %v688 = vld [vmem:[#allocation2 + $0x70] sm:$0xff]
          %v689 = vld [vmem:[#allocation2 + $0x78] sm:$0xff]
          %v690 = vld [vmem:[%s362] sm:$0xff]
          %v691 = vld [vmem:[%s362 + $0x8] sm:$0xff]
          %v692 = vld [vmem:[%s362 + $0x10] sm:$0xff]
          %v693 = vld [vmem:[%s362 + $0x18] sm:$0xff]
          %v694 = vld [vmem:[%s362 + $0x20] sm:$0xff]
          %v695 = vld [vmem:[%s362 + $0x28] sm:$0xff]
          %v696 = vld [vmem:[%s362 + $0x30] sm:$0xff]
          %v697 = vld [vmem:[%s362 + $0x38] sm:$0xff]
          %v698 = vld [vmem:[%s362 + $0x40] sm:$0xff]
          %v699 = vld [vmem:[%s362 + $0x48] sm:$0xff]
          %v700 = vld [vmem:[%s362 + $0x50] sm:$0xff]
          %v701 = vld [vmem:[%s362 + $0x58] sm:$0xff]
          %v702 = vld [vmem:[%s362 + $0x60] sm:$0xff]
          %v703 = vld [vmem:[%s362 + $0x68] sm:$0xff]
          %v704 = vld [vmem:[%s362 + $0x70] sm:$0xff]
          %v705 = vld [vmem:[%s362 + $0x78] sm:$0xff]
          %v706 = vadd.f32 %v690, %v674
          %v707 = vadd.f32 %v691, %v675
          %v708 = vadd.f32 %v692, %v676
          %v709 = vadd.f32 %v693, %v677
          %v710 = vadd.f32 %v694, %v678
          %v711 = vadd.f32 %v695, %v679
          %v712 = vadd.f32 %v696, %v680
          %v713 = vadd.f32 %v697, %v681
          %v714 = vadd.f32 %v698, %v682
          %v715 = vadd.f32 %v699, %v683
          %v716 = vadd.f32 %v700, %v684
          %v717 = vadd.f32 %v701, %v685
          %v718 = vadd.f32 %v702, %v686
          %v719 = vadd.f32 %v703, %v687
          %v720 = vadd.f32 %v704, %v688
          %v721 = vadd.f32 %v705, %v689
          %722 = vst [vmem:[%s368] sm:$0xff] %v706
          %723 = vst [vmem:[%s368 + $0x8] sm:$0xff] %v707
          %724 = vst [vmem:[%s368 + $0x10] sm:$0xff] %v708
          %725 = vst [vmem:[%s368 + $0x18] sm:$0xff] %v709
          %726 = vst [vmem:[%s368 + $0x20] sm:$0xff] %v710
          %727 = vst [vmem:[%s368 + $0x28] sm:$0xff] %v711
          %728 = vst [vmem:[%s368 + $0x30] sm:$0xff] %v712
          %729 = vst [vmem:[%s368 + $0x38] sm:$0xff] %v713
          %730 = vst [vmem:[%s368 + $0x40] sm:$0xff] %v714
          %731 = vst [vmem:[%s368 + $0x48] sm:$0xff] %v715
          %732 = vst [vmem:[%s368 + $0x50] sm:$0xff] %v716
          %733 = vst [vmem:[%s368 + $0x58] sm:$0xff] %v717
          %734 = vst [vmem:[%s368 + $0x60] sm:$0xff] %v718
          %735 = vst [vmem:[%s368 + $0x68] sm:$0xff] %v719
          %736 = vst [vmem:[%s368 + $0x70] sm:$0xff] %v720
          %737 = vst [vmem:[%s368 + $0x78] sm:$0xff] %v721
          %v738 = vpack.c.bf16 %v675, %v674
          %v739 = vpack.c.bf16 %v677, %v676
          %v740 = vpack.c.bf16 %v679, %v678
          %v741 = vpack.c.bf16 %v681, %v680
          %v742 = vpack.c.bf16 %v683, %v682
          %v743 = vpack.c.bf16 %v685, %v684
          %v744 = vpack.c.bf16 %v687, %v686
          %v745 = vpack.c.bf16 %v689, %v688
          %v754 = vunpack.c.l.b16 %v738
          %v755 = vunpack.c.h.b16 %v738
          %v756 = vunpack.c.l.b16 %v739
          %v757 = vunpack.c.h.b16 %v739
          %v758 = vunpack.c.l.b16 %v740
          %v759 = vunpack.c.h.b16 %v740
          %v760 = vunpack.c.l.b16 %v741
          %v761 = vunpack.c.h.b16 %v741
          %v762 = vunpack.c.l.b16 %v742
          %v763 = vunpack.c.h.b16 %v742
          %v764 = vunpack.c.l.b16 %v743
          %v765 = vunpack.c.h.b16 %v743
          %v766 = vunpack.c.l.b16 %v744
          %v767 = vunpack.c.h.b16 %v744
          %v768 = vunpack.c.l.b16 %v745
          %v769 = vunpack.c.h.b16 %v745
          %v770 = vpack.c.b16 %v754, %v754
          %v771 = vpack.c.b16 %v755, %v755
          %v772 = vpack.c.b16 %v756, %v756
          %v773 = vpack.c.b16 %v757, %v757
          %v774 = vpack.c.b16 %v758, %v758
          %v775 = vpack.c.b16 %v759, %v759
          %v776 = vpack.c.b16 %v760, %v760
          %v777 = vpack.c.b16 %v761, %v761
          %v778 = vpack.c.b16 %v762, %v762
          %v779 = vpack.c.b16 %v763, %v763
          %v780 = vpack.c.b16 %v764, %v764
          %v781 = vpack.c.b16 %v765, %v765
          %v782 = vpack.c.b16 %v766, %v766
          %v783 = vpack.c.b16 %v767, %v767
          %v784 = vpack.c.b16 %v768, %v768
          %v785 = vpack.c.b16 %v769, %v769
          %802 = vst [vmem:[%s374] sm:$0xf] %v770
          %803 = vst [vmem:[%s374 + $0x4] sm:$0xf] %v771
          %804 = vst [vmem:[%s374 + $0x8] sm:$0xf] %v772
          %805 = vst [vmem:[%s374 + $0xc] sm:$0xf] %v773
          %806 = vst [vmem:[%s374 + $0x10] sm:$0xf] %v774
          %807 = vst [vmem:[%s374 + $0x14] sm:$0xf] %v775
          %808 = vst [vmem:[%s374 + $0x18] sm:$0xf] %v776
          %809 = vst [vmem:[%s374 + $0x1c] sm:$0xf] %v777
          %810 = vst [vmem:[%s374 + $0x20] sm:$0xf] %v778
          %811 = vst [vmem:[%s374 + $0x24] sm:$0xf] %v779
          %812 = vst [vmem:[%s374 + $0x28] sm:$0xf] %v780
          %813 = vst [vmem:[%s374 + $0x2c] sm:$0xf] %v781
          %814 = vst [vmem:[%s374 + $0x30] sm:$0xf] %v782
          %815 = vst [vmem:[%s374 + $0x34] sm:$0xf] %v783
          %816 = vst [vmem:[%s374 + $0x38] sm:$0xf] %v784
          %817 = vst [vmem:[%s374 + $0x3c] sm:$0xf] %v785
        $region81: #{lightgcn_forward.6} parent=68 // pred_fallthru
          _
        %s818 = smul.u32 16, %s20
        %p819 = scmp.lt.s32.totalorder %s818, 31
        %s820 = scalar_select %p819, %s818, 31
        %s821 = smul.addr %s820, 8
        %s822 = scalar_lea.vmem %s3, %s821
        %s823 = smul.u32 16, %s20
        %p824 = scmp.lt.s32.totalorder %s823, 31
        %s825 = scalar_select %p824, %s823, 31
        %s826 = smul.addr %s825, 4
        %s827 = scalar_lea.vmem %s4, %s826
        // Predicated region
        $region82: #{lightgcn_forward.6} parent=68 // pred_check
          %p828 = pneg %p126
        $region83: #{lightgcn_forward.6} parent=68 // pred_check_branch
          %830 = sbr.rel (%p828) target = $region85
        $region84: #{lightgcn_forward.6} parent=68 // pred_region
          %s831 = smul.u32 16, %s20
        $region85: #{lightgcn_forward.6} parent=68 // pred_fallthru
          _
        // Predicated region
        $region86: #{lightgcn_forward.6} parent=68 // pred_check
          %p832 = pneg %p152
        $region87: #{lightgcn_forward.6} parent=68 // pred_check_branch
          %834 = sbr.rel (%p832) target = $region89
        $region88: #{lightgcn_forward.6} parent=68 // pred_region
          %s835 = smul.u32 16, %s20
        $region89: #{lightgcn_forward.6} parent=68 // pred_fallthru
          _
      $region69: #{lightgcn_forward.6} parent=5 // pred_fallthru
        _
      %p836 = scmp.le.s32.totalorder 2, %s11
      // Predicated region
      $region90: #{lightgcn_forward.6} parent=5 // pred_check
        %p837 = pneg %p836
      $region91: #{lightgcn_forward.6} parent=5 // pred_check_branch
        %839 = sbr.rel (%p837) target = $region93
      $region92: #{lightgcn_forward.6} parent=5 // pred_region
        %s840 = ssub.s32 %s11, 2
        // Predicated region
        $region94: #{lightgcn_forward.6} parent=92 // pred_check
          %p841 = pneg %p132
        $region95: #{lightgcn_forward.6} parent=92 // pred_check_branch
          %843 = sbr.rel (%p841) target = $region97
        $region96: #{lightgcn_forward.6} parent=92 // pred_region
          %s844 = smul.u32 16, %s22
          %p845 = scmp.lt.s32.totalorder %s844, 31
          %s846 = scalar_select %p845, %s844, 31
          %s847 = smul.addr %s846, 8
          %s848 = scalar_lea.vmem %s3, %s847
        $region97: #{lightgcn_forward.6} parent=92 // pred_fallthru
          _
        // Predicated region
        $region98: #{lightgcn_forward.6} parent=92 // pred_check
          %p849 = pneg %p158
        $region99: #{lightgcn_forward.6} parent=92 // pred_check_branch
          %851 = sbr.rel (%p849) target = $region101
        $region100: #{lightgcn_forward.6} parent=92 // pred_region
          %s852 = smul.u32 16, %s22
          %p853 = scmp.lt.s32.totalorder %s852, 31
          %s854 = scalar_select %p853, %s852, 31
          %s855 = smul.addr %s854, 4
          %s856 = scalar_lea.vmem %s4, %s855
        $region101: #{lightgcn_forward.6} parent=92 // pred_fallthru
          _
      $region93: #{lightgcn_forward.6} parent=5 // pred_fallthru
        _
    $region6: #{lightgcn_forward.6} parent=1 // loop_footer
      %s15 = sadd.s32 1, %s11
    $region7: #{lightgcn_forward.6} parent=1 // loop_footer_branch
      %10 = sbr.rel target = $region3
    $region8: #{lightgcn_forward.6} parent=1 // loop_exit
      _

// kernel: lightgcn_forward.7
$region0: #{lightgcn_forward.7}
  #allocation0 [shape = 'u32[]', space=smem, size = 0x4, offset = 0x4, fixed_abs, tag = 'smem constant byte address 0x4 - core index']
  #allocation1 [shape = 'u32[144,128]{1,0:T(1,128)}', space=vmem, size = 0x12000, scoped, tag = 'internal scratch']
  #allocation2 [shape = 'f32[128,128]{1,0:T(8,128)}', space=vmem, size = 0x10000, scoped, tag = 'scratch operand']
  %s0 = inlined_call_operand.vmem [shape: bf16[256,256], index: 0, kind: input, shape index: {}]
  %s1 = inlined_call_operand.vmem [shape: bf16[256,128], index: 1, kind: input, shape index: {}]
  %s2 = inlined_call_operand.vmem [shape: f32[256,128], index: 2, kind: input, shape index: {}, may-alias: {2,3}]
  %s3 = inlined_call_operand.vmem [shape: f32[256,128], index: 3, kind: output, shape index: {0}, may-alias: {2,3}]
  %s4 = inlined_call_operand.vmem [shape: bf16[256,128], index: 4, kind: output, shape index: {1}]
  %5 = xla_tuple %s3, %s4
  %s6 = sld [smem:[#allocation0]]
  $region102: #{lightgcn_forward.7} parent=0
    _
  %s8 = ssub.s32 1, %s6
  %s9 = scalar_select 0, %s8, %s6
  $region1: #{lightgcn_forward.7} parent=0
    #allocation3 [shape = 'u8[65536]{0}', space=vmem, size = 0x10000, scoped, tag = 'input window, operand 0']
    loop: start=0, step=1, limit=6
    $region2: #{lightgcn_forward.7} parent=1 // loop_pre_header
      _
    $region3: #{lightgcn_forward.7} parent=1 // loop_header
      %s11 = sphi 0, %s15
      %p12 = scmp.ge.s32.totalorder %s11, 6
      %s18 = sphi 0, %s30
      %s19 = sphi 0, %s26
      %s20 = sphi 0, %s18
      %s21 = sphi 0, %s19
      %s22 = sphi 0, %s20
      %s23 = sphi 0, %s21
      %s35 = sphi 0, %s37
      %s38 = sphi 0, %s35
      %s39 = sphi 0, %s38
      %s55 = sphi 0, %s39
      %s61 = sphi 0, %s63
      %s64 = sphi 0, %s61
      %s65 = sphi 0, %s64
      %s81 = sphi 0, %s65
      %s87 = sphi 0, %s89
      %s90 = sphi 0, %s87
      %s91 = sphi 0, %s90
      %s107 = sphi 0, %s91
      %s113 = sphi 0, %s115
      %s116 = sphi 0, %s113
      %s117 = sphi 0, %s116
      %s133 = sphi 0, %s117
      %s139 = sphi 0, %s141
      %s142 = sphi 0, %s139
      %s143 = sphi 0, %s142
      %s159 = sphi 0, %s143
    $region4: #{lightgcn_forward.7} parent=1 // loop_header_branch
      %14 = sbr.rel (%p12) target = $region8
    $region5: #{lightgcn_forward.7} parent=1 // loop_body
      %s16 = ssub.s32 %s11, 1
      %s17 = ssub.s32 %s11, 2
      %s24 = sadd.s32 1, %s19
      %p25 = scmp.ge.s32.totalorder %s24, 2
      %s26 = scalar_select %p25, 0, %s24
      %s27 = sadd.s32 1, %s18
      %s28 = scalar_select %p25, %s27, %s18
      %p29 = scmp.ge.s32.totalorder %s28, 2
      %s30 = scalar_select %p29, 0, %s28
      %s31 = ssub.s32 %s19, %s26
      %s32 = ssub.s32 %s18, %s30
      %s33 = sor.u32 %s31, %s32
      %p34 = scmp.eq.s32.totalorder %s33, 0
      %s36 = sadd.s32 %s35, 1
      %s37 = scalar_select %p34, %s35, %s36
      %p40 = pneg %p34
      %p41 = scmp.eq.s32.totalorder %s11, 3
      %p42 = por %p40, %p41
      %p43 = scmp.ne.s32.totalorder %s35, %s38
      %p44 = scmp.eq.s32.totalorder %s11, 0
      %p45 = por %p43, %p44
      %p46 = scmp.ne.s32.totalorder %s35, %s38
      %p47 = scmp.eq.s32.totalorder %s16, 3
      %p48 = por %p46, %p47
      %p49 = scmp.ne.s32.totalorder %s38, %s39
      %p50 = scmp.eq.s32.totalorder %s16, 0
      %p51 = por %p49, %p50
      %p52 = scmp.ne.s32.totalorder %s38, %s39
      %p53 = scmp.eq.s32.totalorder %s17, 3
      %p54 = por %p52, %p53
      %p56 = scmp.ne.s32.totalorder %s39, %s55
      %p57 = scmp.eq.s32.totalorder %s17, 0
      %p58 = por %p56, %p57
      %s59 = ssub.s32 %s19, %s26
      %p60 = scmp.eq.s32.totalorder %s59, 0
      %s62 = sadd.s32 %s61, 1
      %s63 = scalar_select %p60, %s61, %s62
      %p66 = pneg %p60
      %p67 = scmp.eq.s32.totalorder %s11, 3
      %p68 = por %p66, %p67
      %p69 = scmp.ne.s32.totalorder %s61, %s64
      %p70 = scmp.eq.s32.totalorder %s11, 0
      %p71 = por %p69, %p70
      %p72 = scmp.ne.s32.totalorder %s61, %s64
      %p73 = scmp.eq.s32.totalorder %s16, 3
      %p74 = por %p72, %p73
      %p75 = scmp.ne.s32.totalorder %s64, %s65
      %p76 = scmp.eq.s32.totalorder %s16, 0
      %p77 = por %p75, %p76
      %p78 = scmp.ne.s32.totalorder %s64, %s65
      %p79 = scmp.eq.s32.totalorder %s17, 3
      %p80 = por %p78, %p79
      %p82 = scmp.ne.s32.totalorder %s65, %s81
      %p83 = scmp.eq.s32.totalorder %s17, 0
      %p84 = por %p82, %p83
      %s85 = ssub.s32 %s18, %s30
      %p86 = scmp.eq.s32.totalorder %s85, 0
      %s88 = sadd.s32 %s87, 1
      %s89 = scalar_select %p86, %s87, %s88
      %p92 = pneg %p86
      %p93 = scmp.eq.s32.totalorder %s11, 3
      %p94 = por %p92, %p93
      %p95 = scmp.ne.s32.totalorder %s87, %s90
      %p96 = scmp.eq.s32.totalorder %s11, 0
      %p97 = por %p95, %p96
      %p98 = scmp.ne.s32.totalorder %s87, %s90
      %p99 = scmp.eq.s32.totalorder %s16, 3
      %p100 = por %p98, %p99
      %p101 = scmp.ne.s32.totalorder %s90, %s91
      %p102 = scmp.eq.s32.totalorder %s16, 0
      %p103 = por %p101, %p102
      %p104 = scmp.ne.s32.totalorder %s90, %s91
      %p105 = scmp.eq.s32.totalorder %s17, 3
      %p106 = por %p104, %p105
      %p108 = scmp.ne.s32.totalorder %s91, %s107
      %p109 = scmp.eq.s32.totalorder %s17, 0
      %p110 = por %p108, %p109
      %s111 = ssub.s32 %s18, %s30
      %p112 = scmp.eq.s32.totalorder %s111, 0
      %s114 = sadd.s32 %s113, 1
      %s115 = scalar_select %p112, %s113, %s114
      %p118 = pneg %p112
      %p119 = scmp.eq.s32.totalorder %s11, 3
      %p120 = por %p118, %p119
      %p121 = scmp.ne.s32.totalorder %s113, %s116
      %p122 = scmp.eq.s32.totalorder %s11, 0
      %p123 = por %p121, %p122
      %p124 = scmp.ne.s32.totalorder %s113, %s116
      %p125 = scmp.eq.s32.totalorder %s16, 3
      %p126 = por %p124, %p125
      %p127 = scmp.ne.s32.totalorder %s116, %s117
      %p128 = scmp.eq.s32.totalorder %s16, 0
      %p129 = por %p127, %p128
      %p130 = scmp.ne.s32.totalorder %s116, %s117
      %p131 = scmp.eq.s32.totalorder %s17, 3
      %p132 = por %p130, %p131
      %p134 = scmp.ne.s32.totalorder %s117, %s133
      %p135 = scmp.eq.s32.totalorder %s17, 0
      %p136 = por %p134, %p135
      %s137 = ssub.s32 %s18, %s30
      %p138 = scmp.eq.s32.totalorder %s137, 0
      %s140 = sadd.s32 %s139, 1
      %s141 = scalar_select %p138, %s139, %s140
      %p144 = pneg %p138
      %p145 = scmp.eq.s32.totalorder %s11, 3
      %p146 = por %p144, %p145
      %p147 = scmp.ne.s32.totalorder %s139, %s142
      %p148 = scmp.eq.s32.totalorder %s11, 0
      %p149 = por %p147, %p148
      %p150 = scmp.ne.s32.totalorder %s139, %s142
      %p151 = scmp.eq.s32.totalorder %s16, 3
      %p152 = por %p150, %p151
      %p153 = scmp.ne.s32.totalorder %s142, %s143
      %p154 = scmp.eq.s32.totalorder %s16, 0
      %p155 = por %p153, %p154
      %p156 = scmp.ne.s32.totalorder %s142, %s143
      %p157 = scmp.eq.s32.totalorder %s17, 3
      %p158 = por %p156, %p157
      %p160 = scmp.ne.s32.totalorder %s143, %s159
      %p161 = scmp.eq.s32.totalorder %s17, 0
      %p162 = por %p160, %p161
      %p163 = scmp.le.s32.totalorder 1, %s11
      %p164 = scmp.lt.s32.totalorder %s11, 5
      %p165 = pnand %p163, %p164
      %p166 = pneg %p165
      // Predicated region
      $region9: #{lightgcn_forward.7} parent=5 // pred_check
        _
      $region10: #{lightgcn_forward.7} parent=5 // pred_check_branch
        %168 = sbr.rel (%p165) target = $region12
      $region11: #{lightgcn_forward.7} parent=5 // pred_region
        %s169 = ssub.s32 %s11, 1
      $region12: #{lightgcn_forward.7} parent=5 // pred_fallthru
        _
      %p170 = scmp.lt.s32.totalorder %s11, 4
      // Predicated region
      $region13: #{lightgcn_forward.7} parent=5 // pred_check
        %p171 = pneg %p170
      $region14: #{lightgcn_forward.7} parent=5 // pred_check_branch
        %173 = sbr.rel (%p171) target = $region16
      $region15: #{lightgcn_forward.7} parent=5 // pred_region
        // Predicated region
        $region17: #{lightgcn_forward.7} parent=15 // pred_check
          %p174 = pneg %p45
        $region18: #{lightgcn_forward.7} parent=15 // pred_check_branch
          %176 = sbr.rel (%p174) target = $region20
        $region19: #{lightgcn_forward.7} parent=15 // pred_region
          %s177 = sand.u32 %s35, 1
          %s178 = sand.u32 %s35, 1
          %s179 = smul.addr %s178, 64
          %s180 = scalar_lea.vmem [#allocation3], %s179
          %s181 = smul.u32 16, %s19
          %s182 = smul.addr %s181, 2
          %s183 = sadd.s32 %s18, %s182
          %s184 = smul.addr %s183, 4
          %s185 = scalar_lea.vmem %s0, %s184
          // Predicated region
          $region21: #{lightgcn_forward.7} parent=19 // pred_check
            _
          $region22: #{lightgcn_forward.7} parent=19 // pred_check_branch
            %187 = sbr.rel (0) target = $region24
          $region23: #{lightgcn_forward.7} parent=19 // pred_region
            // Predicated region
            $region25: #{lightgcn_forward.7} parent=23 // pred_check
              _
            $region26: #{lightgcn_forward.7} parent=23 // pred_check_branch
              %189 = sbr.rel target = $region28
            $region27: #{lightgcn_forward.7} parent=23 // pred_region
              // Predicated region
              $region40: #{lightgcn_forward.7} parent=27 // pred_check
                _
              $region41: #{lightgcn_forward.7} parent=27 // pred_check_branch
                %234 = sbr.rel (0) target = $region43
              $region42: #{lightgcn_forward.7} parent=27 // pred_region
                loop: start=0, step=1, limit=1
                $region44: #{lightgcn_forward.7} parent=42 // loop_pre_header
                  _
                $region45: #{lightgcn_forward.7} parent=42 // loop_header
                  %s236 = sphi 0, %s240
                  %p237 = scmp.ge.s32.totalorder %s236, 1
                  %s241 = sphi %s185, %s185
                  %s242 = sphi %s180, %s180
                $region46: #{lightgcn_forward.7} parent=42 // loop_header_branch
                  %239 = sbr.rel (%p237) target = $region50
                $region47: #{lightgcn_forward.7} parent=42 // loop_body
                  _
                $region48: #{lightgcn_forward.7} parent=42 // loop_footer
                  %s240 = sadd.s32 1, %s236
                $region49: #{lightgcn_forward.7} parent=42 // loop_footer_branch
                  %235 = sbr.rel target = $region45
                $region50: #{lightgcn_forward.7} parent=42 // loop_exit
                  _
                loop: start=0, step=1, limit=1
                $region51: #{lightgcn_forward.7} parent=42 // loop_pre_header
                  _
                $region52: #{lightgcn_forward.7} parent=42 // loop_header
                  %s245 = sphi 0, %s249
                  %p246 = scmp.ge.s32.totalorder %s245, 1
                  %s250 = sphi %s185, %s185
                  %s251 = sphi %s180, %s180
                $region53: #{lightgcn_forward.7} parent=42 // loop_header_branch
                  %248 = sbr.rel (%p246) target = $region57
                $region54: #{lightgcn_forward.7} parent=42 // loop_body
                  %v252 = vld [vmem:[%s250] sm:$0xf]
                  %253 = vst [vmem:[%s251] sm:$0xf] %v252
                  %v254 = vld [vmem:[%s250 + $0x8] sm:$0xf]
                  %255 = vst [vmem:[%s251 + $0x4] sm:$0xf] %v254
                  %v256 = vld [vmem:[%s250 + $0x10] sm:$0xf]
                  %257 = vst [vmem:[%s251 + $0x8] sm:$0xf] %v256
                  %v258 = vld [vmem:[%s250 + $0x18] sm:$0xf]
                  %259 = vst [vmem:[%s251 + $0xc] sm:$0xf] %v258
                  %v260 = vld [vmem:[%s250 + $0x20] sm:$0xf]
                  %261 = vst [vmem:[%s251 + $0x10] sm:$0xf] %v260
                  %v262 = vld [vmem:[%s250 + $0x28] sm:$0xf]
                  %263 = vst [vmem:[%s251 + $0x14] sm:$0xf] %v262
                  %v264 = vld [vmem:[%s250 + $0x30] sm:$0xf]
                  %265 = vst [vmem:[%s251 + $0x18] sm:$0xf] %v264
                  %v266 = vld [vmem:[%s250 + $0x38] sm:$0xf]
                  %267 = vst [vmem:[%s251 + $0x1c] sm:$0xf] %v266
                  %v268 = vld [vmem:[%s250 + $0x40] sm:$0xf]
                  %269 = vst [vmem:[%s251 + $0x20] sm:$0xf] %v268
                  %v270 = vld [vmem:[%s250 + $0x48] sm:$0xf]
                  %271 = vst [vmem:[%s251 + $0x24] sm:$0xf] %v270
                  %v272 = vld [vmem:[%s250 + $0x50] sm:$0xf]
                  %273 = vst [vmem:[%s251 + $0x28] sm:$0xf] %v272
                  %v274 = vld [vmem:[%s250 + $0x58] sm:$0xf]
                  %275 = vst [vmem:[%s251 + $0x2c] sm:$0xf] %v274
                  %v276 = vld [vmem:[%s250 + $0x60] sm:$0xf]
                  %277 = vst [vmem:[%s251 + $0x30] sm:$0xf] %v276
                  %v278 = vld [vmem:[%s250 + $0x68] sm:$0xf]
                  %279 = vst [vmem:[%s251 + $0x34] sm:$0xf] %v278
                  %v280 = vld [vmem:[%s250 + $0x70] sm:$0xf]
                  %281 = vst [vmem:[%s251 + $0x38] sm:$0xf] %v280
                  %v282 = vld [vmem:[%s250 + $0x78] sm:$0xf]
                  %283 = vst [vmem:[%s251 + $0x3c] sm:$0xf] %v282
                $region55: #{lightgcn_forward.7} parent=42 // loop_footer
                  %s249 = sadd.s32 1, %s245
                $region56: #{lightgcn_forward.7} parent=42 // loop_footer_branch
                  %244 = sbr.rel target = $region52
                $region57: #{lightgcn_forward.7} parent=42 // loop_exit
                  _
              $region43: #{lightgcn_forward.7} parent=27 // pred_fallthru
                _
            $region28: #{lightgcn_forward.7} parent=23 // pred_fallthru
              _
            // Predicated region
            $region29: #{lightgcn_forward.7} parent=23 // pred_check
              _
            $region30: #{lightgcn_forward.7} parent=23 // pred_check_branch
              %191 = sbr.rel (0) target = $region32
            $region31: #{lightgcn_forward.7} parent=23 // pred_region
              loop: start=0, step=1, limit=1
              $region33: #{lightgcn_forward.7} parent=31 // loop_pre_header
                _
              $region34: #{lightgcn_forward.7} parent=31 // loop_header
                %s194 = sphi 0, %s198
                %p195 = scmp.ge.s32.totalorder %s194, 1
                %s199 = sphi %s185, %s185
                %s200 = sphi %s180, %s180
              $region35: #{lightgcn_forward.7} parent=31 // loop_header_branch
                %197 = sbr.rel (%p195) target = $region39
              $region36: #{lightgcn_forward.7} parent=31 // loop_body
                %v201 = vld [vmem:[%s199] sm:$0xf]
                %202 = vst [vmem:[%s200] sm:$0xf] %v201
                %v203 = vld [vmem:[%s199 + $0x8] sm:$0xf]
                %204 = vst [vmem:[%s200 + $0x4] sm:$0xf] %v203
                %v205 = vld [vmem:[%s199 + $0x10] sm:$0xf]
                %206 = vst [vmem:[%s200 + $0x8] sm:$0xf] %v205
                %v207 = vld [vmem:[%s199 + $0x18] sm:$0xf]
                %208 = vst [vmem:[%s200 + $0xc] sm:$0xf] %v207
                %v209 = vld [vmem:[%s199 + $0x20] sm:$0xf]
                %210 = vst [vmem:[%s200 + $0x10] sm:$0xf] %v209
                %v211 = vld [vmem:[%s199 + $0x28] sm:$0xf]
                %212 = vst [vmem:[%s200 + $0x14] sm:$0xf] %v211
                %v213 = vld [vmem:[%s199 + $0x30] sm:$0xf]
                %214 = vst [vmem:[%s200 + $0x18] sm:$0xf] %v213
                %v215 = vld [vmem:[%s199 + $0x38] sm:$0xf]
                %216 = vst [vmem:[%s200 + $0x1c] sm:$0xf] %v215
                %v217 = vld [vmem:[%s199 + $0x40] sm:$0xf]
                %218 = vst [vmem:[%s200 + $0x20] sm:$0xf] %v217
                %v219 = vld [vmem:[%s199 + $0x48] sm:$0xf]
                %220 = vst [vmem:[%s200 + $0x24] sm:$0xf] %v219
                %v221 = vld [vmem:[%s199 + $0x50] sm:$0xf]
                %222 = vst [vmem:[%s200 + $0x28] sm:$0xf] %v221
                %v223 = vld [vmem:[%s199 + $0x58] sm:$0xf]
                %224 = vst [vmem:[%s200 + $0x2c] sm:$0xf] %v223
                %v225 = vld [vmem:[%s199 + $0x60] sm:$0xf]
                %226 = vst [vmem:[%s200 + $0x30] sm:$0xf] %v225
                %v227 = vld [vmem:[%s199 + $0x68] sm:$0xf]
                %228 = vst [vmem:[%s200 + $0x34] sm:$0xf] %v227
                %v229 = vld [vmem:[%s199 + $0x70] sm:$0xf]
                %230 = vst [vmem:[%s200 + $0x38] sm:$0xf] %v229
                %v231 = vld [vmem:[%s199 + $0x78] sm:$0xf]
                %232 = vst [vmem:[%s200 + $0x3c] sm:$0xf] %v231
              $region37: #{lightgcn_forward.7} parent=31 // loop_footer
                %s198 = sadd.s32 1, %s194
              $region38: #{lightgcn_forward.7} parent=31 // loop_footer_branch
                %193 = sbr.rel target = $region34
              $region39: #{lightgcn_forward.7} parent=31 // loop_exit
                _
            $region32: #{lightgcn_forward.7} parent=23 // pred_fallthru
              _
          $region24: #{lightgcn_forward.7} parent=19 // pred_fallthru
            _
          %284 = vnop
        $region20: #{lightgcn_forward.7} parent=15 // pred_fallthru
          _
        // Predicated region
        $region58: #{lightgcn_forward.7} parent=15 // pred_check
          %p285 = pneg %p71
        $region59: #{lightgcn_forward.7} parent=15 // pred_check_branch
          %287 = sbr.rel (%p285) target = $region61
        $region60: #{lightgcn_forward.7} parent=15 // pred_region
          %s288 = smul.u32 16, %s19
          %p289 = scmp.lt.s32.totalorder %s288, 31
          %s290 = scalar_select %p289, %s288, 31
          %s291 = smul.addr %s290, 4
          %s292 = scalar_lea.vmem %s1, %s291
          %s293 = smul.u32 16, %s19
        $region61: #{lightgcn_forward.7} parent=15 // pred_fallthru
          _
        // Predicated region
        $region62: #{lightgcn_forward.7} parent=15 // pred_check
          %p294 = pneg %p97
        $region63: #{lightgcn_forward.7} parent=15 // pred_check_branch
          %296 = sbr.rel (%p294) target = $region65
        $region64: #{lightgcn_forward.7} parent=15 // pred_region
          %s297 = smul.u32 16, %s18
          %p298 = scmp.lt.s32.totalorder %s297, 31
          %s299 = scalar_select %p298, %s297, 31
          %s300 = smul.addr %s299, 8
          %s301 = scalar_lea.vmem %s2, %s300
          %s302 = smul.u32 16, %s18
        $region65: #{lightgcn_forward.7} parent=15 // pred_fallthru
          _
      $region16: #{lightgcn_forward.7} parent=5 // pred_fallthru
        _
      %p303 = scmp.le.s32.totalorder 1, %s11
      %p304 = scmp.lt.s32.totalorder %s11, 5
      %p305 = pnand %p303, %p304
      %p306 = pneg %p305
      // Predicated region
      $region66: #{lightgcn_forward.7} parent=5 // pred_check
        _
      $region67: #{lightgcn_forward.7} parent=5 // pred_check_branch
        %308 = sbr.rel (%p305) target = $region69
      $region68: #{lightgcn_forward.7} parent=5 // pred_region
        %s309 = ssub.s32 %s11, 1
        %s310 = sand.u32 %s38, 1
        %s311 = sand.u32 %s38, 1
        %s312 = smul.addr %s311, 64
        %s313 = scalar_lea.vmem [#allocation3], %s312
        // Predicated region
        $region70: #{lightgcn_forward.7} parent=68 // pred_check
          %p314 = pneg %p51
        $region71: #{lightgcn_forward.7} parent=68 // pred_check_branch
          %316 = sbr.rel (%p314) target = $region73
        $region72: #{lightgcn_forward.7} parent=68 // pred_region
          _
        $region73: #{lightgcn_forward.7} parent=68 // pred_fallthru
          _
        %s317 = sand.u32 %s38, 1
        %s318 = sand.u32 %s38, 1
        %s319 = smul.addr %s318, 64
        %s320 = scalar_lea.vmem [#allocation3], %s319
        %p321 = pneg %p51
        %p322 = pneg %p48
        %s323 = smul.u32 16, %s21
        %p324 = scmp.lt.s32.totalorder %s323, 31
        %s325 = scalar_select %p324, %s323, 31
        %s326 = smul.addr %s325, 4
        %s327 = scalar_lea.vmem %s1, %s326
        %p328 = pneg %p77
        %p329 = pneg %p74
        %s330 = smul.u32 16, %s20
        %p331 = scmp.lt.s32.totalorder %s330, 31
        %s332 = scalar_select %p331, %s330, 31
        %s333 = smul.addr %s332, 8
        %s334 = scalar_lea.vmem %s2, %s333
        %p335 = pneg %p103
        %p336 = pneg %p100
        %p337 = pneg %p129
        %p338 = pneg %p126
        %s339 = smul.u32 16, %s20
        %p340 = scmp.lt.s32.totalorder %s339, 31
        %s341 = scalar_select %p340, %s339, 31
        %s342 = smul.addr %s341, 8
        %s343 = scalar_lea.vmem %s3, %s342
        %p344 = pneg %p155
        %p345 = pneg %p152
        %s346 = smul.u32 16, %s20
        %p347 = scmp.lt.s32.totalorder %s346, 31
        %s348 = scalar_select %p347, %s346, 31
        %s349 = smul.addr %s348, 4
        %s350 = scalar_lea.vmem %s4, %s349
        %s351 = smul.u32 16, %s21
        %s352 = smul.u32 16, %s21
        %p353 = scmp.lt.s32.totalorder %s352, 31
        %s354 = scalar_select %p353, %s352, 31
        %s355 = smul.addr %s354, 4
        %s356 = scalar_lea.vmem %s1, %s355
        %s357 = smul.u32 16, %s21
        %s358 = smul.u32 16, %s20
        %p359 = scmp.lt.s32.totalorder %s358, 31
        %s360 = scalar_select %p359, %s358, 31
        %s361 = smul.addr %s360, 8
        %s362 = scalar_lea.vmem %s2, %s361
        %s363 = smul.u32 16, %s20
        %s364 = smul.u32 16, %s20
        %p365 = scmp.lt.s32.totalorder %s364, 31
        %s366 = scalar_select %p365, %s364, 31
        %s367 = smul.addr %s366, 8
        %s368 = scalar_lea.vmem %s3, %s367
        %s369 = smul.u32 16, %s20
        %s370 = smul.u32 16, %s20
        %p371 = scmp.lt.s32.totalorder %s370, 31
        %s372 = scalar_select %p371, %s370, 31
        %s373 = smul.addr %s372, 4
        %s374 = scalar_lea.vmem %s4, %s373
        %s375 = smul.u32 16, %s20
        %p377 = scmp.eq.s32.totalorder %s21, 0
        // Predicated region
        $region74: #{lightgcn_forward.7} parent=68 // pred_check
          %p378 = pneg %p377
        $region75: #{lightgcn_forward.7} parent=68 // pred_check_branch
          %380 = sbr.rel (%p378) target = $region77
        $region76: #{lightgcn_forward.7} parent=68 // pred_region
          %381 = vst [vmem:[#allocation2] sm:$0xff] 0.0
          %382 = vst [vmem:[#allocation2 + $0x8] sm:$0xff] 0.0
          %383 = vst [vmem:[#allocation2 + $0x10] sm:$0xff] 0.0
          %384 = vst [vmem:[#allocation2 + $0x18] sm:$0xff] 0.0
          %385 = vst [vmem:[#allocation2 + $0x20] sm:$0xff] 0.0
          %386 = vst [vmem:[#allocation2 + $0x28] sm:$0xff] 0.0
          %387 = vst [vmem:[#allocation2 + $0x30] sm:$0xff] 0.0
          %388 = vst [vmem:[#allocation2 + $0x38] sm:$0xff] 0.0
          %389 = vst [vmem:[#allocation2 + $0x40] sm:$0xff] 0.0
          %390 = vst [vmem:[#allocation2 + $0x48] sm:$0xff] 0.0
          %391 = vst [vmem:[#allocation2 + $0x50] sm:$0xff] 0.0
          %392 = vst [vmem:[#allocation2 + $0x58] sm:$0xff] 0.0
          %393 = vst [vmem:[#allocation2 + $0x60] sm:$0xff] 0.0
          %394 = vst [vmem:[#allocation2 + $0x68] sm:$0xff] 0.0
          %395 = vst [vmem:[#allocation2 + $0x70] sm:$0xff] 0.0
          %396 = vst [vmem:[#allocation2 + $0x78] sm:$0xff] 0.0
        $region77: #{lightgcn_forward.7} parent=68 // pred_fallthru
          _
        %v397 = vld [vmem:[%s313] sm:$0xf]
        %v398 = vld [vmem:[%s313 + $0x4] sm:$0xf]
        %v399 = vld [vmem:[%s313 + $0x8] sm:$0xf]
        %v400 = vld [vmem:[%s313 + $0xc] sm:$0xf]
        %v401 = vld [vmem:[%s313 + $0x10] sm:$0xf]
        %v402 = vld [vmem:[%s313 + $0x14] sm:$0xf]
        %v403 = vld [vmem:[%s313 + $0x18] sm:$0xf]
        %v404 = vld [vmem:[%s313 + $0x1c] sm:$0xf]
        %v405 = vld [vmem:[%s313 + $0x20] sm:$0xf]
        %v406 = vld [vmem:[%s313 + $0x24] sm:$0xf]
        %v407 = vld [vmem:[%s313 + $0x28] sm:$0xf]
        %v408 = vld [vmem:[%s313 + $0x2c] sm:$0xf]
        %v409 = vld [vmem:[%s313 + $0x30] sm:$0xf]
        %v410 = vld [vmem:[%s313 + $0x34] sm:$0xf]
        %v411 = vld [vmem:[%s313 + $0x38] sm:$0xf]
        %v412 = vld [vmem:[%s313 + $0x3c] sm:$0xf]
        %v413 = vld [vmem:[%s356] sm:$0xf]
        %v414 = vld [vmem:[%s356 + $0x4] sm:$0xf]
        %v415 = vld [vmem:[%s356 + $0x8] sm:$0xf]
        %v416 = vld [vmem:[%s356 + $0xc] sm:$0xf]
        %v417 = vld [vmem:[%s356 + $0x10] sm:$0xf]
        %v418 = vld [vmem:[%s356 + $0x14] sm:$0xf]
        %v419 = vld [vmem:[%s356 + $0x18] sm:$0xf]
        %v420 = vld [vmem:[%s356 + $0x1c] sm:$0xf]
        %v421 = vld [vmem:[%s356 + $0x20] sm:$0xf]
        %v422 = vld [vmem:[%s356 + $0x24] sm:$0xf]
        %v423 = vld [vmem:[%s356 + $0x28] sm:$0xf]
        %v424 = vld [vmem:[%s356 + $0x2c] sm:$0xf]
        %v425 = vld [vmem:[%s356 + $0x30] sm:$0xf]
        %v426 = vld [vmem:[%s356 + $0x34] sm:$0xf]
        %v427 = vld [vmem:[%s356 + $0x38] sm:$0xf]
        %v428 = vld [vmem:[%s356 + $0x3c] sm:$0xf]
        %v445 = vunpack.c.l.b16 %v397
        %v446 = vunpack.c.l.b16 %v398
        %v447 = vunpack.c.l.b16 %v399
        %v448 = vunpack.c.l.b16 %v400
        %v449 = vunpack.c.l.b16 %v401
        %v450 = vunpack.c.l.b16 %v402
        %v451 = vunpack.c.l.b16 %v403
        %v452 = vunpack.c.l.b16 %v404
        %v453 = vunpack.c.l.b16 %v405
        %v454 = vunpack.c.l.b16 %v406
        %v455 = vunpack.c.l.b16 %v407
        %v456 = vunpack.c.l.b16 %v408
        %v457 = vunpack.c.l.b16 %v409
        %v458 = vunpack.c.l.b16 %v410
        %v459 = vunpack.c.l.b16 %v411
        %v460 = vunpack.c.l.b16 %v412
        %v461 = vpack.c.b16 %v446, %v445
        %v462 = vpack.c.b16 %v448, %v447
        %v463 = vpack.c.b16 %v450, %v449
        %v464 = vpack.c.b16 %v452, %v451
        %v465 = vpack.c.b16 %v454, %v453
        %v466 = vpack.c.b16 %v456, %v455
        %v467 = vpack.c.b16 %v458, %v457
        %v468 = vpack.c.b16 %v460, %v459
        %477 = vxpose.xlu0.c.b16.start [1/8] %v461, 128
        %478 = vxpose.xlu0.c.b16.cont [2/8] %v462, 128
        %479 = vxpose.xlu0.c.b16.cont [3/8] %v463, 128
        %480 = vxpose.xlu0.c.b16.cont [4/8] %v464, 128
        %481 = vxpose.xlu0.c.b16.cont [5/8] %v465, 128
        %482 = vxpose.xlu0.c.b16.cont [6/8] %v466, 128
        %483 = vxpose.xlu0.c.b16.cont [7/8] %v467, 128
        %484 = vxpose.xlu0.c.b16.end [8/8] %v468, 128
        %v485 = vpop.trf.xlu0
        %v486 = vpop.trf.xlu0
        %v487 = vpop.trf.xlu0
        %v488 = vpop.trf.xlu0
        %v489 = vpop.trf.xlu0
        %v490 = vpop.trf.xlu0
        %v491 = vpop.trf.xlu0
        %v492 = vpop.trf.xlu0
        %v509 = vunpack.c.l.b16 %v413
        %v510 = vunpack.c.l.b16 %v414
        %v511 = vunpack.c.l.b16 %v415
        %v512 = vunpack.c.l.b16 %v416
        %v513 = vunpack.c.l.b16 %v417
        %v514 = vunpack.c.l.b16 %v418
        %v515 = vunpack.c.l.b16 %v419
        %v516 = vunpack.c.l.b16 %v420
        %v517 = vunpack.c.l.b16 %v421
        %v518 = vunpack.c.l.b16 %v422
        %v519 = vunpack.c.l.b16 %v423
        %v520 = vunpack.c.l.b16 %v424
        %v521 = vunpack.c.l.b16 %v425
        %v522 = vunpack.c.l.b16 %v426
        %v523 = vunpack.c.l.b16 %v427
        %v524 = vunpack.c.l.b16 %v428
        %v525 = vpack.c.b16 %v510, %v509
        %v526 = vpack.c.b16 %v512, %v511
        %v527 = vpack.c.b16 %v514, %v513
        %v528 = vpack.c.b16 %v516, %v515
        %v529 = vpack.c.b16 %v518, %v517
        %v530 = vpack.c.b16 %v520, %v519
        %v531 = vpack.c.b16 %v522, %v521
        %v532 = vpack.c.b16 %v524, %v523
        %541 = vmatprep.subr.bf16.mxu0 0
        %542 = vmatpush1.bf16.msra.mxu0 %v525
        %543 = vmatprep.subr.bf16.mxu0 0
        %544 = vmatpush1.bf16.msra.mxu0 %v526
        %545 = vmatprep.subr.bf16.mxu0 0
        %546 = vmatpush1.bf16.msra.mxu0 %v527
        %547 = vmatprep.subr.bf16.mxu0 0
        %548 = vmatpush1.bf16.msra.mxu0 %v528
        %549 = vmatprep.subr.bf16.mxu0 0
        %550 = vmatpush1.bf16.msra.mxu0 %v529
        %551 = vmatprep.subr.bf16.mxu0 0
        %552 = vmatpush1.bf16.msra.mxu0 %v530
        %553 = vmatprep.subr.bf16.mxu0 0
        %554 = vmatpush1.bf16.msra.mxu0 %v531
        %555 = vmatprep.subr.bf16.mxu0 0
        %556 = vmatpush1.bf16.msra.mxu0 %v532
        %557 = vmatprep.subr.bf16.mxu0 0
        %558 = vmatpush1.bf16.msra.mxu0 0
        %559 = vmatprep.subr.bf16.mxu0 0
        %560 = vmatpush1.bf16.msra.mxu0 0
        %561 = vmatprep.subr.bf16.mxu0 0
        %562 = vmatpush1.bf16.msra.mxu0 0
        %563 = vmatprep.subr.bf16.mxu0 0
        %564 = vmatpush1.bf16.msra.mxu0 0
        %565 = vmatprep.subr.bf16.mxu0 0
        %566 = vmatpush1.bf16.msra.mxu0 0
        %567 = vmatprep.subr.bf16.mxu0 0
        %568 = vmatpush1.bf16.msra.mxu0 0
        %569 = vmatprep.subr.bf16.mxu0 0
        %570 = vmatpush1.bf16.msra.mxu0 0
        %571 = vmatprep.subr.bf16.mxu0 0
        %572 = vmatpush1.bf16.msra.mxu0 0
        %573 = vmatprep.mubr.bf16.mxu0 0
        %574 = vmatmul.mubr.bf16.gmra.mrb[0].mxu0 %v485
        %v575 = vpop.f32.mrb[0].mxu0
        %v576 = vadd.f32 0.0, %v575
        %v577 = vpop.f32.mrb[0].mxu0
        %v578 = vpop.f32.mrb[0].mxu0
        %v579 = vadd.f32 0.0, %v578
        %v580 = vpop.f32.mrb[0].mxu0
        %581 = vmatprep.mubr.bf16.mxu0 0
        %582 = vmatmul.mubr.bf16.gmra.mrb[0].mxu0 %v486
        %v583 = vpop.f32.mrb[0].mxu0
        %v584 = vadd.f32 0.0, %v583
        %v585 = vpop.f32.mrb[0].mxu0
        %v586 = vpop.f32.mrb[0].mxu0
        %v587 = vadd.f32 0.0, %v586
        %v588 = vpop.f32.mrb[0].mxu0
        %589 = vmatprep.mubr.bf16.mxu0 0
        %590 = vmatmul.mubr.bf16.gmra.mrb[0].mxu0 %v487
        %v591 = vpop.f32.mrb[0].mxu0
        %v592 = vadd.f32 0.0, %v591
        %v593 = vpop.f32.mrb[0].mxu0
        %v594 = vpop.f32.mrb[0].mxu0
        %v595 = vadd.f32 0.0, %v594
        %v596 = vpop.f32.mrb[0].mxu0
        %597 = vmatprep.mubr.bf16.mxu0 0
        %598 = vmatmul.mubr.bf16.gmra.mrb[0].mxu0 %v488
        %v599 = vpop.f32.mrb[0].mxu0
        %v600 = vadd.f32 0.0, %v599
        %v601 = vpop.f32.mrb[0].mxu0
        %v602 = vpop.f32.mrb[0].mxu0
        %v603 = vadd.f32 0.0, %v602
        %v604 = vpop.f32.mrb[0].mxu0
        %605 = vmatprep.mubr.bf16.mxu0 0
        %606 = vmatmul.mubr.bf16.gmra.mrb[0].mxu0 %v489
        %v607 = vpop.f32.mrb[0].mxu0
        %v608 = vadd.f32 0.0, %v607
        %v609 = vpop.f32.mrb[0].mxu0
        %v610 = vpop.f32.mrb[0].mxu0
        %v611 = vadd.f32 0.0, %v610
        %v612 = vpop.f32.mrb[0].mxu0
        %613 = vmatprep.mubr.bf16.mxu0 0
        %614 = vmatmul.mubr.bf16.gmra.mrb[0].mxu0 %v490
        %v615 = vpop.f32.mrb[0].mxu0
        %v616 = vadd.f32 0.0, %v615
        %v617 = vpop.f32.mrb[0].mxu0
        %v618 = vpop.f32.mrb[0].mxu0
        %v619 = vadd.f32 0.0, %v618
        %v620 = vpop.f32.mrb[0].mxu0
        %621 = vmatprep.mubr.bf16.mxu0 0
        %622 = vmatmul.mubr.bf16.gmra.mrb[0].mxu0 %v491
        %v623 = vpop.f32.mrb[0].mxu0
        %v624 = vadd.f32 0.0, %v623
        %v625 = vpop.f32.mrb[0].mxu0
        %v626 = vpop.f32.mrb[0].mxu0
        %v627 = vadd.f32 0.0, %v626
        %v628 = vpop.f32.mrb[0].mxu0
        %629 = vmatprep.mubr.bf16.mxu0 0
        %630 = vmatmul.mubr.bf16.gmra.mrb[0].mxu0 %v492
        %v631 = vpop.f32.mrb[0].mxu0
        %v632 = vadd.f32 0.0, %v631
        %v633 = vpop.f32.mrb[0].mxu0
        %v634 = vpop.f32.mrb[0].mxu0
        %v635 = vadd.f32 0.0, %v634
        %v636 = vpop.f32.mrb[0].mxu0
        %637 = vdwg.mxu0
        %v638 = vld [vmem:[#allocation2] sm:$0xff]
        %v639 = vld [vmem:[#allocation2 + $0x8] sm:$0xff]
        %v640 = vld [vmem:[#allocation2 + $0x10] sm:$0xff]
        %v641 = vld [vmem:[#allocation2 + $0x18] sm:$0xff]
        %v642 = vld [vmem:[#allocation2 + $0x20] sm:$0xff]
        %v643 = vld [vmem:[#allocation2 + $0x28] sm:$0xff]
        %v644 = vld [vmem:[#allocation2 + $0x30] sm:$0xff]
        %v645 = vld [vmem:[#allocation2 + $0x38] sm:$0xff]
        %v646 = vld [vmem:[#allocation2 + $0x40] sm:$0xff]
        %v647 = vld [vmem:[#allocation2 + $0x48] sm:$0xff]
        %v648 = vld [vmem:[#allocation2 + $0x50] sm:$0xff]
        %v649 = vld [vmem:[#allocation2 + $0x58] sm:$0xff]
        %v650 = vld [vmem:[#allocation2 + $0x60] sm:$0xff]
        %v651 = vld [vmem:[#allocation2 + $0x68] sm:$0xff]
        %v652 = vld [vmem:[#allocation2 + $0x70] sm:$0xff]
        %v653 = vld [vmem:[#allocation2 + $0x78] sm:$0xff]
        %v654 = vadd.f32 %v638, %v576
        %v655 = vadd.f32 %v639, %v579
        %v656 = vadd.f32 %v640, %v584
        %v657 = vadd.f32 %v641, %v587
        %v658 = vadd.f32 %v642, %v592
        %v659 = vadd.f32 %v643, %v595
        %v660 = vadd.f32 %v644, %v600
        %v661 = vadd.f32 %v645, %v603
        %v662 = vadd.f32 %v646, %v608
        %v663 = vadd.f32 %v647, %v611
        %v664 = vadd.f32 %v648, %v616
        %v665 = vadd.f32 %v649, %v619
        %v666 = vadd.f32 %v650, %v624
        %v667 = vadd.f32 %v651, %v627
        %v668 = vadd.f32 %v652, %v632
        %v669 = vadd.f32 %v653, %v635
        %670 = vst [vmem:[#allocation2] sm:$0xff] %v654
        %671 = vst [vmem:[#allocation2 + $0x8] sm:$0xff] %v655
        %672 = vst [vmem:[#allocation2 + $0x10] sm:$0xff] %v656
        %673 = vst [vmem:[#allocation2 + $0x18] sm:$0xff] %v657
        %674 = vst [vmem:[#allocation2 + $0x20] sm:$0xff] %v658
        %675 = vst [vmem:[#allocation2 + $0x28] sm:$0xff] %v659
        %676 = vst [vmem:[#allocation2 + $0x30] sm:$0xff] %v660
        %677 = vst [vmem:[#allocation2 + $0x38] sm:$0xff] %v661
        %678 = vst [vmem:[#allocation2 + $0x40] sm:$0xff] %v662
        %679 = vst [vmem:[#allocation2 + $0x48] sm:$0xff] %v663
        %680 = vst [vmem:[#allocation2 + $0x50] sm:$0xff] %v664
        %681 = vst [vmem:[#allocation2 + $0x58] sm:$0xff] %v665
        %682 = vst [vmem:[#allocation2 + $0x60] sm:$0xff] %v666
        %683 = vst [vmem:[#allocation2 + $0x68] sm:$0xff] %v667
        %684 = vst [vmem:[#allocation2 + $0x70] sm:$0xff] %v668
        %685 = vst [vmem:[#allocation2 + $0x78] sm:$0xff] %v669
        %p686 = scmp.eq.s32.totalorder %s21, 1
        // Predicated region
        $region78: #{lightgcn_forward.7} parent=68 // pred_check
          %p687 = pneg %p686
        $region79: #{lightgcn_forward.7} parent=68 // pred_check_branch
          %689 = sbr.rel (%p687) target = $region81
        $region80: #{lightgcn_forward.7} parent=68 // pred_region
          %v690 = vld [vmem:[#allocation2] sm:$0xff]
          %v691 = vld [vmem:[#allocation2 + $0x8] sm:$0xff]
          %v692 = vld [vmem:[#allocation2 + $0x10] sm:$0xff]
          %v693 = vld [vmem:[#allocation2 + $0x18] sm:$0xff]
          %v694 = vld [vmem:[#allocation2 + $0x20] sm:$0xff]
          %v695 = vld [vmem:[#allocation2 + $0x28] sm:$0xff]
          %v696 = vld [vmem:[#allocation2 + $0x30] sm:$0xff]
          %v697 = vld [vmem:[#allocation2 + $0x38] sm:$0xff]
          %v698 = vld [vmem:[#allocation2 + $0x40] sm:$0xff]
          %v699 = vld [vmem:[#allocation2 + $0x48] sm:$0xff]
          %v700 = vld [vmem:[#allocation2 + $0x50] sm:$0xff]
          %v701 = vld [vmem:[#allocation2 + $0x58] sm:$0xff]
          %v702 = vld [vmem:[#allocation2 + $0x60] sm:$0xff]
          %v703 = vld [vmem:[#allocation2 + $0x68] sm:$0xff]
          %v704 = vld [vmem:[#allocation2 + $0x70] sm:$0xff]
          %v705 = vld [vmem:[#allocation2 + $0x78] sm:$0xff]
          %v706 = vld [vmem:[%s362] sm:$0xff]
          %v707 = vld [vmem:[%s362 + $0x8] sm:$0xff]
          %v708 = vld [vmem:[%s362 + $0x10] sm:$0xff]
          %v709 = vld [vmem:[%s362 + $0x18] sm:$0xff]
          %v710 = vld [vmem:[%s362 + $0x20] sm:$0xff]
          %v711 = vld [vmem:[%s362 + $0x28] sm:$0xff]
          %v712 = vld [vmem:[%s362 + $0x30] sm:$0xff]
          %v713 = vld [vmem:[%s362 + $0x38] sm:$0xff]
          %v714 = vld [vmem:[%s362 + $0x40] sm:$0xff]
          %v715 = vld [vmem:[%s362 + $0x48] sm:$0xff]
          %v716 = vld [vmem:[%s362 + $0x50] sm:$0xff]
          %v717 = vld [vmem:[%s362 + $0x58] sm:$0xff]
          %v718 = vld [vmem:[%s362 + $0x60] sm:$0xff]
          %v719 = vld [vmem:[%s362 + $0x68] sm:$0xff]
          %v720 = vld [vmem:[%s362 + $0x70] sm:$0xff]
          %v721 = vld [vmem:[%s362 + $0x78] sm:$0xff]
          %v722 = vadd.f32 %v706, %v690
          %v723 = vadd.f32 %v707, %v691
          %v724 = vadd.f32 %v708, %v692
          %v725 = vadd.f32 %v709, %v693
          %v726 = vadd.f32 %v710, %v694
          %v727 = vadd.f32 %v711, %v695
          %v728 = vadd.f32 %v712, %v696
          %v729 = vadd.f32 %v713, %v697
          %v730 = vadd.f32 %v714, %v698
          %v731 = vadd.f32 %v715, %v699
          %v732 = vadd.f32 %v716, %v700
          %v733 = vadd.f32 %v717, %v701
          %v734 = vadd.f32 %v718, %v702
          %v735 = vadd.f32 %v719, %v703
          %v736 = vadd.f32 %v720, %v704
          %v737 = vadd.f32 %v721, %v705
          %738 = vst [vmem:[%s368] sm:$0xff] %v722
          %739 = vst [vmem:[%s368 + $0x8] sm:$0xff] %v723
          %740 = vst [vmem:[%s368 + $0x10] sm:$0xff] %v724
          %741 = vst [vmem:[%s368 + $0x18] sm:$0xff] %v725
          %742 = vst [vmem:[%s368 + $0x20] sm:$0xff] %v726
          %743 = vst [vmem:[%s368 + $0x28] sm:$0xff] %v727
          %744 = vst [vmem:[%s368 + $0x30] sm:$0xff] %v728
          %745 = vst [vmem:[%s368 + $0x38] sm:$0xff] %v729
          %746 = vst [vmem:[%s368 + $0x40] sm:$0xff] %v730
          %747 = vst [vmem:[%s368 + $0x48] sm:$0xff] %v731
          %748 = vst [vmem:[%s368 + $0x50] sm:$0xff] %v732
          %749 = vst [vmem:[%s368 + $0x58] sm:$0xff] %v733
          %750 = vst [vmem:[%s368 + $0x60] sm:$0xff] %v734
          %751 = vst [vmem:[%s368 + $0x68] sm:$0xff] %v735
          %752 = vst [vmem:[%s368 + $0x70] sm:$0xff] %v736
          %753 = vst [vmem:[%s368 + $0x78] sm:$0xff] %v737
          %v754 = vpack.c.bf16 %v691, %v690
          %v755 = vpack.c.bf16 %v693, %v692
          %v756 = vpack.c.bf16 %v695, %v694
          %v757 = vpack.c.bf16 %v697, %v696
          %v758 = vpack.c.bf16 %v699, %v698
          %v759 = vpack.c.bf16 %v701, %v700
          %v760 = vpack.c.bf16 %v703, %v702
          %v761 = vpack.c.bf16 %v705, %v704
          %v770 = vunpack.c.l.b16 %v754
          %v771 = vunpack.c.h.b16 %v754
          %v772 = vunpack.c.l.b16 %v755
          %v773 = vunpack.c.h.b16 %v755
          %v774 = vunpack.c.l.b16 %v756
          %v775 = vunpack.c.h.b16 %v756
          %v776 = vunpack.c.l.b16 %v757
          %v777 = vunpack.c.h.b16 %v757
          %v778 = vunpack.c.l.b16 %v758
          %v779 = vunpack.c.h.b16 %v758
          %v780 = vunpack.c.l.b16 %v759
          %v781 = vunpack.c.h.b16 %v759
          %v782 = vunpack.c.l.b16 %v760
          %v783 = vunpack.c.h.b16 %v760
          %v784 = vunpack.c.l.b16 %v761
          %v785 = vunpack.c.h.b16 %v761
          %v786 = vpack.c.b16 %v770, %v770
          %v787 = vpack.c.b16 %v771, %v771
          %v788 = vpack.c.b16 %v772, %v772
          %v789 = vpack.c.b16 %v773, %v773
          %v790 = vpack.c.b16 %v774, %v774
          %v791 = vpack.c.b16 %v775, %v775
          %v792 = vpack.c.b16 %v776, %v776
          %v793 = vpack.c.b16 %v777, %v777
          %v794 = vpack.c.b16 %v778, %v778
          %v795 = vpack.c.b16 %v779, %v779
          %v796 = vpack.c.b16 %v780, %v780
          %v797 = vpack.c.b16 %v781, %v781
          %v798 = vpack.c.b16 %v782, %v782
          %v799 = vpack.c.b16 %v783, %v783
          %v800 = vpack.c.b16 %v784, %v784
          %v801 = vpack.c.b16 %v785, %v785
          %818 = vst [vmem:[%s374] sm:$0xf] %v786
          %819 = vst [vmem:[%s374 + $0x4] sm:$0xf] %v787
          %820 = vst [vmem:[%s374 + $0x8] sm:$0xf] %v788
          %821 = vst [vmem:[%s374 + $0xc] sm:$0xf] %v789
          %822 = vst [vmem:[%s374 + $0x10] sm:$0xf] %v790
          %823 = vst [vmem:[%s374 + $0x14] sm:$0xf] %v791
          %824 = vst [vmem:[%s374 + $0x18] sm:$0xf] %v792
          %825 = vst [vmem:[%s374 + $0x1c] sm:$0xf] %v793
          %826 = vst [vmem:[%s374 + $0x20] sm:$0xf] %v794
          %827 = vst [vmem:[%s374 + $0x24] sm:$0xf] %v795
          %828 = vst [vmem:[%s374 + $0x28] sm:$0xf] %v796
          %829 = vst [vmem:[%s374 + $0x2c] sm:$0xf] %v797
          %830 = vst [vmem:[%s374 + $0x30] sm:$0xf] %v798
          %831 = vst [vmem:[%s374 + $0x34] sm:$0xf] %v799
          %832 = vst [vmem:[%s374 + $0x38] sm:$0xf] %v800
          %833 = vst [vmem:[%s374 + $0x3c] sm:$0xf] %v801
        $region81: #{lightgcn_forward.7} parent=68 // pred_fallthru
          _
        %s834 = smul.u32 16, %s20
        %p835 = scmp.lt.s32.totalorder %s834, 31
        %s836 = scalar_select %p835, %s834, 31
        %s837 = smul.addr %s836, 8
        %s838 = scalar_lea.vmem %s3, %s837
        %s839 = smul.u32 16, %s20
        %p840 = scmp.lt.s32.totalorder %s839, 31
        %s841 = scalar_select %p840, %s839, 31
        %s842 = smul.addr %s841, 4
        %s843 = scalar_lea.vmem %s4, %s842
        // Predicated region
        $region82: #{lightgcn_forward.7} parent=68 // pred_check
          %p844 = pneg %p126
        $region83: #{lightgcn_forward.7} parent=68 // pred_check_branch
          %846 = sbr.rel (%p844) target = $region85
        $region84: #{lightgcn_forward.7} parent=68 // pred_region
          %s847 = smul.u32 16, %s20
        $region85: #{lightgcn_forward.7} parent=68 // pred_fallthru
          _
        // Predicated region
        $region86: #{lightgcn_forward.7} parent=68 // pred_check
          %p848 = pneg %p152
        $region87: #{lightgcn_forward.7} parent=68 // pred_check_branch
          %850 = sbr.rel (%p848) target = $region89
        $region88: #{lightgcn_forward.7} parent=68 // pred_region
          %s851 = smul.u32 16, %s20
        $region89: #{lightgcn_forward.7} parent=68 // pred_fallthru
          _
      $region69: #{lightgcn_forward.7} parent=5 // pred_fallthru
        _
      %p852 = scmp.le.s32.totalorder 2, %s11
      // Predicated region
      $region90: #{lightgcn_forward.7} parent=5 // pred_check
        %p853 = pneg %p852
      $region91: #{lightgcn_forward.7} parent=5 // pred_check_branch
        %855 = sbr.rel (%p853) target = $region93
      $region92: #{lightgcn_forward.7} parent=5 // pred_region
        %s856 = ssub.s32 %s11, 2
        // Predicated region
        $region94: #{lightgcn_forward.7} parent=92 // pred_check
          %p857 = pneg %p132
        $region95: #{lightgcn_forward.7} parent=92 // pred_check_branch
          %859 = sbr.rel (%p857) target = $region97
        $region96: #{lightgcn_forward.7} parent=92 // pred_region
          %s860 = smul.u32 16, %s22
          %p861 = scmp.lt.s32.totalorder %s860, 31
          %s862 = scalar_select %p861, %s860, 31
          %s863 = smul.addr %s862, 8
          %s864 = scalar_lea.vmem %s3, %s863
        $region97: #{lightgcn_forward.7} parent=92 // pred_fallthru
          _
        // Predicated region
        $region98: #{lightgcn_forward.7} parent=92 // pred_check
          %p865 = pneg %p158
        $region99: #{lightgcn_forward.7} parent=92 // pred_check_branch
          %867 = sbr.rel (%p865) target = $region101
        $region100: #{lightgcn_forward.7} parent=92 // pred_region
          %s868 = smul.u32 16, %s22
          %p869 = scmp.lt.s32.totalorder %s868, 31
          %s870 = scalar_select %p869, %s868, 31
          %s871 = smul.addr %s870, 4
          %s872 = scalar_lea.vmem %s4, %s871
        $region101: #{lightgcn_forward.7} parent=92 // pred_fallthru
          _
      $region93: #{lightgcn_forward.7} parent=5 // pred_fallthru
        _
    $region6: #{lightgcn_forward.7} parent=1 // loop_footer
      %s15 = sadd.s32 1, %s11
    $region7: #{lightgcn_forward.7} parent=1 // loop_footer_branch
      %10 = sbr.rel target = $region3
    $region8: #{lightgcn_forward.7} parent=1 // loop_exit
      _

// kernel: lightgcn_forward.10
$region0: #{lightgcn_forward.10}
  #allocation0 [shape = 'u32[]', space=smem, size = 0x4, offset = 0x4, fixed_abs, tag = 'smem constant byte address 0x4 - core index']
  #allocation1 [shape = 'u32[144,128]{1,0:T(1,128)}', space=vmem, size = 0x12000, scoped, tag = 'internal scratch']
  #allocation2 [shape = 'f32[128,128]{1,0:T(8,128)}', space=vmem, size = 0x10000, scoped, tag = 'scratch operand']
  %s0 = inlined_call_operand.vmem [shape: bf16[256,256], index: 0, kind: input, shape index: {}]
  %s1 = inlined_call_operand.vmem [shape: bf16[256,128], index: 1, kind: input, shape index: {}]
  %s2 = inlined_call_operand.vmem [shape: f32[256,128], index: 2, kind: input, shape index: {}, may-alias: {2,3}]
  %s3 = inlined_call_operand.vmem [shape: f32[256,128], index: 3, kind: output, shape index: {0}, may-alias: {2,3}]
  %s4 = inlined_call_operand.hbm [shape: bf16[256,128], index: 4, kind: output, shape index: {1}]
  %5 = xla_tuple %s3, %s4
  %s6 = sld [smem:[#allocation0]]
  $region102: #{lightgcn_forward.10} parent=0
    _
  %s8 = ssub.s32 1, %s6
  %s9 = scalar_select 0, %s8, %s6
  $region1: #{lightgcn_forward.10} parent=0
    #allocation3 [shape = 'u8[65536]{0}', space=vmem, size = 0x10000, scoped, tag = 'input window, operand 0']
    #allocation4 [shape = 'u8[65536]{0}', space=vmem, size = 0x10000, scoped, tag = 'output window, operand 1']
    #allocation5 [shape = 's32[2]{0}', space=sflag, size = 0x8, scoped, tag = 'scoped memory for lightgcn_forward.10']
    %10 = vsyncpa [#allocation5], 0
    %s11 = scalar_lea.sflag [#allocation5], 1
    %12 = vsyncpa %s11, 0
    loop: start=0, step=1, limit=6
    $region2: #{lightgcn_forward.10} parent=1 // loop_pre_header
      _
    $region3: #{lightgcn_forward.10} parent=1 // loop_header
      %s14 = sphi 0, %s18
      %p15 = scmp.ge.s32.totalorder %s14, 6
      %s21 = sphi 0, %s33
      %s22 = sphi 0, %s29
      %s23 = sphi 0, %s21
      %s24 = sphi 0, %s22
      %s25 = sphi 0, %s23
      %s26 = sphi 0, %s24
      %s38 = sphi 0, %s40
      %s41 = sphi 0, %s38
      %s42 = sphi 0, %s41
      %s58 = sphi 0, %s42
      %s64 = sphi 0, %s66
      %s67 = sphi 0, %s64
      %s68 = sphi 0, %s67
      %s84 = sphi 0, %s68
      %s90 = sphi 0, %s92
      %s93 = sphi 0, %s90
      %s94 = sphi 0, %s93
      %s110 = sphi 0, %s94
      %s116 = sphi 0, %s118
      %s119 = sphi 0, %s116
      %s120 = sphi 0, %s119
      %s136 = sphi 0, %s120
      %s142 = sphi 0, %s144
      %s145 = sphi 0, %s142
      %s146 = sphi 0, %s145
      %s162 = sphi 0, %s146
    $region4: #{lightgcn_forward.10} parent=1 // loop_header_branch
      %17 = sbr.rel (%p15) target = $region8
    $region5: #{lightgcn_forward.10} parent=1 // loop_body
      %s19 = ssub.s32 %s14, 1
      %s20 = ssub.s32 %s14, 2
      %s27 = sadd.s32 1, %s22
      %p28 = scmp.ge.s32.totalorder %s27, 2
      %s29 = scalar_select %p28, 0, %s27
      %s30 = sadd.s32 1, %s21
      %s31 = scalar_select %p28, %s30, %s21
      %p32 = scmp.ge.s32.totalorder %s31, 2
      %s33 = scalar_select %p32, 0, %s31
      %s34 = ssub.s32 %s21, %s33
      %s35 = ssub.s32 %s22, %s29
      %s36 = sor.u32 %s34, %s35
      %p37 = scmp.eq.s32.totalorder %s36, 0
      %s39 = sadd.s32 %s38, 1
      %s40 = scalar_select %p37, %s38, %s39
      %p43 = pneg %p37
      %p44 = scmp.eq.s32.totalorder %s14, 3
      %p45 = por %p43, %p44
      %p46 = scmp.ne.s32.totalorder %s38, %s41
      %p47 = scmp.eq.s32.totalorder %s14, 0
      %p48 = por %p46, %p47
      %p49 = scmp.ne.s32.totalorder %s38, %s41
      %p50 = scmp.eq.s32.totalorder %s19, 3
      %p51 = por %p49, %p50
      %p52 = scmp.ne.s32.totalorder %s41, %s42
      %p53 = scmp.eq.s32.totalorder %s19, 0
      %p54 = por %p52, %p53
      %p55 = scmp.ne.s32.totalorder %s41, %s42
      %p56 = scmp.eq.s32.totalorder %s20, 3
      %p57 = por %p55, %p56
      %p59 = scmp.ne.s32.totalorder %s42, %s58
      %p60 = scmp.eq.s32.totalorder %s20, 0
      %p61 = por %p59, %p60
      %s62 = ssub.s32 %s22, %s29
      %p63 = scmp.eq.s32.totalorder %s62, 0
      %s65 = sadd.s32 %s64, 1
      %s66 = scalar_select %p63, %s64, %s65
      %p69 = pneg %p63
      %p70 = scmp.eq.s32.totalorder %s14, 3
      %p71 = por %p69, %p70
      %p72 = scmp.ne.s32.totalorder %s64, %s67
      %p73 = scmp.eq.s32.totalorder %s14, 0
      %p74 = por %p72, %p73
      %p75 = scmp.ne.s32.totalorder %s64, %s67
      %p76 = scmp.eq.s32.totalorder %s19, 3
      %p77 = por %p75, %p76
      %p78 = scmp.ne.s32.totalorder %s67, %s68
      %p79 = scmp.eq.s32.totalorder %s19, 0
      %p80 = por %p78, %p79
      %p81 = scmp.ne.s32.totalorder %s67, %s68
      %p82 = scmp.eq.s32.totalorder %s20, 3
      %p83 = por %p81, %p82
      %p85 = scmp.ne.s32.totalorder %s68, %s84
      %p86 = scmp.eq.s32.totalorder %s20, 0
      %p87 = por %p85, %p86
      %s88 = ssub.s32 %s21, %s33
      %p89 = scmp.eq.s32.totalorder %s88, 0
      %s91 = sadd.s32 %s90, 1
      %s92 = scalar_select %p89, %s90, %s91
      %p95 = pneg %p89
      %p96 = scmp.eq.s32.totalorder %s14, 3
      %p97 = por %p95, %p96
      %p98 = scmp.ne.s32.totalorder %s90, %s93
      %p99 = scmp.eq.s32.totalorder %s14, 0
      %p100 = por %p98, %p99
      %p101 = scmp.ne.s32.totalorder %s90, %s93
      %p102 = scmp.eq.s32.totalorder %s19, 3
      %p103 = por %p101, %p102
      %p104 = scmp.ne.s32.totalorder %s93, %s94
      %p105 = scmp.eq.s32.totalorder %s19, 0
      %p106 = por %p104, %p105
      %p107 = scmp.ne.s32.totalorder %s93, %s94
      %p108 = scmp.eq.s32.totalorder %s20, 3
      %p109 = por %p107, %p108
      %p111 = scmp.ne.s32.totalorder %s94, %s110
      %p112 = scmp.eq.s32.totalorder %s20, 0
      %p113 = por %p111, %p112
      %s114 = ssub.s32 %s21, %s33
      %p115 = scmp.eq.s32.totalorder %s114, 0
      %s117 = sadd.s32 %s116, 1
      %s118 = scalar_select %p115, %s116, %s117
      %p121 = pneg %p115
      %p122 = scmp.eq.s32.totalorder %s14, 3
      %p123 = por %p121, %p122
      %p124 = scmp.ne.s32.totalorder %s116, %s119
      %p125 = scmp.eq.s32.totalorder %s14, 0
      %p126 = por %p124, %p125
      %p127 = scmp.ne.s32.totalorder %s116, %s119
      %p128 = scmp.eq.s32.totalorder %s19, 3
      %p129 = por %p127, %p128
      %p130 = scmp.ne.s32.totalorder %s119, %s120
      %p131 = scmp.eq.s32.totalorder %s19, 0
      %p132 = por %p130, %p131
      %p133 = scmp.ne.s32.totalorder %s119, %s120
      %p134 = scmp.eq.s32.totalorder %s20, 3
      %p135 = por %p133, %p134
      %p137 = scmp.ne.s32.totalorder %s120, %s136
      %p138 = scmp.eq.s32.totalorder %s20, 0
      %p139 = por %p137, %p138
      %s140 = ssub.s32 %s21, %s33
      %p141 = scmp.eq.s32.totalorder %s140, 0
      %s143 = sadd.s32 %s142, 1
      %s144 = scalar_select %p141, %s142, %s143
      %p147 = pneg %p141
      %p148 = scmp.eq.s32.totalorder %s14, 3
      %p149 = por %p147, %p148
      %p150 = scmp.ne.s32.totalorder %s142, %s145
      %p151 = scmp.eq.s32.totalorder %s14, 0
      %p152 = por %p150, %p151
      %p153 = scmp.ne.s32.totalorder %s142, %s145
      %p154 = scmp.eq.s32.totalorder %s19, 3
      %p155 = por %p153, %p154
      %p156 = scmp.ne.s32.totalorder %s145, %s146
      %p157 = scmp.eq.s32.totalorder %s19, 0
      %p158 = por %p156, %p157
      %p159 = scmp.ne.s32.totalorder %s145, %s146
      %p160 = scmp.eq.s32.totalorder %s20, 3
      %p161 = por %p159, %p160
      %p163 = scmp.ne.s32.totalorder %s146, %s162
      %p164 = scmp.eq.s32.totalorder %s20, 0
      %p165 = por %p163, %p164
      %p166 = scmp.le.s32.totalorder 1, %s14
      %p167 = scmp.lt.s32.totalorder %s14, 5
      %p168 = pnand %p166, %p167
      %p169 = pneg %p168
      // Predicated region
      $region9: #{lightgcn_forward.10} parent=5 // pred_check
        _
      $region10: #{lightgcn_forward.10} parent=5 // pred_check_branch
        %171 = sbr.rel (%p168) target = $region12
      $region11: #{lightgcn_forward.10} parent=5 // pred_region
        %s172 = ssub.s32 %s14, 1
      $region12: #{lightgcn_forward.10} parent=5 // pred_fallthru
        _
      %p173 = scmp.lt.s32.totalorder %s14, 4
      // Predicated region
      $region13: #{lightgcn_forward.10} parent=5 // pred_check
        %p174 = pneg %p173
      $region14: #{lightgcn_forward.10} parent=5 // pred_check_branch
        %176 = sbr.rel (%p174) target = $region16
      $region15: #{lightgcn_forward.10} parent=5 // pred_region
        // Predicated region
        $region17: #{lightgcn_forward.10} parent=15 // pred_check
          %p177 = pneg %p48
        $region18: #{lightgcn_forward.10} parent=15 // pred_check_branch
          %179 = sbr.rel (%p177) target = $region20
        $region19: #{lightgcn_forward.10} parent=15 // pred_region
          %s180 = sand.u32 %s38, 1
          %s181 = sand.u32 %s38, 1
          %s182 = smul.addr %s181, 64
          %s183 = scalar_lea.vmem [#allocation3], %s182
          %s184 = smul.u32 16, %s21
          %s185 = smul.addr %s184, 2
          %s186 = sadd.s32 %s22, %s185
          %s187 = smul.addr %s186, 4
          %s188 = scalar_lea.vmem %s0, %s187
          // Predicated region
          $region21: #{lightgcn_forward.10} parent=19 // pred_check
            _
          $region22: #{lightgcn_forward.10} parent=19 // pred_check_branch
            %190 = sbr.rel (0) target = $region24
          $region23: #{lightgcn_forward.10} parent=19 // pred_region
            // Predicated region
            $region25: #{lightgcn_forward.10} parent=23 // pred_check
              _
            $region26: #{lightgcn_forward.10} parent=23 // pred_check_branch
              %192 = sbr.rel target = $region28
            $region27: #{lightgcn_forward.10} parent=23 // pred_region
              // Predicated region
              $region40: #{lightgcn_forward.10} parent=27 // pred_check
                _
              $region41: #{lightgcn_forward.10} parent=27 // pred_check_branch
                %237 = sbr.rel (0) target = $region43
              $region42: #{lightgcn_forward.10} parent=27 // pred_region
                loop: start=0, step=1, limit=1
                $region44: #{lightgcn_forward.10} parent=42 // loop_pre_header
                  _
                $region45: #{lightgcn_forward.10} parent=42 // loop_header
                  %s239 = sphi 0, %s243
                  %p240 = scmp.ge.s32.totalorder %s239, 1
                  %s244 = sphi %s188, %s188
                  %s245 = sphi %s183, %s183
                $region46: #{lightgcn_forward.10} parent=42 // loop_header_branch
                  %242 = sbr.rel (%p240) target = $region50
                $region47: #{lightgcn_forward.10} parent=42 // loop_body
                  _
                $region48: #{lightgcn_forward.10} parent=42 // loop_footer
                  %s243 = sadd.s32 1, %s239
                $region49: #{lightgcn_forward.10} parent=42 // loop_footer_branch
                  %238 = sbr.rel target = $region45
                $region50: #{lightgcn_forward.10} parent=42 // loop_exit
                  _
                loop: start=0, step=1, limit=1
                $region51: #{lightgcn_forward.10} parent=42 // loop_pre_header
                  _
                $region52: #{lightgcn_forward.10} parent=42 // loop_header
                  %s248 = sphi 0, %s252
                  %p249 = scmp.ge.s32.totalorder %s248, 1
                  %s253 = sphi %s188, %s188
                  %s254 = sphi %s183, %s183
                $region53: #{lightgcn_forward.10} parent=42 // loop_header_branch
                  %251 = sbr.rel (%p249) target = $region57
                $region54: #{lightgcn_forward.10} parent=42 // loop_body
                  %v255 = vld [vmem:[%s253] sm:$0xf]
                  %256 = vst [vmem:[%s254] sm:$0xf] %v255
                  %v257 = vld [vmem:[%s253 + $0x8] sm:$0xf]
                  %258 = vst [vmem:[%s254 + $0x4] sm:$0xf] %v257
                  %v259 = vld [vmem:[%s253 + $0x10] sm:$0xf]
                  %260 = vst [vmem:[%s254 + $0x8] sm:$0xf] %v259
                  %v261 = vld [vmem:[%s253 + $0x18] sm:$0xf]
                  %262 = vst [vmem:[%s254 + $0xc] sm:$0xf] %v261
                  %v263 = vld [vmem:[%s253 + $0x20] sm:$0xf]
                  %264 = vst [vmem:[%s254 + $0x10] sm:$0xf] %v263
                  %v265 = vld [vmem:[%s253 + $0x28] sm:$0xf]
                  %266 = vst [vmem:[%s254 + $0x14] sm:$0xf] %v265
                  %v267 = vld [vmem:[%s253 + $0x30] sm:$0xf]
                  %268 = vst [vmem:[%s254 + $0x18] sm:$0xf] %v267
                  %v269 = vld [vmem:[%s253 + $0x38] sm:$0xf]
                  %270 = vst [vmem:[%s254 + $0x1c] sm:$0xf] %v269
                  %v271 = vld [vmem:[%s253 + $0x40] sm:$0xf]
                  %272 = vst [vmem:[%s254 + $0x20] sm:$0xf] %v271
                  %v273 = vld [vmem:[%s253 + $0x48] sm:$0xf]
                  %274 = vst [vmem:[%s254 + $0x24] sm:$0xf] %v273
                  %v275 = vld [vmem:[%s253 + $0x50] sm:$0xf]
                  %276 = vst [vmem:[%s254 + $0x28] sm:$0xf] %v275
                  %v277 = vld [vmem:[%s253 + $0x58] sm:$0xf]
                  %278 = vst [vmem:[%s254 + $0x2c] sm:$0xf] %v277
                  %v279 = vld [vmem:[%s253 + $0x60] sm:$0xf]
                  %280 = vst [vmem:[%s254 + $0x30] sm:$0xf] %v279
                  %v281 = vld [vmem:[%s253 + $0x68] sm:$0xf]
                  %282 = vst [vmem:[%s254 + $0x34] sm:$0xf] %v281
                  %v283 = vld [vmem:[%s253 + $0x70] sm:$0xf]
                  %284 = vst [vmem:[%s254 + $0x38] sm:$0xf] %v283
                  %v285 = vld [vmem:[%s253 + $0x78] sm:$0xf]
                  %286 = vst [vmem:[%s254 + $0x3c] sm:$0xf] %v285
                $region55: #{lightgcn_forward.10} parent=42 // loop_footer
                  %s252 = sadd.s32 1, %s248
                $region56: #{lightgcn_forward.10} parent=42 // loop_footer_branch
                  %247 = sbr.rel target = $region52
                $region57: #{lightgcn_forward.10} parent=42 // loop_exit
                  _
              $region43: #{lightgcn_forward.10} parent=27 // pred_fallthru
                _
            $region28: #{lightgcn_forward.10} parent=23 // pred_fallthru
              _
            // Predicated region
            $region29: #{lightgcn_forward.10} parent=23 // pred_check
              _
            $region30: #{lightgcn_forward.10} parent=23 // pred_check_branch
              %194 = sbr.rel (0) target = $region32
            $region31: #{lightgcn_forward.10} parent=23 // pred_region
              loop: start=0, step=1, limit=1
              $region33: #{lightgcn_forward.10} parent=31 // loop_pre_header
                _
              $region34: #{lightgcn_forward.10} parent=31 // loop_header
                %s197 = sphi 0, %s201
                %p198 = scmp.ge.s32.totalorder %s197, 1
                %s202 = sphi %s188, %s188
                %s203 = sphi %s183, %s183
              $region35: #{lightgcn_forward.10} parent=31 // loop_header_branch
                %200 = sbr.rel (%p198) target = $region39
              $region36: #{lightgcn_forward.10} parent=31 // loop_body
                %v204 = vld [vmem:[%s202] sm:$0xf]
                %205 = vst [vmem:[%s203] sm:$0xf] %v204
                %v206 = vld [vmem:[%s202 + $0x8] sm:$0xf]
                %207 = vst [vmem:[%s203 + $0x4] sm:$0xf] %v206
                %v208 = vld [vmem:[%s202 + $0x10] sm:$0xf]
                %209 = vst [vmem:[%s203 + $0x8] sm:$0xf] %v208
                %v210 = vld [vmem:[%s202 + $0x18] sm:$0xf]
                %211 = vst [vmem:[%s203 + $0xc] sm:$0xf] %v210
                %v212 = vld [vmem:[%s202 + $0x20] sm:$0xf]
                %213 = vst [vmem:[%s203 + $0x10] sm:$0xf] %v212
                %v214 = vld [vmem:[%s202 + $0x28] sm:$0xf]
                %215 = vst [vmem:[%s203 + $0x14] sm:$0xf] %v214
                %v216 = vld [vmem:[%s202 + $0x30] sm:$0xf]
                %217 = vst [vmem:[%s203 + $0x18] sm:$0xf] %v216
                %v218 = vld [vmem:[%s202 + $0x38] sm:$0xf]
                %219 = vst [vmem:[%s203 + $0x1c] sm:$0xf] %v218
                %v220 = vld [vmem:[%s202 + $0x40] sm:$0xf]
                %221 = vst [vmem:[%s203 + $0x20] sm:$0xf] %v220
                %v222 = vld [vmem:[%s202 + $0x48] sm:$0xf]
                %223 = vst [vmem:[%s203 + $0x24] sm:$0xf] %v222
                %v224 = vld [vmem:[%s202 + $0x50] sm:$0xf]
                %225 = vst [vmem:[%s203 + $0x28] sm:$0xf] %v224
                %v226 = vld [vmem:[%s202 + $0x58] sm:$0xf]
                %227 = vst [vmem:[%s203 + $0x2c] sm:$0xf] %v226
                %v228 = vld [vmem:[%s202 + $0x60] sm:$0xf]
                %229 = vst [vmem:[%s203 + $0x30] sm:$0xf] %v228
                %v230 = vld [vmem:[%s202 + $0x68] sm:$0xf]
                %231 = vst [vmem:[%s203 + $0x34] sm:$0xf] %v230
                %v232 = vld [vmem:[%s202 + $0x70] sm:$0xf]
                %233 = vst [vmem:[%s203 + $0x38] sm:$0xf] %v232
                %v234 = vld [vmem:[%s202 + $0x78] sm:$0xf]
                %235 = vst [vmem:[%s203 + $0x3c] sm:$0xf] %v234
              $region37: #{lightgcn_forward.10} parent=31 // loop_footer
                %s201 = sadd.s32 1, %s197
              $region38: #{lightgcn_forward.10} parent=31 // loop_footer_branch
                %196 = sbr.rel target = $region34
              $region39: #{lightgcn_forward.10} parent=31 // loop_exit
                _
            $region32: #{lightgcn_forward.10} parent=23 // pred_fallthru
              _
          $region24: #{lightgcn_forward.10} parent=19 // pred_fallthru
            _
          %287 = vnop
        $region20: #{lightgcn_forward.10} parent=15 // pred_fallthru
          _
        // Predicated region
        $region58: #{lightgcn_forward.10} parent=15 // pred_check
          %p288 = pneg %p74
        $region59: #{lightgcn_forward.10} parent=15 // pred_check_branch
          %290 = sbr.rel (%p288) target = $region61
        $region60: #{lightgcn_forward.10} parent=15 // pred_region
          %s291 = smul.u32 16, %s22
          %p292 = scmp.lt.s32.totalorder %s291, 31
          %s293 = scalar_select %p292, %s291, 31
          %s294 = smul.addr %s293, 4
          %s295 = scalar_lea.vmem %s1, %s294
          %s296 = smul.u32 16, %s22
        $region61: #{lightgcn_forward.10} parent=15 // pred_fallthru
          _
        // Predicated region
        $region62: #{lightgcn_forward.10} parent=15 // pred_check
          %p297 = pneg %p100
        $region63: #{lightgcn_forward.10} parent=15 // pred_check_branch
          %299 = sbr.rel (%p297) target = $region65
        $region64: #{lightgcn_forward.10} parent=15 // pred_region
          %s300 = smul.u32 16, %s21
          %p301 = scmp.lt.s32.totalorder %s300, 31
          %s302 = scalar_select %p301, %s300, 31
          %s303 = smul.addr %s302, 8
          %s304 = scalar_lea.vmem %s2, %s303
          %s305 = smul.u32 16, %s21
        $region65: #{lightgcn_forward.10} parent=15 // pred_fallthru
          _
      $region16: #{lightgcn_forward.10} parent=5 // pred_fallthru
        _
      %p306 = scmp.le.s32.totalorder 1, %s14
      %p307 = scmp.lt.s32.totalorder %s14, 5
      %p308 = pnand %p306, %p307
      %p309 = pneg %p308
      // Predicated region
      $region66: #{lightgcn_forward.10} parent=5 // pred_check
        _
      $region67: #{lightgcn_forward.10} parent=5 // pred_check_branch
        %311 = sbr.rel (%p308) target = $region69
      $region68: #{lightgcn_forward.10} parent=5 // pred_region
        %s312 = ssub.s32 %s14, 1
        %s313 = sand.u32 %s41, 1
        %s314 = sand.u32 %s41, 1
        %s315 = smul.addr %s314, 64
        %s316 = scalar_lea.vmem [#allocation3], %s315
        // Predicated region
        $region70: #{lightgcn_forward.10} parent=68 // pred_check
          %p317 = pneg %p54
        $region71: #{lightgcn_forward.10} parent=68 // pred_check_branch
          %319 = sbr.rel (%p317) target = $region73
        $region72: #{lightgcn_forward.10} parent=68 // pred_region
          _
        $region73: #{lightgcn_forward.10} parent=68 // pred_fallthru
          _
        %s320 = sand.u32 %s41, 1
        %s321 = sand.u32 %s41, 1
        %s322 = smul.addr %s321, 64
        %s323 = scalar_lea.vmem [#allocation3], %s322
        %p324 = pneg %p54
        %p325 = pneg %p51
        %s326 = smul.u32 16, %s24
        %p327 = scmp.lt.s32.totalorder %s326, 31
        %s328 = scalar_select %p327, %s326, 31
        %s329 = smul.addr %s328, 4
        %s330 = scalar_lea.vmem %s1, %s329
        %p331 = pneg %p80
        %p332 = pneg %p77
        %s333 = smul.u32 16, %s23
        %p334 = scmp.lt.s32.totalorder %s333, 31
        %s335 = scalar_select %p334, %s333, 31
        %s336 = smul.addr %s335, 8
        %s337 = scalar_lea.vmem %s2, %s336
        %p338 = pneg %p106
        %p339 = pneg %p103
        %p340 = pneg %p132
        %p341 = pneg %p129
        %s342 = smul.u32 16, %s23
        %p343 = scmp.lt.s32.totalorder %s342, 31
        %s344 = scalar_select %p343, %s342, 31
        %s345 = smul.addr %s344, 8
        %s346 = scalar_lea.vmem %s3, %s345
        %p347 = pneg %p158
        %p348 = pneg %p155
        %s349 = sand.u32 %s145, 1
        %s350 = scalar_lea.sflag [#allocation5], %s349
        %s351 = sand.u32 %s145, 1
        %s352 = smul.addr %s351, 64
        %s353 = scalar_lea.vmem [#allocation4], %s352
        %s354 = smul.u32 16, %s23
        %s355 = smul.u32 16, %s24
        %p356 = scmp.lt.s32.totalorder %s355, 31
        %s357 = scalar_select %p356, %s355, 31
        %s358 = smul.addr %s357, 4
        %s359 = scalar_lea.vmem %s1, %s358
        %s360 = smul.u32 16, %s24
        %s361 = smul.u32 16, %s23
        %p362 = scmp.lt.s32.totalorder %s361, 31
        %s363 = scalar_select %p362, %s361, 31
        %s364 = smul.addr %s363, 8
        %s365 = scalar_lea.vmem %s2, %s364
        %s366 = smul.u32 16, %s23
        %s367 = smul.u32 16, %s23
        %p368 = scmp.lt.s32.totalorder %s367, 31
        %s369 = scalar_select %p368, %s367, 31
        %s370 = smul.addr %s369, 8
        %s371 = scalar_lea.vmem %s3, %s370
        %s372 = smul.u32 16, %s23
        %s373 = smul.u32 16, %s23
        %p375 = scmp.eq.s32.totalorder %s24, 0
        // Predicated region
        $region74: #{lightgcn_forward.10} parent=68 // pred_check
          %p376 = pneg %p375
        $region75: #{lightgcn_forward.10} parent=68 // pred_check_branch
          %378 = sbr.rel (%p376) target = $region77
        $region76: #{lightgcn_forward.10} parent=68 // pred_region
          %379 = vst [vmem:[#allocation2] sm:$0xff] 0.0
          %380 = vst [vmem:[#allocation2 + $0x8] sm:$0xff] 0.0
          %381 = vst [vmem:[#allocation2 + $0x10] sm:$0xff] 0.0
          %382 = vst [vmem:[#allocation2 + $0x18] sm:$0xff] 0.0
          %383 = vst [vmem:[#allocation2 + $0x20] sm:$0xff] 0.0
          %384 = vst [vmem:[#allocation2 + $0x28] sm:$0xff] 0.0
          %385 = vst [vmem:[#allocation2 + $0x30] sm:$0xff] 0.0
          %386 = vst [vmem:[#allocation2 + $0x38] sm:$0xff] 0.0
          %387 = vst [vmem:[#allocation2 + $0x40] sm:$0xff] 0.0
          %388 = vst [vmem:[#allocation2 + $0x48] sm:$0xff] 0.0
          %389 = vst [vmem:[#allocation2 + $0x50] sm:$0xff] 0.0
          %390 = vst [vmem:[#allocation2 + $0x58] sm:$0xff] 0.0
          %391 = vst [vmem:[#allocation2 + $0x60] sm:$0xff] 0.0
          %392 = vst [vmem:[#allocation2 + $0x68] sm:$0xff] 0.0
          %393 = vst [vmem:[#allocation2 + $0x70] sm:$0xff] 0.0
          %394 = vst [vmem:[#allocation2 + $0x78] sm:$0xff] 0.0
        $region77: #{lightgcn_forward.10} parent=68 // pred_fallthru
          _
        %v395 = vld [vmem:[%s316] sm:$0xf]
        %v396 = vld [vmem:[%s316 + $0x4] sm:$0xf]
        %v397 = vld [vmem:[%s316 + $0x8] sm:$0xf]
        %v398 = vld [vmem:[%s316 + $0xc] sm:$0xf]
        %v399 = vld [vmem:[%s316 + $0x10] sm:$0xf]
        %v400 = vld [vmem:[%s316 + $0x14] sm:$0xf]
        %v401 = vld [vmem:[%s316 + $0x18] sm:$0xf]
        %v402 = vld [vmem:[%s316 + $0x1c] sm:$0xf]
        %v403 = vld [vmem:[%s316 + $0x20] sm:$0xf]
        %v404 = vld [vmem:[%s316 + $0x24] sm:$0xf]
        %v405 = vld [vmem:[%s316 + $0x28] sm:$0xf]
        %v406 = vld [vmem:[%s316 + $0x2c] sm:$0xf]
        %v407 = vld [vmem:[%s316 + $0x30] sm:$0xf]
        %v408 = vld [vmem:[%s316 + $0x34] sm:$0xf]
        %v409 = vld [vmem:[%s316 + $0x38] sm:$0xf]
        %v410 = vld [vmem:[%s316 + $0x3c] sm:$0xf]
        %v411 = vld [vmem:[%s359] sm:$0xf]
        %v412 = vld [vmem:[%s359 + $0x4] sm:$0xf]
        %v413 = vld [vmem:[%s359 + $0x8] sm:$0xf]
        %v414 = vld [vmem:[%s359 + $0xc] sm:$0xf]
        %v415 = vld [vmem:[%s359 + $0x10] sm:$0xf]
        %v416 = vld [vmem:[%s359 + $0x14] sm:$0xf]
        %v417 = vld [vmem:[%s359 + $0x18] sm:$0xf]
        %v418 = vld [vmem:[%s359 + $0x1c] sm:$0xf]
        %v419 = vld [vmem:[%s359 + $0x20] sm:$0xf]
        %v420 = vld [vmem:[%s359 + $0x24] sm:$0xf]
        %v421 = vld [vmem:[%s359 + $0x28] sm:$0xf]
        %v422 = vld [vmem:[%s359 + $0x2c] sm:$0xf]
        %v423 = vld [vmem:[%s359 + $0x30] sm:$0xf]
        %v424 = vld [vmem:[%s359 + $0x34] sm:$0xf]
        %v425 = vld [vmem:[%s359 + $0x38] sm:$0xf]
        %v426 = vld [vmem:[%s359 + $0x3c] sm:$0xf]
        %v443 = vunpack.c.l.b16 %v395
        %v444 = vunpack.c.l.b16 %v396
        %v445 = vunpack.c.l.b16 %v397
        %v446 = vunpack.c.l.b16 %v398
        %v447 = vunpack.c.l.b16 %v399
        %v448 = vunpack.c.l.b16 %v400
        %v449 = vunpack.c.l.b16 %v401
        %v450 = vunpack.c.l.b16 %v402
        %v451 = vunpack.c.l.b16 %v403
        %v452 = vunpack.c.l.b16 %v404
        %v453 = vunpack.c.l.b16 %v405
        %v454 = vunpack.c.l.b16 %v406
        %v455 = vunpack.c.l.b16 %v407
        %v456 = vunpack.c.l.b16 %v408
        %v457 = vunpack.c.l.b16 %v409
        %v458 = vunpack.c.l.b16 %v410
        %v459 = vpack.c.b16 %v444, %v443
        %v460 = vpack.c.b16 %v446, %v445
        %v461 = vpack.c.b16 %v448, %v447
        %v462 = vpack.c.b16 %v450, %v449
        %v463 = vpack.c.b16 %v452, %v451
        %v464 = vpack.c.b16 %v454, %v453
        %v465 = vpack.c.b16 %v456, %v455
        %v466 = vpack.c.b16 %v458, %v457
        %v491 = vunpack.c.l.b16 %v411
        %v492 = vunpack.c.l.b16 %v412
        %v493 = vunpack.c.l.b16 %v413
        %v494 = vunpack.c.l.b16 %v414
        %v495 = vunpack.c.l.b16 %v415
        %v496 = vunpack.c.l.b16 %v416
        %v497 = vunpack.c.l.b16 %v417
        %v498 = vunpack.c.l.b16 %v418
        %v499 = vunpack.c.l.b16 %v419
        %v500 = vunpack.c.l.b16 %v420
        %v501 = vunpack.c.l.b16 %v421
        %v502 = vunpack.c.l.b16 %v422
        %v503 = vunpack.c.l.b16 %v423
        %v504 = vunpack.c.l.b16 %v424
        %v505 = vunpack.c.l.b16 %v425
        %v506 = vunpack.c.l.b16 %v426
        %v507 = vpack.c.b16 %v492, %v491
        %v508 = vpack.c.b16 %v494, %v493
        %v509 = vpack.c.b16 %v496, %v495
        %v510 = vpack.c.b16 %v498, %v497
        %v511 = vpack.c.b16 %v500, %v499
        %v512 = vpack.c.b16 %v502, %v501
        %v513 = vpack.c.b16 %v504, %v503
        %v514 = vpack.c.b16 %v506, %v505
        %523 = vmatprep.subr.bf16.mxu0 0
        %524 = vmatpush1.bf16.msra.mxu0 %v507
        %525 = vmatprep.subr.bf16.mxu0 0
        %526 = vmatpush1.bf16.msra.mxu0 %v508
        %527 = vmatprep.subr.bf16.mxu0 0
        %528 = vmatpush1.bf16.msra.mxu0 %v509
        %529 = vmatprep.subr.bf16.mxu0 0
        %530 = vmatpush1.bf16.msra.mxu0 %v510
        %531 = vmatprep.subr.bf16.mxu0 0
        %532 = vmatpush1.bf16.msra.mxu0 %v511
        %533 = vmatprep.subr.bf16.mxu0 0
        %534 = vmatpush1.bf16.msra.mxu0 %v512
        %535 = vmatprep.subr.bf16.mxu0 0
        %536 = vmatpush1.bf16.msra.mxu0 %v513
        %537 = vmatprep.subr.bf16.mxu0 0
        %538 = vmatpush1.bf16.msra.mxu0 %v514
        %539 = vmatprep.subr.bf16.mxu0 0
        %540 = vmatpush1.bf16.msra.mxu0 0
        %541 = vmatprep.subr.bf16.mxu0 0
        %542 = vmatpush1.bf16.msra.mxu0 0
        %543 = vmatprep.subr.bf16.mxu0 0
        %544 = vmatpush1.bf16.msra.mxu0 0
        %545 = vmatprep.subr.bf16.mxu0 0
        %546 = vmatpush1.bf16.msra.mxu0 0
        %547 = vmatprep.subr.bf16.mxu0 0
        %548 = vmatpush1.bf16.msra.mxu0 0
        %549 = vmatprep.subr.bf16.mxu0 0
        %550 = vmatpush1.bf16.msra.mxu0 0
        %551 = vmatprep.subr.bf16.mxu0 0
        %552 = vmatpush1.bf16.msra.mxu0 0
        %553 = vmatprep.subr.bf16.mxu0 0
        %554 = vmatpush1.bf16.msra.mxu0 0
        %555 = vmatprep.mubr.bf16.mxu0 0
        %556 = vmatmul.mubr.bf16.gmra.mrb[0].mxu0 %v459
        %v557 = vpop.f32.mrb[0].mxu0
        %v558 = vadd.f32 0.0, %v557
        %v559 = vpop.f32.mrb[0].mxu0
        %v560 = vpop.f32.mrb[0].mxu0
        %v561 = vadd.f32 0.0, %v560
        %v562 = vpop.f32.mrb[0].mxu0
        %563 = vmatprep.mubr.bf16.mxu0 0
        %564 = vmatmul.mubr.bf16.gmra.mrb[0].mxu0 %v460
        %v565 = vpop.f32.mrb[0].mxu0
        %v566 = vadd.f32 0.0, %v565
        %v567 = vpop.f32.mrb[0].mxu0
        %v568 = vpop.f32.mrb[0].mxu0
        %v569 = vadd.f32 0.0, %v568
        %v570 = vpop.f32.mrb[0].mxu0
        %571 = vmatprep.mubr.bf16.mxu0 0
        %572 = vmatmul.mubr.bf16.gmra.mrb[0].mxu0 %v461
        %v573 = vpop.f32.mrb[0].mxu0
        %v574 = vadd.f32 0.0, %v573
        %v575 = vpop.f32.mrb[0].mxu0
        %v576 = vpop.f32.mrb[0].mxu0
        %v577 = vadd.f32 0.0, %v576
        %v578 = vpop.f32.mrb[0].mxu0
        %579 = vmatprep.mubr.bf16.mxu0 0
        %580 = vmatmul.mubr.bf16.gmra.mrb[0].mxu0 %v462
        %v581 = vpop.f32.mrb[0].mxu0
        %v582 = vadd.f32 0.0, %v581
        %v583 = vpop.f32.mrb[0].mxu0
        %v584 = vpop.f32.mrb[0].mxu0
        %v585 = vadd.f32 0.0, %v584
        %v586 = vpop.f32.mrb[0].mxu0
        %587 = vmatprep.mubr.bf16.mxu0 0
        %588 = vmatmul.mubr.bf16.gmra.mrb[0].mxu0 %v463
        %v589 = vpop.f32.mrb[0].mxu0
        %v590 = vadd.f32 0.0, %v589
        %v591 = vpop.f32.mrb[0].mxu0
        %v592 = vpop.f32.mrb[0].mxu0
        %v593 = vadd.f32 0.0, %v592
        %v594 = vpop.f32.mrb[0].mxu0
        %595 = vmatprep.mubr.bf16.mxu0 0
        %596 = vmatmul.mubr.bf16.gmra.mrb[0].mxu0 %v464
        %v597 = vpop.f32.mrb[0].mxu0
        %v598 = vadd.f32 0.0, %v597
        %v599 = vpop.f32.mrb[0].mxu0
        %v600 = vpop.f32.mrb[0].mxu0
        %v601 = vadd.f32 0.0, %v600
        %v602 = vpop.f32.mrb[0].mxu0
        %603 = vmatprep.mubr.bf16.mxu0 0
        %604 = vmatmul.mubr.bf16.gmra.mrb[0].mxu0 %v465
        %v605 = vpop.f32.mrb[0].mxu0
        %v606 = vadd.f32 0.0, %v605
        %v607 = vpop.f32.mrb[0].mxu0
        %v608 = vpop.f32.mrb[0].mxu0
        %v609 = vadd.f32 0.0, %v608
        %v610 = vpop.f32.mrb[0].mxu0
        %611 = vmatprep.mubr.bf16.mxu0 0
        %612 = vmatmul.mubr.bf16.gmra.mrb[0].mxu0 %v466
        %v613 = vpop.f32.mrb[0].mxu0
        %v614 = vadd.f32 0.0, %v613
        %v615 = vpop.f32.mrb[0].mxu0
        %v616 = vpop.f32.mrb[0].mxu0
        %v617 = vadd.f32 0.0, %v616
        %v618 = vpop.f32.mrb[0].mxu0
        %619 = vdwg.mxu0
        %v620 = vld [vmem:[#allocation2] sm:$0xff]
        %v621 = vld [vmem:[#allocation2 + $0x8] sm:$0xff]
        %v622 = vld [vmem:[#allocation2 + $0x10] sm:$0xff]
        %v623 = vld [vmem:[#allocation2 + $0x18] sm:$0xff]
        %v624 = vld [vmem:[#allocation2 + $0x20] sm:$0xff]
        %v625 = vld [vmem:[#allocation2 + $0x28] sm:$0xff]
        %v626 = vld [vmem:[#allocation2 + $0x30] sm:$0xff]
        %v627 = vld [vmem:[#allocation2 + $0x38] sm:$0xff]
        %v628 = vld [vmem:[#allocation2 + $0x40] sm:$0xff]
        %v629 = vld [vmem:[#allocation2 + $0x48] sm:$0xff]
        %v630 = vld [vmem:[#allocation2 + $0x50] sm:$0xff]
        %v631 = vld [vmem:[#allocation2 + $0x58] sm:$0xff]
        %v632 = vld [vmem:[#allocation2 + $0x60] sm:$0xff]
        %v633 = vld [vmem:[#allocation2 + $0x68] sm:$0xff]
        %v634 = vld [vmem:[#allocation2 + $0x70] sm:$0xff]
        %v635 = vld [vmem:[#allocation2 + $0x78] sm:$0xff]
        %v636 = vadd.f32 %v620, %v558
        %v637 = vadd.f32 %v621, %v561
        %v638 = vadd.f32 %v622, %v566
        %v639 = vadd.f32 %v623, %v569
        %v640 = vadd.f32 %v624, %v574
        %v641 = vadd.f32 %v625, %v577
        %v642 = vadd.f32 %v626, %v582
        %v643 = vadd.f32 %v627, %v585
        %v644 = vadd.f32 %v628, %v590
        %v645 = vadd.f32 %v629, %v593
        %v646 = vadd.f32 %v630, %v598
        %v647 = vadd.f32 %v631, %v601
        %v648 = vadd.f32 %v632, %v606
        %v649 = vadd.f32 %v633, %v609
        %v650 = vadd.f32 %v634, %v614
        %v651 = vadd.f32 %v635, %v617
        %652 = vst [vmem:[#allocation2] sm:$0xff] %v636
        %653 = vst [vmem:[#allocation2 + $0x8] sm:$0xff] %v637
        %654 = vst [vmem:[#allocation2 + $0x10] sm:$0xff] %v638
        %655 = vst [vmem:[#allocation2 + $0x18] sm:$0xff] %v639
        %656 = vst [vmem:[#allocation2 + $0x20] sm:$0xff] %v640
        %657 = vst [vmem:[#allocation2 + $0x28] sm:$0xff] %v641
        %658 = vst [vmem:[#allocation2 + $0x30] sm:$0xff] %v642
        %659 = vst [vmem:[#allocation2 + $0x38] sm:$0xff] %v643
        %660 = vst [vmem:[#allocation2 + $0x40] sm:$0xff] %v644
        %661 = vst [vmem:[#allocation2 + $0x48] sm:$0xff] %v645
        %662 = vst [vmem:[#allocation2 + $0x50] sm:$0xff] %v646
        %663 = vst [vmem:[#allocation2 + $0x58] sm:$0xff] %v647
        %664 = vst [vmem:[#allocation2 + $0x60] sm:$0xff] %v648
        %665 = vst [vmem:[#allocation2 + $0x68] sm:$0xff] %v649
        %666 = vst [vmem:[#allocation2 + $0x70] sm:$0xff] %v650
        %667 = vst [vmem:[#allocation2 + $0x78] sm:$0xff] %v651
        %p668 = scmp.eq.s32.totalorder %s24, 1
        // Predicated region
        $region78: #{lightgcn_forward.10} parent=68 // pred_check
          %p669 = pneg %p668
        $region79: #{lightgcn_forward.10} parent=68 // pred_check_branch
          %671 = sbr.rel (%p669) target = $region81
        $region80: #{lightgcn_forward.10} parent=68 // pred_region
          %v672 = vld [vmem:[#allocation2] sm:$0xff]
          %v673 = vld [vmem:[#allocation2 + $0x8] sm:$0xff]
          %v674 = vld [vmem:[#allocation2 + $0x10] sm:$0xff]
          %v675 = vld [vmem:[#allocation2 + $0x18] sm:$0xff]
          %v676 = vld [vmem:[#allocation2 + $0x20] sm:$0xff]
          %v677 = vld [vmem:[#allocation2 + $0x28] sm:$0xff]
          %v678 = vld [vmem:[#allocation2 + $0x30] sm:$0xff]
          %v679 = vld [vmem:[#allocation2 + $0x38] sm:$0xff]
          %v680 = vld [vmem:[#allocation2 + $0x40] sm:$0xff]
          %v681 = vld [vmem:[#allocation2 + $0x48] sm:$0xff]
          %v682 = vld [vmem:[#allocation2 + $0x50] sm:$0xff]
          %v683 = vld [vmem:[#allocation2 + $0x58] sm:$0xff]
          %v684 = vld [vmem:[#allocation2 + $0x60] sm:$0xff]
          %v685 = vld [vmem:[#allocation2 + $0x68] sm:$0xff]
          %v686 = vld [vmem:[#allocation2 + $0x70] sm:$0xff]
          %v687 = vld [vmem:[#allocation2 + $0x78] sm:$0xff]
          %v688 = vld [vmem:[%s365] sm:$0xff]
          %v689 = vld [vmem:[%s365 + $0x8] sm:$0xff]
          %v690 = vld [vmem:[%s365 + $0x10] sm:$0xff]
          %v691 = vld [vmem:[%s365 + $0x18] sm:$0xff]
          %v692 = vld [vmem:[%s365 + $0x20] sm:$0xff]
          %v693 = vld [vmem:[%s365 + $0x28] sm:$0xff]
          %v694 = vld [vmem:[%s365 + $0x30] sm:$0xff]
          %v695 = vld [vmem:[%s365 + $0x38] sm:$0xff]
          %v696 = vld [vmem:[%s365 + $0x40] sm:$0xff]
          %v697 = vld [vmem:[%s365 + $0x48] sm:$0xff]
          %v698 = vld [vmem:[%s365 + $0x50] sm:$0xff]
          %v699 = vld [vmem:[%s365 + $0x58] sm:$0xff]
          %v700 = vld [vmem:[%s365 + $0x60] sm:$0xff]
          %v701 = vld [vmem:[%s365 + $0x68] sm:$0xff]
          %v702 = vld [vmem:[%s365 + $0x70] sm:$0xff]
          %v703 = vld [vmem:[%s365 + $0x78] sm:$0xff]
          %v704 = vadd.f32 %v688, %v672
          %v705 = vadd.f32 %v689, %v673
          %v706 = vadd.f32 %v690, %v674
          %v707 = vadd.f32 %v691, %v675
          %v708 = vadd.f32 %v692, %v676
          %v709 = vadd.f32 %v693, %v677
          %v710 = vadd.f32 %v694, %v678
          %v711 = vadd.f32 %v695, %v679
          %v712 = vadd.f32 %v696, %v680
          %v713 = vadd.f32 %v697, %v681
          %v714 = vadd.f32 %v698, %v682
          %v715 = vadd.f32 %v699, %v683
          %v716 = vadd.f32 %v700, %v684
          %v717 = vadd.f32 %v701, %v685
          %v718 = vadd.f32 %v702, %v686
          %v719 = vadd.f32 %v703, %v687
          %720 = vst [vmem:[%s371] sm:$0xff] %v704
          %721 = vst [vmem:[%s371 + $0x8] sm:$0xff] %v705
          %722 = vst [vmem:[%s371 + $0x10] sm:$0xff] %v706
          %723 = vst [vmem:[%s371 + $0x18] sm:$0xff] %v707
          %724 = vst [vmem:[%s371 + $0x20] sm:$0xff] %v708
          %725 = vst [vmem:[%s371 + $0x28] sm:$0xff] %v709
          %726 = vst [vmem:[%s371 + $0x30] sm:$0xff] %v710
          %727 = vst [vmem:[%s371 + $0x38] sm:$0xff] %v711
          %728 = vst [vmem:[%s371 + $0x40] sm:$0xff] %v712
          %729 = vst [vmem:[%s371 + $0x48] sm:$0xff] %v713
          %730 = vst [vmem:[%s371 + $0x50] sm:$0xff] %v714
          %731 = vst [vmem:[%s371 + $0x58] sm:$0xff] %v715
          %732 = vst [vmem:[%s371 + $0x60] sm:$0xff] %v716
          %733 = vst [vmem:[%s371 + $0x68] sm:$0xff] %v717
          %734 = vst [vmem:[%s371 + $0x70] sm:$0xff] %v718
          %735 = vst [vmem:[%s371 + $0x78] sm:$0xff] %v719
          %v736 = vpack.c.bf16 %v673, %v672
          %v737 = vpack.c.bf16 %v675, %v674
          %v738 = vpack.c.bf16 %v677, %v676
          %v739 = vpack.c.bf16 %v679, %v678
          %v740 = vpack.c.bf16 %v681, %v680
          %v741 = vpack.c.bf16 %v683, %v682
          %v742 = vpack.c.bf16 %v685, %v684
          %v743 = vpack.c.bf16 %v687, %v686
          %v752 = vunpack.c.l.b16 %v736
          %v753 = vunpack.c.h.b16 %v736
          %v754 = vunpack.c.l.b16 %v737
          %v755 = vunpack.c.h.b16 %v737
          %v756 = vunpack.c.l.b16 %v738
          %v757 = vunpack.c.h.b16 %v738
          %v758 = vunpack.c.l.b16 %v739
          %v759 = vunpack.c.h.b16 %v739
          %v760 = vunpack.c.l.b16 %v740
          %v761 = vunpack.c.h.b16 %v740
          %v762 = vunpack.c.l.b16 %v741
          %v763 = vunpack.c.h.b16 %v741
          %v764 = vunpack.c.l.b16 %v742
          %v765 = vunpack.c.h.b16 %v742
          %v766 = vunpack.c.l.b16 %v743
          %v767 = vunpack.c.h.b16 %v743
          %v768 = vpack.c.b16 %v752, %v752
          %v769 = vpack.c.b16 %v753, %v753
          %v770 = vpack.c.b16 %v754, %v754
          %v771 = vpack.c.b16 %v755, %v755
          %v772 = vpack.c.b16 %v756, %v756
          %v773 = vpack.c.b16 %v757, %v757
          %v774 = vpack.c.b16 %v758, %v758
          %v775 = vpack.c.b16 %v759, %v759
          %v776 = vpack.c.b16 %v760, %v760
          %v777 = vpack.c.b16 %v761, %v761
          %v778 = vpack.c.b16 %v762, %v762
          %v779 = vpack.c.b16 %v763, %v763
          %v780 = vpack.c.b16 %v764, %v764
          %v781 = vpack.c.b16 %v765, %v765
          %v782 = vpack.c.b16 %v766, %v766
          %v783 = vpack.c.b16 %v767, %v767
          %800 = vst [vmem:[%s353] sm:$0xf] %v768
          %801 = vst [vmem:[%s353 + $0x4] sm:$0xf] %v769
          %802 = vst [vmem:[%s353 + $0x8] sm:$0xf] %v770
          %803 = vst [vmem:[%s353 + $0xc] sm:$0xf] %v771
          %804 = vst [vmem:[%s353 + $0x10] sm:$0xf] %v772
          %805 = vst [vmem:[%s353 + $0x14] sm:$0xf] %v773
          %806 = vst [vmem:[%s353 + $0x18] sm:$0xf] %v774
          %807 = vst [vmem:[%s353 + $0x1c] sm:$0xf] %v775
          %808 = vst [vmem:[%s353 + $0x20] sm:$0xf] %v776
          %809 = vst [vmem:[%s353 + $0x24] sm:$0xf] %v777
          %810 = vst [vmem:[%s353 + $0x28] sm:$0xf] %v778
          %811 = vst [vmem:[%s353 + $0x2c] sm:$0xf] %v779
          %812 = vst [vmem:[%s353 + $0x30] sm:$0xf] %v780
          %813 = vst [vmem:[%s353 + $0x34] sm:$0xf] %v781
          %814 = vst [vmem:[%s353 + $0x38] sm:$0xf] %v782
          %815 = vst [vmem:[%s353 + $0x3c] sm:$0xf] %v783
        $region81: #{lightgcn_forward.10} parent=68 // pred_fallthru
          _
        %s816 = smul.u32 16, %s23
        %p817 = scmp.lt.s32.totalorder %s816, 31
        %s818 = scalar_select %p817, %s816, 31
        %s819 = smul.addr %s818, 8
        %s820 = scalar_lea.vmem %s3, %s819
        %s821 = sand.u32 %s145, 1
        %s822 = scalar_lea.sflag [#allocation5], %s821
        %s823 = sand.u32 %s145, 1
        %s824 = smul.addr %s823, 64
        %s825 = scalar_lea.vmem [#allocation4], %s824
        // Predicated region
        $region82: #{lightgcn_forward.10} parent=68 // pred_check
          %p826 = pneg %p129
        $region83: #{lightgcn_forward.10} parent=68 // pred_check_branch
          %828 = sbr.rel (%p826) target = $region85
        $region84: #{lightgcn_forward.10} parent=68 // pred_region
          %s829 = smul.u32 16, %s23
        $region85: #{lightgcn_forward.10} parent=68 // pred_fallthru
          _
        // Predicated region
        $region86: #{lightgcn_forward.10} parent=68 // pred_check
          %p830 = pneg %p155
        $region87: #{lightgcn_forward.10} parent=68 // pred_check_branch
          %832 = sbr.rel (%p830) target = $region89
        $region88: #{lightgcn_forward.10} parent=68 // pred_region
          %s833 = smul.u32 16, %s23
          %s835 = ssub.s32 1024, 1024
          %836 = vsyncadd %s822, %s835
          %s837 = smul.addr %s833, 64
          %s838 = scalar_lea.hbm %s4, %s837
          %s839 = sshll.u32 %s825, 4
          %s840 = int_to_ptr.vmem [resolvable:$true] %s839
          %845 = dma.vmem_to_hbm [thread:$0]  %s840, 1024, %s838, %s822, 64, 64, 4
        $region89: #{lightgcn_forward.10} parent=68 // pred_fallthru
          _
      $region69: #{lightgcn_forward.10} parent=5 // pred_fallthru
        _
      %p846 = scmp.le.s32.totalorder 2, %s14
      // Predicated region
      $region90: #{lightgcn_forward.10} parent=5 // pred_check
        %p847 = pneg %p846
      $region91: #{lightgcn_forward.10} parent=5 // pred_check_branch
        %849 = sbr.rel (%p847) target = $region93
      $region92: #{lightgcn_forward.10} parent=5 // pred_region
        %s850 = ssub.s32 %s14, 2
        // Predicated region
        $region94: #{lightgcn_forward.10} parent=92 // pred_check
          %p851 = pneg %p135
        $region95: #{lightgcn_forward.10} parent=92 // pred_check_branch
          %853 = sbr.rel (%p851) target = $region97
        $region96: #{lightgcn_forward.10} parent=92 // pred_region
          %s854 = smul.u32 16, %s25
          %p855 = scmp.lt.s32.totalorder %s854, 31
          %s856 = scalar_select %p855, %s854, 31
          %s857 = smul.addr %s856, 8
          %s858 = scalar_lea.vmem %s3, %s857
        $region97: #{lightgcn_forward.10} parent=92 // pred_fallthru
          _
        // Predicated region
        $region98: #{lightgcn_forward.10} parent=92 // pred_check
          %p859 = pneg %p161
        $region99: #{lightgcn_forward.10} parent=92 // pred_check_branch
          %861 = sbr.rel (%p859) target = $region101
        $region100: #{lightgcn_forward.10} parent=92 // pred_region
          %s862 = sand.u32 %s146, 1
          %s863 = scalar_lea.sflag [#allocation5], %s862
          %s864 = sand.u32 %s146, 1
          %s865 = smul.addr %s864, 64
          %s866 = scalar_lea.vmem [#allocation4], %s865
          %867 = dma.done %s863, 1024
        $region101: #{lightgcn_forward.10} parent=92 // pred_fallthru
          _
      $region93: #{lightgcn_forward.10} parent=5 // pred_fallthru
        _
    $region6: #{lightgcn_forward.10} parent=1 // loop_footer
      %s18 = sadd.s32 1, %s14
    $region7: #{lightgcn_forward.10} parent=1 // loop_footer_branch
      %13 = sbr.rel target = $region3
    $region8: #{lightgcn_forward.10} parent=1 // loop_exit
      _
    %868 = vsyncpa [#allocation5], 1
    %s869 = scalar_lea.sflag [#allocation5], 1
    %870 = vsyncpa %s869, 1

// kernel: lightgcn_forward.11
$region0: #{lightgcn_forward.11}
  #allocation0 [shape = 'u32[]', space=smem, size = 0x4, offset = 0x4, fixed_abs, tag = 'smem constant byte address 0x4 - core index']
  #allocation1 [shape = 'u32[144,128]{1,0:T(1,128)}', space=vmem, size = 0x12000, scoped, tag = 'internal scratch']
  #allocation2 [shape = 'f32[128,128]{1,0:T(8,128)}', space=vmem, size = 0x10000, scoped, tag = 'scratch operand']
  %s0 = inlined_call_operand.vmem [shape: bf16[256,256], index: 0, kind: input, shape index: {}]
  %s1 = inlined_call_operand.vmem [shape: bf16[256,128], index: 1, kind: input, shape index: {}]
  %s2 = inlined_call_operand.vmem [shape: f32[256,128], index: 2, kind: input, shape index: {}, may-alias: {2,3}]
  %s3 = inlined_call_operand.vmem [shape: f32[256,128], index: 3, kind: output, shape index: {0}, may-alias: {2,3}]
  %s4 = inlined_call_operand.hbm [shape: bf16[256,128], index: 4, kind: output, shape index: {1}]
  %5 = xla_tuple %s3, %s4
  %s6 = sld [smem:[#allocation0]]
  $region102: #{lightgcn_forward.11} parent=0
    _
  %s8 = ssub.s32 1, %s6
  %s9 = scalar_select 0, %s8, %s6
  $region1: #{lightgcn_forward.11} parent=0
    #allocation3 [shape = 'u8[65536]{0}', space=vmem, size = 0x10000, scoped, tag = 'input window, operand 0']
    #allocation4 [shape = 'u8[65536]{0}', space=vmem, size = 0x10000, scoped, tag = 'output window, operand 1']
    #allocation5 [shape = 's32[2]{0}', space=sflag, size = 0x8, scoped, tag = 'scoped memory for lightgcn_forward.11']
    %10 = vsyncpa [#allocation5], 0
    %s11 = scalar_lea.sflag [#allocation5], 1
    %12 = vsyncpa %s11, 0
    loop: start=0, step=1, limit=6
    $region2: #{lightgcn_forward.11} parent=1 // loop_pre_header
      _
    $region3: #{lightgcn_forward.11} parent=1 // loop_header
      %s14 = sphi 0, %s18
      %p15 = scmp.ge.s32.totalorder %s14, 6
      %s21 = sphi 0, %s33
      %s22 = sphi 0, %s29
      %s23 = sphi 0, %s21
      %s24 = sphi 0, %s22
      %s25 = sphi 0, %s23
      %s26 = sphi 0, %s24
      %s38 = sphi 0, %s40
      %s41 = sphi 0, %s38
      %s42 = sphi 0, %s41
      %s58 = sphi 0, %s42
      %s64 = sphi 0, %s66
      %s67 = sphi 0, %s64
      %s68 = sphi 0, %s67
      %s84 = sphi 0, %s68
      %s90 = sphi 0, %s92
      %s93 = sphi 0, %s90
      %s94 = sphi 0, %s93
      %s110 = sphi 0, %s94
      %s116 = sphi 0, %s118
      %s119 = sphi 0, %s116
      %s120 = sphi 0, %s119
      %s136 = sphi 0, %s120
      %s142 = sphi 0, %s144
      %s145 = sphi 0, %s142
      %s146 = sphi 0, %s145
      %s162 = sphi 0, %s146
    $region4: #{lightgcn_forward.11} parent=1 // loop_header_branch
      %17 = sbr.rel (%p15) target = $region8
    $region5: #{lightgcn_forward.11} parent=1 // loop_body
      %s19 = ssub.s32 %s14, 1
      %s20 = ssub.s32 %s14, 2
      %s27 = sadd.s32 1, %s22
      %p28 = scmp.ge.s32.totalorder %s27, 2
      %s29 = scalar_select %p28, 0, %s27
      %s30 = sadd.s32 1, %s21
      %s31 = scalar_select %p28, %s30, %s21
      %p32 = scmp.ge.s32.totalorder %s31, 2
      %s33 = scalar_select %p32, 0, %s31
      %s34 = ssub.s32 %s22, %s29
      %s35 = ssub.s32 %s21, %s33
      %s36 = sor.u32 %s34, %s35
      %p37 = scmp.eq.s32.totalorder %s36, 0
      %s39 = sadd.s32 %s38, 1
      %s40 = scalar_select %p37, %s38, %s39
      %p43 = pneg %p37
      %p44 = scmp.eq.s32.totalorder %s14, 3
      %p45 = por %p43, %p44
      %p46 = scmp.ne.s32.totalorder %s38, %s41
      %p47 = scmp.eq.s32.totalorder %s14, 0
      %p48 = por %p46, %p47
      %p49 = scmp.ne.s32.totalorder %s38, %s41
      %p50 = scmp.eq.s32.totalorder %s19, 3
      %p51 = por %p49, %p50
      %p52 = scmp.ne.s32.totalorder %s41, %s42
      %p53 = scmp.eq.s32.totalorder %s19, 0
      %p54 = por %p52, %p53
      %p55 = scmp.ne.s32.totalorder %s41, %s42
      %p56 = scmp.eq.s32.totalorder %s20, 3
      %p57 = por %p55, %p56
      %p59 = scmp.ne.s32.totalorder %s42, %s58
      %p60 = scmp.eq.s32.totalorder %s20, 0
      %p61 = por %p59, %p60
      %s62 = ssub.s32 %s22, %s29
      %p63 = scmp.eq.s32.totalorder %s62, 0
      %s65 = sadd.s32 %s64, 1
      %s66 = scalar_select %p63, %s64, %s65
      %p69 = pneg %p63
      %p70 = scmp.eq.s32.totalorder %s14, 3
      %p71 = por %p69, %p70
      %p72 = scmp.ne.s32.totalorder %s64, %s67
      %p73 = scmp.eq.s32.totalorder %s14, 0
      %p74 = por %p72, %p73
      %p75 = scmp.ne.s32.totalorder %s64, %s67
      %p76 = scmp.eq.s32.totalorder %s19, 3
      %p77 = por %p75, %p76
      %p78 = scmp.ne.s32.totalorder %s67, %s68
      %p79 = scmp.eq.s32.totalorder %s19, 0
      %p80 = por %p78, %p79
      %p81 = scmp.ne.s32.totalorder %s67, %s68
      %p82 = scmp.eq.s32.totalorder %s20, 3
      %p83 = por %p81, %p82
      %p85 = scmp.ne.s32.totalorder %s68, %s84
      %p86 = scmp.eq.s32.totalorder %s20, 0
      %p87 = por %p85, %p86
      %s88 = ssub.s32 %s21, %s33
      %p89 = scmp.eq.s32.totalorder %s88, 0
      %s91 = sadd.s32 %s90, 1
      %s92 = scalar_select %p89, %s90, %s91
      %p95 = pneg %p89
      %p96 = scmp.eq.s32.totalorder %s14, 3
      %p97 = por %p95, %p96
      %p98 = scmp.ne.s32.totalorder %s90, %s93
      %p99 = scmp.eq.s32.totalorder %s14, 0
      %p100 = por %p98, %p99
      %p101 = scmp.ne.s32.totalorder %s90, %s93
      %p102 = scmp.eq.s32.totalorder %s19, 3
      %p103 = por %p101, %p102
      %p104 = scmp.ne.s32.totalorder %s93, %s94
      %p105 = scmp.eq.s32.totalorder %s19, 0
      %p106 = por %p104, %p105
      %p107 = scmp.ne.s32.totalorder %s93, %s94
      %p108 = scmp.eq.s32.totalorder %s20, 3
      %p109 = por %p107, %p108
      %p111 = scmp.ne.s32.totalorder %s94, %s110
      %p112 = scmp.eq.s32.totalorder %s20, 0
      %p113 = por %p111, %p112
      %s114 = ssub.s32 %s21, %s33
      %p115 = scmp.eq.s32.totalorder %s114, 0
      %s117 = sadd.s32 %s116, 1
      %s118 = scalar_select %p115, %s116, %s117
      %p121 = pneg %p115
      %p122 = scmp.eq.s32.totalorder %s14, 3
      %p123 = por %p121, %p122
      %p124 = scmp.ne.s32.totalorder %s116, %s119
      %p125 = scmp.eq.s32.totalorder %s14, 0
      %p126 = por %p124, %p125
      %p127 = scmp.ne.s32.totalorder %s116, %s119
      %p128 = scmp.eq.s32.totalorder %s19, 3
      %p129 = por %p127, %p128
      %p130 = scmp.ne.s32.totalorder %s119, %s120
      %p131 = scmp.eq.s32.totalorder %s19, 0
      %p132 = por %p130, %p131
      %p133 = scmp.ne.s32.totalorder %s119, %s120
      %p134 = scmp.eq.s32.totalorder %s20, 3
      %p135 = por %p133, %p134
      %p137 = scmp.ne.s32.totalorder %s120, %s136
      %p138 = scmp.eq.s32.totalorder %s20, 0
      %p139 = por %p137, %p138
      %s140 = ssub.s32 %s21, %s33
      %p141 = scmp.eq.s32.totalorder %s140, 0
      %s143 = sadd.s32 %s142, 1
      %s144 = scalar_select %p141, %s142, %s143
      %p147 = pneg %p141
      %p148 = scmp.eq.s32.totalorder %s14, 3
      %p149 = por %p147, %p148
      %p150 = scmp.ne.s32.totalorder %s142, %s145
      %p151 = scmp.eq.s32.totalorder %s14, 0
      %p152 = por %p150, %p151
      %p153 = scmp.ne.s32.totalorder %s142, %s145
      %p154 = scmp.eq.s32.totalorder %s19, 3
      %p155 = por %p153, %p154
      %p156 = scmp.ne.s32.totalorder %s145, %s146
      %p157 = scmp.eq.s32.totalorder %s19, 0
      %p158 = por %p156, %p157
      %p159 = scmp.ne.s32.totalorder %s145, %s146
      %p160 = scmp.eq.s32.totalorder %s20, 3
      %p161 = por %p159, %p160
      %p163 = scmp.ne.s32.totalorder %s146, %s162
      %p164 = scmp.eq.s32.totalorder %s20, 0
      %p165 = por %p163, %p164
      %p166 = scmp.le.s32.totalorder 1, %s14
      %p167 = scmp.lt.s32.totalorder %s14, 5
      %p168 = pnand %p166, %p167
      %p169 = pneg %p168
      // Predicated region
      $region9: #{lightgcn_forward.11} parent=5 // pred_check
        _
      $region10: #{lightgcn_forward.11} parent=5 // pred_check_branch
        %171 = sbr.rel (%p168) target = $region12
      $region11: #{lightgcn_forward.11} parent=5 // pred_region
        %s172 = ssub.s32 %s14, 1
      $region12: #{lightgcn_forward.11} parent=5 // pred_fallthru
        _
      %p173 = scmp.lt.s32.totalorder %s14, 4
      // Predicated region
      $region13: #{lightgcn_forward.11} parent=5 // pred_check
        %p174 = pneg %p173
      $region14: #{lightgcn_forward.11} parent=5 // pred_check_branch
        %176 = sbr.rel (%p174) target = $region16
      $region15: #{lightgcn_forward.11} parent=5 // pred_region
        // Predicated region
        $region17: #{lightgcn_forward.11} parent=15 // pred_check
          %p177 = pneg %p48
        $region18: #{lightgcn_forward.11} parent=15 // pred_check_branch
          %179 = sbr.rel (%p177) target = $region20
        $region19: #{lightgcn_forward.11} parent=15 // pred_region
          %s180 = sand.u32 %s38, 1
          %s181 = sand.u32 %s38, 1
          %s182 = smul.addr %s181, 64
          %s183 = scalar_lea.vmem [#allocation3], %s182
          %s184 = smul.u32 16, %s22
          %s185 = smul.addr %s184, 2
          %s186 = sadd.s32 %s21, %s185
          %s187 = smul.addr %s186, 4
          %s188 = scalar_lea.vmem %s0, %s187
          // Predicated region
          $region21: #{lightgcn_forward.11} parent=19 // pred_check
            _
          $region22: #{lightgcn_forward.11} parent=19 // pred_check_branch
            %190 = sbr.rel (0) target = $region24
          $region23: #{lightgcn_forward.11} parent=19 // pred_region
            // Predicated region
            $region25: #{lightgcn_forward.11} parent=23 // pred_check
              _
            $region26: #{lightgcn_forward.11} parent=23 // pred_check_branch
              %192 = sbr.rel target = $region28
            $region27: #{lightgcn_forward.11} parent=23 // pred_region
              // Predicated region
              $region40: #{lightgcn_forward.11} parent=27 // pred_check
                _
              $region41: #{lightgcn_forward.11} parent=27 // pred_check_branch
                %237 = sbr.rel (0) target = $region43
              $region42: #{lightgcn_forward.11} parent=27 // pred_region
                loop: start=0, step=1, limit=1
                $region44: #{lightgcn_forward.11} parent=42 // loop_pre_header
                  _
                $region45: #{lightgcn_forward.11} parent=42 // loop_header
                  %s239 = sphi 0, %s243
                  %p240 = scmp.ge.s32.totalorder %s239, 1
                  %s244 = sphi %s188, %s188
                  %s245 = sphi %s183, %s183
                $region46: #{lightgcn_forward.11} parent=42 // loop_header_branch
                  %242 = sbr.rel (%p240) target = $region50
                $region47: #{lightgcn_forward.11} parent=42 // loop_body
                  _
                $region48: #{lightgcn_forward.11} parent=42 // loop_footer
                  %s243 = sadd.s32 1, %s239
                $region49: #{lightgcn_forward.11} parent=42 // loop_footer_branch
                  %238 = sbr.rel target = $region45
                $region50: #{lightgcn_forward.11} parent=42 // loop_exit
                  _
                loop: start=0, step=1, limit=1
                $region51: #{lightgcn_forward.11} parent=42 // loop_pre_header
                  _
                $region52: #{lightgcn_forward.11} parent=42 // loop_header
                  %s248 = sphi 0, %s252
                  %p249 = scmp.ge.s32.totalorder %s248, 1
                  %s253 = sphi %s188, %s188
                  %s254 = sphi %s183, %s183
                $region53: #{lightgcn_forward.11} parent=42 // loop_header_branch
                  %251 = sbr.rel (%p249) target = $region57
                $region54: #{lightgcn_forward.11} parent=42 // loop_body
                  %v255 = vld [vmem:[%s253] sm:$0xf]
                  %256 = vst [vmem:[%s254] sm:$0xf] %v255
                  %v257 = vld [vmem:[%s253 + $0x8] sm:$0xf]
                  %258 = vst [vmem:[%s254 + $0x4] sm:$0xf] %v257
                  %v259 = vld [vmem:[%s253 + $0x10] sm:$0xf]
                  %260 = vst [vmem:[%s254 + $0x8] sm:$0xf] %v259
                  %v261 = vld [vmem:[%s253 + $0x18] sm:$0xf]
                  %262 = vst [vmem:[%s254 + $0xc] sm:$0xf] %v261
                  %v263 = vld [vmem:[%s253 + $0x20] sm:$0xf]
                  %264 = vst [vmem:[%s254 + $0x10] sm:$0xf] %v263
                  %v265 = vld [vmem:[%s253 + $0x28] sm:$0xf]
                  %266 = vst [vmem:[%s254 + $0x14] sm:$0xf] %v265
                  %v267 = vld [vmem:[%s253 + $0x30] sm:$0xf]
                  %268 = vst [vmem:[%s254 + $0x18] sm:$0xf] %v267
                  %v269 = vld [vmem:[%s253 + $0x38] sm:$0xf]
                  %270 = vst [vmem:[%s254 + $0x1c] sm:$0xf] %v269
                  %v271 = vld [vmem:[%s253 + $0x40] sm:$0xf]
                  %272 = vst [vmem:[%s254 + $0x20] sm:$0xf] %v271
                  %v273 = vld [vmem:[%s253 + $0x48] sm:$0xf]
                  %274 = vst [vmem:[%s254 + $0x24] sm:$0xf] %v273
                  %v275 = vld [vmem:[%s253 + $0x50] sm:$0xf]
                  %276 = vst [vmem:[%s254 + $0x28] sm:$0xf] %v275
                  %v277 = vld [vmem:[%s253 + $0x58] sm:$0xf]
                  %278 = vst [vmem:[%s254 + $0x2c] sm:$0xf] %v277
                  %v279 = vld [vmem:[%s253 + $0x60] sm:$0xf]
                  %280 = vst [vmem:[%s254 + $0x30] sm:$0xf] %v279
                  %v281 = vld [vmem:[%s253 + $0x68] sm:$0xf]
                  %282 = vst [vmem:[%s254 + $0x34] sm:$0xf] %v281
                  %v283 = vld [vmem:[%s253 + $0x70] sm:$0xf]
                  %284 = vst [vmem:[%s254 + $0x38] sm:$0xf] %v283
                  %v285 = vld [vmem:[%s253 + $0x78] sm:$0xf]
                  %286 = vst [vmem:[%s254 + $0x3c] sm:$0xf] %v285
                $region55: #{lightgcn_forward.11} parent=42 // loop_footer
                  %s252 = sadd.s32 1, %s248
                $region56: #{lightgcn_forward.11} parent=42 // loop_footer_branch
                  %247 = sbr.rel target = $region52
                $region57: #{lightgcn_forward.11} parent=42 // loop_exit
                  _
              $region43: #{lightgcn_forward.11} parent=27 // pred_fallthru
                _
            $region28: #{lightgcn_forward.11} parent=23 // pred_fallthru
              _
            // Predicated region
            $region29: #{lightgcn_forward.11} parent=23 // pred_check
              _
            $region30: #{lightgcn_forward.11} parent=23 // pred_check_branch
              %194 = sbr.rel (0) target = $region32
            $region31: #{lightgcn_forward.11} parent=23 // pred_region
              loop: start=0, step=1, limit=1
              $region33: #{lightgcn_forward.11} parent=31 // loop_pre_header
                _
              $region34: #{lightgcn_forward.11} parent=31 // loop_header
                %s197 = sphi 0, %s201
                %p198 = scmp.ge.s32.totalorder %s197, 1
                %s202 = sphi %s188, %s188
                %s203 = sphi %s183, %s183
              $region35: #{lightgcn_forward.11} parent=31 // loop_header_branch
                %200 = sbr.rel (%p198) target = $region39
              $region36: #{lightgcn_forward.11} parent=31 // loop_body
                %v204 = vld [vmem:[%s202] sm:$0xf]
                %205 = vst [vmem:[%s203] sm:$0xf] %v204
                %v206 = vld [vmem:[%s202 + $0x8] sm:$0xf]
                %207 = vst [vmem:[%s203 + $0x4] sm:$0xf] %v206
                %v208 = vld [vmem:[%s202 + $0x10] sm:$0xf]
                %209 = vst [vmem:[%s203 + $0x8] sm:$0xf] %v208
                %v210 = vld [vmem:[%s202 + $0x18] sm:$0xf]
                %211 = vst [vmem:[%s203 + $0xc] sm:$0xf] %v210
                %v212 = vld [vmem:[%s202 + $0x20] sm:$0xf]
                %213 = vst [vmem:[%s203 + $0x10] sm:$0xf] %v212
                %v214 = vld [vmem:[%s202 + $0x28] sm:$0xf]
                %215 = vst [vmem:[%s203 + $0x14] sm:$0xf] %v214
                %v216 = vld [vmem:[%s202 + $0x30] sm:$0xf]
                %217 = vst [vmem:[%s203 + $0x18] sm:$0xf] %v216
                %v218 = vld [vmem:[%s202 + $0x38] sm:$0xf]
                %219 = vst [vmem:[%s203 + $0x1c] sm:$0xf] %v218
                %v220 = vld [vmem:[%s202 + $0x40] sm:$0xf]
                %221 = vst [vmem:[%s203 + $0x20] sm:$0xf] %v220
                %v222 = vld [vmem:[%s202 + $0x48] sm:$0xf]
                %223 = vst [vmem:[%s203 + $0x24] sm:$0xf] %v222
                %v224 = vld [vmem:[%s202 + $0x50] sm:$0xf]
                %225 = vst [vmem:[%s203 + $0x28] sm:$0xf] %v224
                %v226 = vld [vmem:[%s202 + $0x58] sm:$0xf]
                %227 = vst [vmem:[%s203 + $0x2c] sm:$0xf] %v226
                %v228 = vld [vmem:[%s202 + $0x60] sm:$0xf]
                %229 = vst [vmem:[%s203 + $0x30] sm:$0xf] %v228
                %v230 = vld [vmem:[%s202 + $0x68] sm:$0xf]
                %231 = vst [vmem:[%s203 + $0x34] sm:$0xf] %v230
                %v232 = vld [vmem:[%s202 + $0x70] sm:$0xf]
                %233 = vst [vmem:[%s203 + $0x38] sm:$0xf] %v232
                %v234 = vld [vmem:[%s202 + $0x78] sm:$0xf]
                %235 = vst [vmem:[%s203 + $0x3c] sm:$0xf] %v234
              $region37: #{lightgcn_forward.11} parent=31 // loop_footer
                %s201 = sadd.s32 1, %s197
              $region38: #{lightgcn_forward.11} parent=31 // loop_footer_branch
                %196 = sbr.rel target = $region34
              $region39: #{lightgcn_forward.11} parent=31 // loop_exit
                _
            $region32: #{lightgcn_forward.11} parent=23 // pred_fallthru
              _
          $region24: #{lightgcn_forward.11} parent=19 // pred_fallthru
            _
          %287 = vnop
        $region20: #{lightgcn_forward.11} parent=15 // pred_fallthru
          _
        // Predicated region
        $region58: #{lightgcn_forward.11} parent=15 // pred_check
          %p288 = pneg %p74
        $region59: #{lightgcn_forward.11} parent=15 // pred_check_branch
          %290 = sbr.rel (%p288) target = $region61
        $region60: #{lightgcn_forward.11} parent=15 // pred_region
          %s291 = smul.u32 16, %s22
          %p292 = scmp.lt.s32.totalorder %s291, 31
          %s293 = scalar_select %p292, %s291, 31
          %s294 = smul.addr %s293, 4
          %s295 = scalar_lea.vmem %s1, %s294
          %s296 = smul.u32 16, %s22
        $region61: #{lightgcn_forward.11} parent=15 // pred_fallthru
          _
        // Predicated region
        $region62: #{lightgcn_forward.11} parent=15 // pred_check
          %p297 = pneg %p100
        $region63: #{lightgcn_forward.11} parent=15 // pred_check_branch
          %299 = sbr.rel (%p297) target = $region65
        $region64: #{lightgcn_forward.11} parent=15 // pred_region
          %s300 = smul.u32 16, %s21
          %p301 = scmp.lt.s32.totalorder %s300, 31
          %s302 = scalar_select %p301, %s300, 31
          %s303 = smul.addr %s302, 8
          %s304 = scalar_lea.vmem %s2, %s303
          %s305 = smul.u32 16, %s21
        $region65: #{lightgcn_forward.11} parent=15 // pred_fallthru
          _
      $region16: #{lightgcn_forward.11} parent=5 // pred_fallthru
        _
      %p306 = scmp.le.s32.totalorder 1, %s14
      %p307 = scmp.lt.s32.totalorder %s14, 5
      %p308 = pnand %p306, %p307
      %p309 = pneg %p308
      // Predicated region
      $region66: #{lightgcn_forward.11} parent=5 // pred_check
        _
      $region67: #{lightgcn_forward.11} parent=5 // pred_check_branch
        %311 = sbr.rel (%p308) target = $region69
      $region68: #{lightgcn_forward.11} parent=5 // pred_region
        %s312 = ssub.s32 %s14, 1
        %s313 = sand.u32 %s41, 1
        %s314 = sand.u32 %s41, 1
        %s315 = smul.addr %s314, 64
        %s316 = scalar_lea.vmem [#allocation3], %s315
        // Predicated region
        $region70: #{lightgcn_forward.11} parent=68 // pred_check
          %p317 = pneg %p54
        $region71: #{lightgcn_forward.11} parent=68 // pred_check_branch
          %319 = sbr.rel (%p317) target = $region73
        $region72: #{lightgcn_forward.11} parent=68 // pred_region
          _
        $region73: #{lightgcn_forward.11} parent=68 // pred_fallthru
          _
        %s320 = sand.u32 %s41, 1
        %s321 = sand.u32 %s41, 1
        %s322 = smul.addr %s321, 64
        %s323 = scalar_lea.vmem [#allocation3], %s322
        %p324 = pneg %p54
        %p325 = pneg %p51
        %s326 = smul.u32 16, %s24
        %p327 = scmp.lt.s32.totalorder %s326, 31
        %s328 = scalar_select %p327, %s326, 31
        %s329 = smul.addr %s328, 4
        %s330 = scalar_lea.vmem %s1, %s329
        %p331 = pneg %p80
        %p332 = pneg %p77
        %s333 = smul.u32 16, %s23
        %p334 = scmp.lt.s32.totalorder %s333, 31
        %s335 = scalar_select %p334, %s333, 31
        %s336 = smul.addr %s335, 8
        %s337 = scalar_lea.vmem %s2, %s336
        %p338 = pneg %p106
        %p339 = pneg %p103
        %p340 = pneg %p132
        %p341 = pneg %p129
        %s342 = smul.u32 16, %s23
        %p343 = scmp.lt.s32.totalorder %s342, 31
        %s344 = scalar_select %p343, %s342, 31
        %s345 = smul.addr %s344, 8
        %s346 = scalar_lea.vmem %s3, %s345
        %p347 = pneg %p158
        %p348 = pneg %p155
        %s349 = sand.u32 %s145, 1
        %s350 = scalar_lea.sflag [#allocation5], %s349
        %s351 = sand.u32 %s145, 1
        %s352 = smul.addr %s351, 64
        %s353 = scalar_lea.vmem [#allocation4], %s352
        %s354 = smul.u32 16, %s24
        %s355 = smul.u32 16, %s24
        %p356 = scmp.lt.s32.totalorder %s355, 31
        %s357 = scalar_select %p356, %s355, 31
        %s358 = smul.addr %s357, 4
        %s359 = scalar_lea.vmem %s1, %s358
        %s360 = smul.u32 16, %s24
        %s361 = smul.u32 16, %s23
        %p362 = scmp.lt.s32.totalorder %s361, 31
        %s363 = scalar_select %p362, %s361, 31
        %s364 = smul.addr %s363, 8
        %s365 = scalar_lea.vmem %s2, %s364
        %s366 = smul.u32 16, %s23
        %s367 = smul.u32 16, %s23
        %p368 = scmp.lt.s32.totalorder %s367, 31
        %s369 = scalar_select %p368, %s367, 31
        %s370 = smul.addr %s369, 8
        %s371 = scalar_lea.vmem %s3, %s370
        %s372 = smul.u32 16, %s23
        %s373 = smul.u32 16, %s23
        %p375 = scmp.eq.s32.totalorder %s24, 0
        // Predicated region
        $region74: #{lightgcn_forward.11} parent=68 // pred_check
          %p376 = pneg %p375
        $region75: #{lightgcn_forward.11} parent=68 // pred_check_branch
          %378 = sbr.rel (%p376) target = $region77
        $region76: #{lightgcn_forward.11} parent=68 // pred_region
          %379 = vst [vmem:[#allocation2] sm:$0xff] 0.0
          %380 = vst [vmem:[#allocation2 + $0x8] sm:$0xff] 0.0
          %381 = vst [vmem:[#allocation2 + $0x10] sm:$0xff] 0.0
          %382 = vst [vmem:[#allocation2 + $0x18] sm:$0xff] 0.0
          %383 = vst [vmem:[#allocation2 + $0x20] sm:$0xff] 0.0
          %384 = vst [vmem:[#allocation2 + $0x28] sm:$0xff] 0.0
          %385 = vst [vmem:[#allocation2 + $0x30] sm:$0xff] 0.0
          %386 = vst [vmem:[#allocation2 + $0x38] sm:$0xff] 0.0
          %387 = vst [vmem:[#allocation2 + $0x40] sm:$0xff] 0.0
          %388 = vst [vmem:[#allocation2 + $0x48] sm:$0xff] 0.0
          %389 = vst [vmem:[#allocation2 + $0x50] sm:$0xff] 0.0
          %390 = vst [vmem:[#allocation2 + $0x58] sm:$0xff] 0.0
          %391 = vst [vmem:[#allocation2 + $0x60] sm:$0xff] 0.0
          %392 = vst [vmem:[#allocation2 + $0x68] sm:$0xff] 0.0
          %393 = vst [vmem:[#allocation2 + $0x70] sm:$0xff] 0.0
          %394 = vst [vmem:[#allocation2 + $0x78] sm:$0xff] 0.0
        $region77: #{lightgcn_forward.11} parent=68 // pred_fallthru
          _
        %v395 = vld [vmem:[%s316] sm:$0xf]
        %v396 = vld [vmem:[%s316 + $0x4] sm:$0xf]
        %v397 = vld [vmem:[%s316 + $0x8] sm:$0xf]
        %v398 = vld [vmem:[%s316 + $0xc] sm:$0xf]
        %v399 = vld [vmem:[%s316 + $0x10] sm:$0xf]
        %v400 = vld [vmem:[%s316 + $0x14] sm:$0xf]
        %v401 = vld [vmem:[%s316 + $0x18] sm:$0xf]
        %v402 = vld [vmem:[%s316 + $0x1c] sm:$0xf]
        %v403 = vld [vmem:[%s316 + $0x20] sm:$0xf]
        %v404 = vld [vmem:[%s316 + $0x24] sm:$0xf]
        %v405 = vld [vmem:[%s316 + $0x28] sm:$0xf]
        %v406 = vld [vmem:[%s316 + $0x2c] sm:$0xf]
        %v407 = vld [vmem:[%s316 + $0x30] sm:$0xf]
        %v408 = vld [vmem:[%s316 + $0x34] sm:$0xf]
        %v409 = vld [vmem:[%s316 + $0x38] sm:$0xf]
        %v410 = vld [vmem:[%s316 + $0x3c] sm:$0xf]
        %v411 = vld [vmem:[%s359] sm:$0xf]
        %v412 = vld [vmem:[%s359 + $0x4] sm:$0xf]
        %v413 = vld [vmem:[%s359 + $0x8] sm:$0xf]
        %v414 = vld [vmem:[%s359 + $0xc] sm:$0xf]
        %v415 = vld [vmem:[%s359 + $0x10] sm:$0xf]
        %v416 = vld [vmem:[%s359 + $0x14] sm:$0xf]
        %v417 = vld [vmem:[%s359 + $0x18] sm:$0xf]
        %v418 = vld [vmem:[%s359 + $0x1c] sm:$0xf]
        %v419 = vld [vmem:[%s359 + $0x20] sm:$0xf]
        %v420 = vld [vmem:[%s359 + $0x24] sm:$0xf]
        %v421 = vld [vmem:[%s359 + $0x28] sm:$0xf]
        %v422 = vld [vmem:[%s359 + $0x2c] sm:$0xf]
        %v423 = vld [vmem:[%s359 + $0x30] sm:$0xf]
        %v424 = vld [vmem:[%s359 + $0x34] sm:$0xf]
        %v425 = vld [vmem:[%s359 + $0x38] sm:$0xf]
        %v426 = vld [vmem:[%s359 + $0x3c] sm:$0xf]
        %v443 = vunpack.c.l.b16 %v395
        %v444 = vunpack.c.l.b16 %v396
        %v445 = vunpack.c.l.b16 %v397
        %v446 = vunpack.c.l.b16 %v398
        %v447 = vunpack.c.l.b16 %v399
        %v448 = vunpack.c.l.b16 %v400
        %v449 = vunpack.c.l.b16 %v401
        %v450 = vunpack.c.l.b16 %v402
        %v451 = vunpack.c.l.b16 %v403
        %v452 = vunpack.c.l.b16 %v404
        %v453 = vunpack.c.l.b16 %v405
        %v454 = vunpack.c.l.b16 %v406
        %v455 = vunpack.c.l.b16 %v407
        %v456 = vunpack.c.l.b16 %v408
        %v457 = vunpack.c.l.b16 %v409
        %v458 = vunpack.c.l.b16 %v410
        %v459 = vpack.c.b16 %v444, %v443
        %v460 = vpack.c.b16 %v446, %v445
        %v461 = vpack.c.b16 %v448, %v447
        %v462 = vpack.c.b16 %v450, %v449
        %v463 = vpack.c.b16 %v452, %v451
        %v464 = vpack.c.b16 %v454, %v453
        %v465 = vpack.c.b16 %v456, %v455
        %v466 = vpack.c.b16 %v458, %v457
        %475 = vxpose.xlu0.c.b16.start [1/8] %v459, 128
        %476 = vxpose.xlu0.c.b16.cont [2/8] %v460, 128
        %477 = vxpose.xlu0.c.b16.cont [3/8] %v461, 128
        %478 = vxpose.xlu0.c.b16.cont [4/8] %v462, 128
        %479 = vxpose.xlu0.c.b16.cont [5/8] %v463, 128
        %480 = vxpose.xlu0.c.b16.cont [6/8] %v464, 128
        %481 = vxpose.xlu0.c.b16.cont [7/8] %v465, 128
        %482 = vxpose.xlu0.c.b16.end [8/8] %v466, 128
        %v483 = vpop.trf.xlu0
        %v484 = vpop.trf.xlu0
        %v485 = vpop.trf.xlu0
        %v486 = vpop.trf.xlu0
        %v487 = vpop.trf.xlu0
        %v488 = vpop.trf.xlu0
        %v489 = vpop.trf.xlu0
        %v490 = vpop.trf.xlu0
        %v507 = vunpack.c.l.b16 %v411
        %v508 = vunpack.c.l.b16 %v412
        %v509 = vunpack.c.l.b16 %v413
        %v510 = vunpack.c.l.b16 %v414
        %v511 = vunpack.c.l.b16 %v415
        %v512 = vunpack.c.l.b16 %v416
        %v513 = vunpack.c.l.b16 %v417
        %v514 = vunpack.c.l.b16 %v418
        %v515 = vunpack.c.l.b16 %v419
        %v516 = vunpack.c.l.b16 %v420
        %v517 = vunpack.c.l.b16 %v421
        %v518 = vunpack.c.l.b16 %v422
        %v519 = vunpack.c.l.b16 %v423
        %v520 = vunpack.c.l.b16 %v424
        %v521 = vunpack.c.l.b16 %v425
        %v522 = vunpack.c.l.b16 %v426
        %v523 = vpack.c.b16 %v508, %v507
        %v524 = vpack.c.b16 %v510, %v509
        %v525 = vpack.c.b16 %v512, %v511
        %v526 = vpack.c.b16 %v514, %v513
        %v527 = vpack.c.b16 %v516, %v515
        %v528 = vpack.c.b16 %v518, %v517
        %v529 = vpack.c.b16 %v520, %v519
        %v530 = vpack.c.b16 %v522, %v521
        %539 = vmatprep.subr.bf16.mxu0 0
        %540 = vmatpush1.bf16.msra.mxu0 %v523
        %541 = vmatprep.subr.bf16.mxu0 0
        %542 = vmatpush1.bf16.msra.mxu0 %v524
        %543 = vmatprep.subr.bf16.mxu0 0
        %544 = vmatpush1.bf16.msra.mxu0 %v525
        %545 = vmatprep.subr.bf16.mxu0 0
        %546 = vmatpush1.bf16.msra.mxu0 %v526
        %547 = vmatprep.subr.bf16.mxu0 0
        %548 = vmatpush1.bf16.msra.mxu0 %v527
        %549 = vmatprep.subr.bf16.mxu0 0
        %550 = vmatpush1.bf16.msra.mxu0 %v528
        %551 = vmatprep.subr.bf16.mxu0 0
        %552 = vmatpush1.bf16.msra.mxu0 %v529
        %553 = vmatprep.subr.bf16.mxu0 0
        %554 = vmatpush1.bf16.msra.mxu0 %v530
        %555 = vmatprep.subr.bf16.mxu0 0
        %556 = vmatpush1.bf16.msra.mxu0 0
        %557 = vmatprep.subr.bf16.mxu0 0
        %558 = vmatpush1.bf16.msra.mxu0 0
        %559 = vmatprep.subr.bf16.mxu0 0
        %560 = vmatpush1.bf16.msra.mxu0 0
        %561 = vmatprep.subr.bf16.mxu0 0
        %562 = vmatpush1.bf16.msra.mxu0 0
        %563 = vmatprep.subr.bf16.mxu0 0
        %564 = vmatpush1.bf16.msra.mxu0 0
        %565 = vmatprep.subr.bf16.mxu0 0
        %566 = vmatpush1.bf16.msra.mxu0 0
        %567 = vmatprep.subr.bf16.mxu0 0
        %568 = vmatpush1.bf16.msra.mxu0 0
        %569 = vmatprep.subr.bf16.mxu0 0
        %570 = vmatpush1.bf16.msra.mxu0 0
        %571 = vmatprep.mubr.bf16.mxu0 0
        %572 = vmatmul.mubr.bf16.gmra.mrb[0].mxu0 %v483
        %v573 = vpop.f32.mrb[0].mxu0
        %v574 = vadd.f32 0.0, %v573
        %v575 = vpop.f32.mrb[0].mxu0
        %v576 = vpop.f32.mrb[0].mxu0
        %v577 = vadd.f32 0.0, %v576
        %v578 = vpop.f32.mrb[0].mxu0
        %579 = vmatprep.mubr.bf16.mxu0 0
        %580 = vmatmul.mubr.bf16.gmra.mrb[0].mxu0 %v484
        %v581 = vpop.f32.mrb[0].mxu0
        %v582 = vadd.f32 0.0, %v581
        %v583 = vpop.f32.mrb[0].mxu0
        %v584 = vpop.f32.mrb[0].mxu0
        %v585 = vadd.f32 0.0, %v584
        %v586 = vpop.f32.mrb[0].mxu0
        %587 = vmatprep.mubr.bf16.mxu0 0
        %588 = vmatmul.mubr.bf16.gmra.mrb[0].mxu0 %v485
        %v589 = vpop.f32.mrb[0].mxu0
        %v590 = vadd.f32 0.0, %v589
        %v591 = vpop.f32.mrb[0].mxu0
        %v592 = vpop.f32.mrb[0].mxu0
        %v593 = vadd.f32 0.0, %v592
        %v594 = vpop.f32.mrb[0].mxu0
        %595 = vmatprep.mubr.bf16.mxu0 0
        %596 = vmatmul.mubr.bf16.gmra.mrb[0].mxu0 %v486
        %v597 = vpop.f32.mrb[0].mxu0
        %v598 = vadd.f32 0.0, %v597
        %v599 = vpop.f32.mrb[0].mxu0
        %v600 = vpop.f32.mrb[0].mxu0
        %v601 = vadd.f32 0.0, %v600
        %v602 = vpop.f32.mrb[0].mxu0
        %603 = vmatprep.mubr.bf16.mxu0 0
        %604 = vmatmul.mubr.bf16.gmra.mrb[0].mxu0 %v487
        %v605 = vpop.f32.mrb[0].mxu0
        %v606 = vadd.f32 0.0, %v605
        %v607 = vpop.f32.mrb[0].mxu0
        %v608 = vpop.f32.mrb[0].mxu0
        %v609 = vadd.f32 0.0, %v608
        %v610 = vpop.f32.mrb[0].mxu0
        %611 = vmatprep.mubr.bf16.mxu0 0
        %612 = vmatmul.mubr.bf16.gmra.mrb[0].mxu0 %v488
        %v613 = vpop.f32.mrb[0].mxu0
        %v614 = vadd.f32 0.0, %v613
        %v615 = vpop.f32.mrb[0].mxu0
        %v616 = vpop.f32.mrb[0].mxu0
        %v617 = vadd.f32 0.0, %v616
        %v618 = vpop.f32.mrb[0].mxu0
        %619 = vmatprep.mubr.bf16.mxu0 0
        %620 = vmatmul.mubr.bf16.gmra.mrb[0].mxu0 %v489
        %v621 = vpop.f32.mrb[0].mxu0
        %v622 = vadd.f32 0.0, %v621
        %v623 = vpop.f32.mrb[0].mxu0
        %v624 = vpop.f32.mrb[0].mxu0
        %v625 = vadd.f32 0.0, %v624
        %v626 = vpop.f32.mrb[0].mxu0
        %627 = vmatprep.mubr.bf16.mxu0 0
        %628 = vmatmul.mubr.bf16.gmra.mrb[0].mxu0 %v490
        %v629 = vpop.f32.mrb[0].mxu0
        %v630 = vadd.f32 0.0, %v629
        %v631 = vpop.f32.mrb[0].mxu0
        %v632 = vpop.f32.mrb[0].mxu0
        %v633 = vadd.f32 0.0, %v632
        %v634 = vpop.f32.mrb[0].mxu0
        %635 = vdwg.mxu0
        %v636 = vld [vmem:[#allocation2] sm:$0xff]
        %v637 = vld [vmem:[#allocation2 + $0x8] sm:$0xff]
        %v638 = vld [vmem:[#allocation2 + $0x10] sm:$0xff]
        %v639 = vld [vmem:[#allocation2 + $0x18] sm:$0xff]
        %v640 = vld [vmem:[#allocation2 + $0x20] sm:$0xff]
        %v641 = vld [vmem:[#allocation2 + $0x28] sm:$0xff]
        %v642 = vld [vmem:[#allocation2 + $0x30] sm:$0xff]
        %v643 = vld [vmem:[#allocation2 + $0x38] sm:$0xff]
        %v644 = vld [vmem:[#allocation2 + $0x40] sm:$0xff]
        %v645 = vld [vmem:[#allocation2 + $0x48] sm:$0xff]
        %v646 = vld [vmem:[#allocation2 + $0x50] sm:$0xff]
        %v647 = vld [vmem:[#allocation2 + $0x58] sm:$0xff]
        %v648 = vld [vmem:[#allocation2 + $0x60] sm:$0xff]
        %v649 = vld [vmem:[#allocation2 + $0x68] sm:$0xff]
        %v650 = vld [vmem:[#allocation2 + $0x70] sm:$0xff]
        %v651 = vld [vmem:[#allocation2 + $0x78] sm:$0xff]
        %v652 = vadd.f32 %v636, %v574
        %v653 = vadd.f32 %v637, %v577
        %v654 = vadd.f32 %v638, %v582
        %v655 = vadd.f32 %v639, %v585
        %v656 = vadd.f32 %v640, %v590
        %v657 = vadd.f32 %v641, %v593
        %v658 = vadd.f32 %v642, %v598
        %v659 = vadd.f32 %v643, %v601
        %v660 = vadd.f32 %v644, %v606
        %v661 = vadd.f32 %v645, %v609
        %v662 = vadd.f32 %v646, %v614
        %v663 = vadd.f32 %v647, %v617
        %v664 = vadd.f32 %v648, %v622
        %v665 = vadd.f32 %v649, %v625
        %v666 = vadd.f32 %v650, %v630
        %v667 = vadd.f32 %v651, %v633
        %668 = vst [vmem:[#allocation2] sm:$0xff] %v652
        %669 = vst [vmem:[#allocation2 + $0x8] sm:$0xff] %v653
        %670 = vst [vmem:[#allocation2 + $0x10] sm:$0xff] %v654
        %671 = vst [vmem:[#allocation2 + $0x18] sm:$0xff] %v655
        %672 = vst [vmem:[#allocation2 + $0x20] sm:$0xff] %v656
        %673 = vst [vmem:[#allocation2 + $0x28] sm:$0xff] %v657
        %674 = vst [vmem:[#allocation2 + $0x30] sm:$0xff] %v658
        %675 = vst [vmem:[#allocation2 + $0x38] sm:$0xff] %v659
        %676 = vst [vmem:[#allocation2 + $0x40] sm:$0xff] %v660
        %677 = vst [vmem:[#allocation2 + $0x48] sm:$0xff] %v661
        %678 = vst [vmem:[#allocation2 + $0x50] sm:$0xff] %v662
        %679 = vst [vmem:[#allocation2 + $0x58] sm:$0xff] %v663
        %680 = vst [vmem:[#allocation2 + $0x60] sm:$0xff] %v664
        %681 = vst [vmem:[#allocation2 + $0x68] sm:$0xff] %v665
        %682 = vst [vmem:[#allocation2 + $0x70] sm:$0xff] %v666
        %683 = vst [vmem:[#allocation2 + $0x78] sm:$0xff] %v667
        %p684 = scmp.eq.s32.totalorder %s24, 1
        // Predicated region
        $region78: #{lightgcn_forward.11} parent=68 // pred_check
          %p685 = pneg %p684
        $region79: #{lightgcn_forward.11} parent=68 // pred_check_branch
          %687 = sbr.rel (%p685) target = $region81
        $region80: #{lightgcn_forward.11} parent=68 // pred_region
          %v688 = vld [vmem:[#allocation2] sm:$0xff]
          %v689 = vld [vmem:[#allocation2 + $0x8] sm:$0xff]
          %v690 = vld [vmem:[#allocation2 + $0x10] sm:$0xff]
          %v691 = vld [vmem:[#allocation2 + $0x18] sm:$0xff]
          %v692 = vld [vmem:[#allocation2 + $0x20] sm:$0xff]
          %v693 = vld [vmem:[#allocation2 + $0x28] sm:$0xff]
          %v694 = vld [vmem:[#allocation2 + $0x30] sm:$0xff]
          %v695 = vld [vmem:[#allocation2 + $0x38] sm:$0xff]
          %v696 = vld [vmem:[#allocation2 + $0x40] sm:$0xff]
          %v697 = vld [vmem:[#allocation2 + $0x48] sm:$0xff]
          %v698 = vld [vmem:[#allocation2 + $0x50] sm:$0xff]
          %v699 = vld [vmem:[#allocation2 + $0x58] sm:$0xff]
          %v700 = vld [vmem:[#allocation2 + $0x60] sm:$0xff]
          %v701 = vld [vmem:[#allocation2 + $0x68] sm:$0xff]
          %v702 = vld [vmem:[#allocation2 + $0x70] sm:$0xff]
          %v703 = vld [vmem:[#allocation2 + $0x78] sm:$0xff]
          %v704 = vld [vmem:[%s365] sm:$0xff]
          %v705 = vld [vmem:[%s365 + $0x8] sm:$0xff]
          %v706 = vld [vmem:[%s365 + $0x10] sm:$0xff]
          %v707 = vld [vmem:[%s365 + $0x18] sm:$0xff]
          %v708 = vld [vmem:[%s365 + $0x20] sm:$0xff]
          %v709 = vld [vmem:[%s365 + $0x28] sm:$0xff]
          %v710 = vld [vmem:[%s365 + $0x30] sm:$0xff]
          %v711 = vld [vmem:[%s365 + $0x38] sm:$0xff]
          %v712 = vld [vmem:[%s365 + $0x40] sm:$0xff]
          %v713 = vld [vmem:[%s365 + $0x48] sm:$0xff]
          %v714 = vld [vmem:[%s365 + $0x50] sm:$0xff]
          %v715 = vld [vmem:[%s365 + $0x58] sm:$0xff]
          %v716 = vld [vmem:[%s365 + $0x60] sm:$0xff]
          %v717 = vld [vmem:[%s365 + $0x68] sm:$0xff]
          %v718 = vld [vmem:[%s365 + $0x70] sm:$0xff]
          %v719 = vld [vmem:[%s365 + $0x78] sm:$0xff]
          %v720 = vadd.f32 %v704, %v688
          %v721 = vadd.f32 %v705, %v689
          %v722 = vadd.f32 %v706, %v690
          %v723 = vadd.f32 %v707, %v691
          %v724 = vadd.f32 %v708, %v692
          %v725 = vadd.f32 %v709, %v693
          %v726 = vadd.f32 %v710, %v694
          %v727 = vadd.f32 %v711, %v695
          %v728 = vadd.f32 %v712, %v696
          %v729 = vadd.f32 %v713, %v697
          %v730 = vadd.f32 %v714, %v698
          %v731 = vadd.f32 %v715, %v699
          %v732 = vadd.f32 %v716, %v700
          %v733 = vadd.f32 %v717, %v701
          %v734 = vadd.f32 %v718, %v702
          %v735 = vadd.f32 %v719, %v703
          %736 = vst [vmem:[%s371] sm:$0xff] %v720
          %737 = vst [vmem:[%s371 + $0x8] sm:$0xff] %v721
          %738 = vst [vmem:[%s371 + $0x10] sm:$0xff] %v722
          %739 = vst [vmem:[%s371 + $0x18] sm:$0xff] %v723
          %740 = vst [vmem:[%s371 + $0x20] sm:$0xff] %v724
          %741 = vst [vmem:[%s371 + $0x28] sm:$0xff] %v725
          %742 = vst [vmem:[%s371 + $0x30] sm:$0xff] %v726
          %743 = vst [vmem:[%s371 + $0x38] sm:$0xff] %v727
          %744 = vst [vmem:[%s371 + $0x40] sm:$0xff] %v728
          %745 = vst [vmem:[%s371 + $0x48] sm:$0xff] %v729
          %746 = vst [vmem:[%s371 + $0x50] sm:$0xff] %v730
          %747 = vst [vmem:[%s371 + $0x58] sm:$0xff] %v731
          %748 = vst [vmem:[%s371 + $0x60] sm:$0xff] %v732
          %749 = vst [vmem:[%s371 + $0x68] sm:$0xff] %v733
          %750 = vst [vmem:[%s371 + $0x70] sm:$0xff] %v734
          %751 = vst [vmem:[%s371 + $0x78] sm:$0xff] %v735
          %v752 = vpack.c.bf16 %v689, %v688
          %v753 = vpack.c.bf16 %v691, %v690
          %v754 = vpack.c.bf16 %v693, %v692
          %v755 = vpack.c.bf16 %v695, %v694
          %v756 = vpack.c.bf16 %v697, %v696
          %v757 = vpack.c.bf16 %v699, %v698
          %v758 = vpack.c.bf16 %v701, %v700
          %v759 = vpack.c.bf16 %v703, %v702
          %v768 = vunpack.c.l.b16 %v752
          %v769 = vunpack.c.h.b16 %v752
          %v770 = vunpack.c.l.b16 %v753
          %v771 = vunpack.c.h.b16 %v753
          %v772 = vunpack.c.l.b16 %v754
          %v773 = vunpack.c.h.b16 %v754
          %v774 = vunpack.c.l.b16 %v755
          %v775 = vunpack.c.h.b16 %v755
          %v776 = vunpack.c.l.b16 %v756
          %v777 = vunpack.c.h.b16 %v756
          %v778 = vunpack.c.l.b16 %v757
          %v779 = vunpack.c.h.b16 %v757
          %v780 = vunpack.c.l.b16 %v758
          %v781 = vunpack.c.h.b16 %v758
          %v782 = vunpack.c.l.b16 %v759
          %v783 = vunpack.c.h.b16 %v759
          %v784 = vpack.c.b16 %v768, %v768
          %v785 = vpack.c.b16 %v769, %v769
          %v786 = vpack.c.b16 %v770, %v770
          %v787 = vpack.c.b16 %v771, %v771
          %v788 = vpack.c.b16 %v772, %v772
          %v789 = vpack.c.b16 %v773, %v773
          %v790 = vpack.c.b16 %v774, %v774
          %v791 = vpack.c.b16 %v775, %v775
          %v792 = vpack.c.b16 %v776, %v776
          %v793 = vpack.c.b16 %v777, %v777
          %v794 = vpack.c.b16 %v778, %v778
          %v795 = vpack.c.b16 %v779, %v779
          %v796 = vpack.c.b16 %v780, %v780
          %v797 = vpack.c.b16 %v781, %v781
          %v798 = vpack.c.b16 %v782, %v782
          %v799 = vpack.c.b16 %v783, %v783
          %816 = vst [vmem:[%s353] sm:$0xf] %v784
          %817 = vst [vmem:[%s353 + $0x4] sm:$0xf] %v785
          %818 = vst [vmem:[%s353 + $0x8] sm:$0xf] %v786
          %819 = vst [vmem:[%s353 + $0xc] sm:$0xf] %v787
          %820 = vst [vmem:[%s353 + $0x10] sm:$0xf] %v788
          %821 = vst [vmem:[%s353 + $0x14] sm:$0xf] %v789
          %822 = vst [vmem:[%s353 + $0x18] sm:$0xf] %v790
          %823 = vst [vmem:[%s353 + $0x1c] sm:$0xf] %v791
          %824 = vst [vmem:[%s353 + $0x20] sm:$0xf] %v792
          %825 = vst [vmem:[%s353 + $0x24] sm:$0xf] %v793
          %826 = vst [vmem:[%s353 + $0x28] sm:$0xf] %v794
          %827 = vst [vmem:[%s353 + $0x2c] sm:$0xf] %v795
          %828 = vst [vmem:[%s353 + $0x30] sm:$0xf] %v796
          %829 = vst [vmem:[%s353 + $0x34] sm:$0xf] %v797
          %830 = vst [vmem:[%s353 + $0x38] sm:$0xf] %v798
          %831 = vst [vmem:[%s353 + $0x3c] sm:$0xf] %v799
        $region81: #{lightgcn_forward.11} parent=68 // pred_fallthru
          _
        %s832 = smul.u32 16, %s23
        %p833 = scmp.lt.s32.totalorder %s832, 31
        %s834 = scalar_select %p833, %s832, 31
        %s835 = smul.addr %s834, 8
        %s836 = scalar_lea.vmem %s3, %s835
        %s837 = sand.u32 %s145, 1
        %s838 = scalar_lea.sflag [#allocation5], %s837
        %s839 = sand.u32 %s145, 1
        %s840 = smul.addr %s839, 64
        %s841 = scalar_lea.vmem [#allocation4], %s840
        // Predicated region
        $region82: #{lightgcn_forward.11} parent=68 // pred_check
          %p842 = pneg %p129
        $region83: #{lightgcn_forward.11} parent=68 // pred_check_branch
          %844 = sbr.rel (%p842) target = $region85
        $region84: #{lightgcn_forward.11} parent=68 // pred_region
          %s845 = smul.u32 16, %s23
        $region85: #{lightgcn_forward.11} parent=68 // pred_fallthru
          _
        // Predicated region
        $region86: #{lightgcn_forward.11} parent=68 // pred_check
          %p846 = pneg %p155
        $region87: #{lightgcn_forward.11} parent=68 // pred_check_branch
          %848 = sbr.rel (%p846) target = $region89
        $region88: #{lightgcn_forward.11} parent=68 // pred_region
          %s849 = smul.u32 16, %s23
          %s851 = ssub.s32 1024, 1024
          %852 = vsyncadd %s838, %s851
          %s853 = smul.addr %s849, 64
          %s854 = scalar_lea.hbm %s4, %s853
          %s855 = sshll.u32 %s841, 4
          %s856 = int_to_ptr.vmem [resolvable:$true] %s855
          %861 = dma.vmem_to_hbm [thread:$0]  %s856, 1024, %s854, %s838, 64, 64, 4
        $region89: #{lightgcn_forward.11} parent=68 // pred_fallthru
          _
      $region69: #{lightgcn_forward.11} parent=5 // pred_fallthru
        _
      %p862 = scmp.le.s32.totalorder 2, %s14
      // Predicated region
      $region90: #{lightgcn_forward.11} parent=5 // pred_check
        %p863 = pneg %p862
      $region91: #{lightgcn_forward.11} parent=5 // pred_check_branch
        %865 = sbr.rel (%p863) target = $region93
      $region92: #{lightgcn_forward.11} parent=5 // pred_region
        %s866 = ssub.s32 %s14, 2
        // Predicated region
        $region94: #{lightgcn_forward.11} parent=92 // pred_check
          %p867 = pneg %p135
        $region95: #{lightgcn_forward.11} parent=92 // pred_check_branch
          %869 = sbr.rel (%p867) target = $region97
        $region96: #{lightgcn_forward.11} parent=92 // pred_region
          %s870 = smul.u32 16, %s25
          %p871 = scmp.lt.s32.totalorder %s870, 31
          %s872 = scalar_select %p871, %s870, 31
          %s873 = smul.addr %s872, 8
          %s874 = scalar_lea.vmem %s3, %s873
        $region97: #{lightgcn_forward.11} parent=92 // pred_fallthru
          _
        // Predicated region
        $region98: #{lightgcn_forward.11} parent=92 // pred_check
          %p875 = pneg %p161
        $region99: #{lightgcn_forward.11} parent=92 // pred_check_branch
          %877 = sbr.rel (%p875) target = $region101
        $region100: #{lightgcn_forward.11} parent=92 // pred_region
          %s878 = sand.u32 %s146, 1
          %s879 = scalar_lea.sflag [#allocation5], %s878
          %s880 = sand.u32 %s146, 1
          %s881 = smul.addr %s880, 64
          %s882 = scalar_lea.vmem [#allocation4], %s881
          %883 = dma.done %s879, 1024
        $region101: #{lightgcn_forward.11} parent=92 // pred_fallthru
          _
      $region93: #{lightgcn_forward.11} parent=5 // pred_fallthru
        _
    $region6: #{lightgcn_forward.11} parent=1 // loop_footer
      %s18 = sadd.s32 1, %s14
    $region7: #{lightgcn_forward.11} parent=1 // loop_footer_branch
      %13 = sbr.rel target = $region3
    $region8: #{lightgcn_forward.11} parent=1 // loop_exit
      _
    %884 = vsyncpa [#allocation5], 1
    %s885 = scalar_lea.sflag [#allocation5], 1
    %886 = vsyncpa %s885, 1

</llo_original>
